<compile_context>
chip_gen: v5e
topology: v5e:2x2
jax: 0.10.0
libtpu: 0.0.40
codegen_flags: <defaults>
</compile_context>

<pallas_src>
import functools

import jax
import jax.numpy as jnp
from jax.experimental import pallas as pl
from jax.experimental.pallas import tpu as pltpu

LANE = 128
X_RESIDENT_BYTE_BUDGET = 16 << 20   # keep X fully resident in VMEM up to this (double-buffered) size


def _round_up(x, m):
    return ((x + m - 1) // m) * m


def _pad_2d(a, rows, cols):
    r, c = a.shape
    if r == rows and c == cols:
        return a
    return jnp.pad(a, ((0, rows - r), (0, cols - c)))


def _clamp_tile(desired_pow2, n128):
    """Largest power-of-two tile <= desired that is not absurdly bigger than the graph."""
    t = desired_pow2
    while t > 128 and t > n128:
        t //= 2
    return t


# ---------------------------------------------------------------------------
# Fused GCN layer kernel:  out = [relu]( diag(s_i) @ A01 @ diag(s_k) @ (X @ W) + b )
# ---------------------------------------------------------------------------
def _gcn_layer_kernel(adj_ref, x_ref, w_ref, b_ref, sk_ref, si_ref, out_ref, acc_ref,
                      *, apply_relu, tile_k, x_resident):
    k = pl.program_id(1)

    @pl.when(k == 0)
    def _():
        acc_ref[...] = jnp.zeros_like(acc_ref)

    # K-tile of X (resident full block -> slice; else streamed block).
    if x_resident:
        start = pl.multiple_of(k * tile_k, tile_k)
        xk = x_ref[pl.ds(start, tile_k), :]
    else:
        xk = x_ref[...]

    # Feature transform for this k-tile (recomputed per row tile: MXU has large slack,
    # kernel is HBM-bound on the adjacency stream).
    xw = jnp.dot(xk, w_ref[...], preferred_element_type=jnp.float32)
    xw = (xw * sk_ref[...]).astype(jnp.bfloat16)          # source-node d^{-1/2} scale

    adj = adj_ref[...].astype(jnp.bfloat16)               # exact 0/1 values
    acc_ref[...] += jnp.dot(adj, xw, preferred_element_type=jnp.float32)

    @pl.when(k == pl.num_programs(1) - 1)
    def _():
        h = acc_ref[...] * si_ref[...] + b_ref[...]        # dest-node d^{-1/2} scale + bias
        if apply_relu:
            h = jnp.maximum(h, 0.0)
        out_ref[...] = h.astype(out_ref.dtype)


def gcn_layer(adj_i8, x_bf16, w_bf16, b_f32, s_f32, *, apply_relu, out_dtype, tile_m, tile_k):
    n_pad = adj_i8.shape[0]
    f_in = x_bf16.shape[1]
    f_out = w_bf16.shape[1]
    out_isz = jnp.dtype(out_dtype).itemsize

    # Keep X fully VMEM-resident (constant block index => single DMA) when it fits the budget.
    x_resident = (2 * n_pad * f_in * 2) <= X_RESIDENT_BYTE_BUDGET
    if x_resident:
        x_spec = pl.BlockSpec((n_pad, f_in), lambda i, k: (0, 0))
    else:
        x_spec = pl.BlockSpec((tile_k, f_in), lambda i, k: (k, 0))

    n_row_tiles = n_pad // tile_m
    n_k_tiles = n_pad // tile_k

    kernel = functools.partial(_gcn_layer_kernel, apply_relu=apply_relu,
                               tile_k=tile_k, x_resident=x_resident)

    flops = 2 * n_pad * n_pad * f_out + 2 * n_row_tiles * n_pad * f_in * f_out
    bytes_accessed = (adj_i8.size                                   # int8, 1 B/elem
                      + (x_bf16.size * 2 if x_resident else x_bf16.size * 2 * n_row_tiles)
                      + w_bf16.size * 2 + b_f32.size * 4 + 2 * s_f32.size * 4
                      + n_pad * f_out * out_isz)

    # Explicit VMEM budget (adjacency double buffers + bf16 convert temp, X, W, bias, scales,
    # output double buffers, f32 accumulator, xw temps), with headroom.
    vmem_est = (2 * tile_m * tile_k * 1 + tile_m * tile_k * 2
                + (2 * n_pad * f_in * 2 if x_resident else 2 * tile_k * f_in * 2)
                + 2 * f_in * f_out * 2
                + 2 * f_out * 4
                + 2 * (tile_m + tile_k) * 4
                + 2 * tile_m * f_out * out_isz
                + tile_m * f_out * 4
                + tile_k * f_out * 6)
    vmem_limit = int(min(max(int(vmem_est * 1.5) + (8 << 20), 32 << 20), 64 << 20))

    return pl.pallas_call(
        kernel,
        out_shape=jax.ShapeDtypeStruct((n_pad, f_out), out_dtype),
        grid_spec=pltpu.PrefetchScalarGridSpec(
            num_scalar_prefetch=0,
            grid=(n_row_tiles, n_k_tiles),
            in_specs=[
                pl.BlockSpec((tile_m, tile_k), lambda i, k: (i, k)),   # int8 adjacency tile
                x_spec,                                                # X (resident or K-streamed)
                pl.BlockSpec((f_in, f_out), lambda i, k: (0, 0)),      # W (resident, bf16)
                pl.BlockSpec((1, f_out), lambda i, k: (0, 0)),         # bias (resident, f32)
                pl.BlockSpec((tile_k, 1), lambda i, k: (k, 0)),        # d^{-1/2} source scale
                pl.BlockSpec((tile_m, 1), lambda i, k: (i, 0)),        # d^{-1/2} dest scale
            ],
            out_specs=pl.BlockSpec((tile_m, f_out), lambda i, k: (i, 0)),
            scratch_shapes=[pltpu.VMEM((tile_m, f_out), jnp.float32)],
        ),
        compiler_params=pltpu.CompilerParams(
            dimension_semantics=("parallel", "arbitrary"),
            vmem_limit_bytes=vmem_limit),
        cost_estimate=pl.CostEstimate(
            flops=int(flops), transcendentals=0, bytes_accessed=int(bytes_accessed)),
    )(adj_i8, x_bf16, w_bf16, b_f32, s_f32, s_f32)


def _glorot(key, shape):
    fan_in, fan_out = shape
    lim = (6.0 / (fan_in + fan_out)) ** 0.5
    return jax.random.uniform(key, shape, jnp.float32, -lim, lim)


class GCNPallas:
    """Pallas port of GraphECL GCN (use_ln=False).  Call with the dense binary adjacency
    INCLUDING self-loops (entries exactly 0/1); the symmetric D^{-1/2} normalization of
    GraphConv(norm='both') is computed internally and applied as exact f32 row scales."""

    def __init__(self, key, in_dim, hid_dim, out_dim, n_layers, tile_m=512, tile_k=1024):
        if n_layers == 1:
            # Matches the PyTorch module: with n_layers == 1 the only conv is in_dim -> hid_dim.
            dims = [in_dim, hid_dim]
        else:
            dims = [in_dim] + [hid_dim] * (n_layers - 1) + [out_dim]
        self.dims = dims
        self.pdims = [_round_up(d, LANE) for d in dims]   # lane-dense feature dims
        self.n_convs = len(dims) - 1

        keys = jax.random.split(key, self.n_convs)
        self.weights, self.biases = [], []          # unpadded f32 (reference numerics)
        self.weights_p, self.biases_p = [], []      # padded, pre-cast once for the kernels
        for i in range(self.n_convs):
            # DGL GraphConv: xavier_uniform_ weight, zero bias.
            w = _glorot(keys[i], (dims[i], dims[i + 1]))
            b = jnp.zeros((1, dims[i + 1]), jnp.float32)
            self.weights.append(w)
            self.biases.append(b)
            self.weights_p.append(_pad_2d(w, self.pdims[i], self.pdims[i + 1]).astype(jnp.bfloat16))
            self.biases_p.append(_pad_2d(b, 1, self.pdims[i + 1]))

        self.tile_m = tile_m   # power of two
        self.tile_k = tile_k   # power of two

    def __call__(self, adj01, x):
        n = adj01.shape[0]
        n128 = _round_up(n, LANE)
        tile_m = _clamp_tile(self.tile_m, n128)
        tile_k = _clamp_tile(self.tile_k, n128)
        n_pad = _round_up(n, max(tile_m, tile_k))   # both tiles are powers of two -> divides

        adj_f32 = adj01.astype(jnp.float32)
        deg = jnp.sum(adj_f32, axis=1)
        s = 1.0 / jnp.sqrt(jnp.clip(deg, 1.0))                      # d^{-1/2}, exact f32
        s_p = _pad_2d(s[:, None], n_pad, 1)
        adj_p = _pad_2d(adj01.astype(jnp.int8), n_pad, n_pad)       # 0/1 exact, 1 B/elem stream

        h = _pad_2d(x.astype(jnp.float32), n_pad, self.pdims[0]).astype(jnp.bfloat16)
        for i in range(self.n_convs):
            last = (i == self.n_convs - 1)
            h = gcn_layer(adj_p, h, self.weights_p[i], self.biases_p[i], s_p,
                          apply_relu=not last,
                          out_dtype=jnp.float32 if last else jnp.bfloat16,
                          tile_m=tile_m, tile_k=tile_k)
        return h[:n, : self.dims[-1]]


def _reference(adj01, x, model):
    # Pure-JAX reference mirroring kernel numerics (bf16 MXU operands, f32 accumulate,
    # exact 0/1 adjacency, f32 degree scales, bf16 hidden activations).
    deg = jnp.sum(adj01.astype(jnp.float32), axis=1)
    s = 1.0 / jnp.sqrt(jnp.clip(deg, 1.0))
    a_bf = adj01.astype(jnp.bfloat16)
    h = x.astype(jnp.bfloat16)
    for i in range(model.n_convs):
        xw = jnp.dot(h, model.weights[i].astype(jnp.bfloat16),
                     preferred_element_type=jnp.float32)
        xw = (xw * s[:, None]).astype(jnp.bfloat16)
        z = jnp.dot(a_bf, xw, preferred_element_type=jnp.float32) * s[:, None] + model.biases[i]
        if i < model.n_convs - 1:
            h = jnp.maximum(z, 0.0).astype(jnp.bfloat16)
        else:
            h = z
    return h


if __name__ == "__main__":
    key = jax.random.PRNGKey(0)
    k_graph, k_feat, k_params = jax.random.split(key, 3)

    N, IN_DIM, HID_DIM, OUT_DIM, N_LAYERS = 512, 32, 32, 16, 2

    # Random undirected graph with self-loops (avoids zero in-degree, as DGL requires).
    probs = jax.random.uniform(k_graph, (N, N))
    a = (probs < 0.02).astype(jnp.float32)
    a = jnp.maximum(a, a.T)
    a = jnp.maximum(a, jnp.eye(N, dtype=jnp.float32))   # A + I, entries exactly 0/1

    x = jax.random.normal(k_feat, (N, IN_DIM), jnp.float32)

    model = GCNPallas(k_params, IN_DIM, HID_DIM, OUT_DIM, N_LAYERS)
    out = model(a, x)
    out = jax.block_until_ready(out)

    assert out.shape == (N, OUT_DIM)
    ref = _reference(a, x, model)
    err = float(jnp.max(jnp.abs(out - ref)))
    assert jnp.allclose(out, ref, atol=2e-3, rtol=2e-3), err

    print("KERNEL_OK")
</pallas_src>

<mosaic_0001>
module attributes {stable_mosaic.version = 11 : i64} {
  func.func @_gcn_layer_kernel(%arg0: i32, %arg1: i32, %arg2: memref<512x512xi8, #tpu.memory_space<vmem>>, %arg3: memref<512x128xbf16, #tpu.memory_space<vmem>>, %arg4: memref<128x128xbf16, #tpu.memory_space<vmem>>, %arg5: memref<1x128xf32, #tpu.memory_space<vmem>>, %arg6: memref<512x1xf32, #tpu.memory_space<vmem>>, %arg7: memref<512x1xf32, #tpu.memory_space<vmem>>, %arg8: memref<512x128xbf16, #tpu.memory_space<vmem>>, %arg9: memref<512x128xf32, #tpu.memory_space<vmem>>) attributes {dimension_semantics = [#tpu.dimension_semantics<parallel>, #tpu.dimension_semantics<arbitrary>], iteration_bounds = array<i64: 1, 1>, scalar_prefetch = 0 : i64, scratch_operands = 1 : i64, tpu.core_type = #tpu.core_type<tc>, window_params = [{transform_indices = @transform_0, window_bounds = array<i64: 512, 512>}, {pipeline_mode = #tpu.pipeline_mode<synchronous>, transform_indices = @transform_1, window_bounds = array<i64: 512, 128>}, {pipeline_mode = #tpu.pipeline_mode<synchronous>, transform_indices = @transform_2, window_bounds = array<i64: 128, 128>}, {pipeline_mode = #tpu.pipeline_mode<synchronous>, transform_indices = @transform_3, window_bounds = array<i64: 1, 128>}, {transform_indices = @transform_4, window_bounds = array<i64: 512, 1>}, {transform_indices = @transform_5, window_bounds = array<i64: 512, 1>}, {transform_indices = @transform_6, window_bounds = array<i64: 512, 128>}]} {
    %c0_i32 = arith.constant 0 : i32
    %0 = arith.cmpi eq, %arg1, %c0_i32 : i32
    %1 = arith.extui %0 : i1 to i32
    %c0_i32_0 = arith.constant 0 : i32
    %2 = arith.cmpi ne, %1, %c0_i32_0 : i32
    scf.if %2 {
      %cst_14 = arith.constant 0.000000e+00 : f32
      %22 = vector.broadcast %cst_14 : f32 to vector<512x128xf32>
      %c0_15 = arith.constant 0 : index
      %c0_16 = arith.constant 0 : index
      %23 = vector.load %arg9[%c0_15, %c0_16] : memref<512x128xf32, #tpu.memory_space<vmem>>, vector<512x128xf32>
      tpu.vector_store %arg9[%c0_15, %c0_16], %22 {strides = array<i32>} : memref<512x128xf32, #tpu.memory_space<vmem>>, vector<512x128xf32>,
    } else {
    }
    %c512_i32 = arith.constant 512 : i32
    %3 = arith.muli %arg1, %c512_i32 : i32
    %4 = tpu.assume_multiple %3, 512 : i32
    %5 = arith.index_cast %4 : i32 to index
    %c0 = arith.constant 0 : index
    %6 = vector.load %arg3[%5, %c0] : memref<512x128xbf16, #tpu.memory_space<vmem>>, vector<512x128xbf16>
    %c0_1 = arith.constant 0 : index
    %c0_2 = arith.constant 0 : index
    %7 = vector.load %arg4[%c0_1, %c0_2] : memref<128x128xbf16, #tpu.memory_space<vmem>>, vector<128x128xbf16>
    %cst = arith.constant dense<0.000000e+00> : vector<512x128xf32>
    %8 = tpu.matmul %6, %7, %cst {dimension_numbers = #tpu.dot_dimension_numbers<[1], [0], [0], [1], [0, 0, 1, 1], [], []>} : vector<512x128xbf16>, vector<128x128xbf16>, vector<512x128xf32> -> vector<512x128xf32>
    %c0_3 = arith.constant 0 : index
    %c0_4 = arith.constant 0 : index
    %9 = vector.load %arg6[%c0_3, %c0_4] : memref<512x1xf32, #tpu.memory_space<vmem>>, vector<512x1xf32>
    %10 = vector.broadcast %9 : vector<512x1xf32> to vector<512x128xf32>
    %11 = arith.mulf %8, %10 : vector<512x128xf32>
    %12 = arith.truncf %11 : vector<512x128xf32> to vector<512x128xbf16>
    %c0_5 = arith.constant 0 : index
    %c0_6 = arith.constant 0 : index
    %13 = vector.load %arg2[%c0_5, %c0_6] : memref<512x512xi8, #tpu.memory_space<vmem>>, vector<512x512xi8>
    %14 = arith.sitofp %13 : vector<512x512xi8> to vector<512x512xbf16>
    %c0_7 = arith.constant 0 : index
    %c0_8 = arith.constant 0 : index
    %15 = vector.load %arg9[%c0_7, %c0_8] : memref<512x128xf32, #tpu.memory_space<vmem>>, vector<512x128xf32>
    %cst_9 = arith.constant dense<0.000000e+00> : vector<512x128xf32>
    %16 = tpu.matmul %14, %12, %cst_9 {dimension_numbers = #tpu.dot_dimension_numbers<[1], [0], [0], [1], [0, 0, 1, 1], [], []>} : vector<512x512xbf16>, vector<512x128xbf16>, vector<512x128xf32> -> vector<512x128xf32>
    %17 = arith.addf %15, %16 : vector<512x128xf32>
    %c0_10 = arith.constant 0 : index
    %c0_11 = arith.constant 0 : index
    %18 = vector.load %arg9[%c0_10, %c0_11] : memref<512x128xf32, #tpu.memory_space<vmem>>, vector<512x128xf32>
    tpu.vector_store %arg9[%c0_10, %c0_11], %17 {strides = array<i32>} : memref<512x128xf32, #tpu.memory_space<vmem>>, vector<512x128xf32>,
    %c0_i32_12 = arith.constant 0 : i32
    %19 = arith.cmpi eq, %arg1, %c0_i32_12 : i32
    %20 = arith.extui %19 : i1 to i32
    %c0_i32_13 = arith.constant 0 : i32
    %21 = arith.cmpi ne, %20, %c0_i32_13 : i32
    scf.if %21 {
      %c0_14 = arith.constant 0 : index
      %c0_15 = arith.constant 0 : index
      %22 = vector.load %arg9[%c0_14, %c0_15] : memref<512x128xf32, #tpu.memory_space<vmem>>, vector<512x128xf32>
      %c0_16 = arith.constant 0 : index
      %c0_17 = arith.constant 0 : index
      %23 = vector.load %arg7[%c0_16, %c0_17] : memref<512x1xf32, #tpu.memory_space<vmem>>, vector<512x1xf32>
      %24 = vector.broadcast %23 : vector<512x1xf32> to vector<512x128xf32>
      %25 = arith.mulf %22, %24 : vector<512x128xf32>
      %c0_18 = arith.constant 0 : index
      %c0_19 = arith.constant 0 : index
      %26 = vector.load %arg5[%c0_18, %c0_19] : memref<1x128xf32, #tpu.memory_space<vmem>>, vector<1x128xf32>
      %27 = vector.broadcast %26 : vector<1x128xf32> to vector<512x128xf32>
      %28 = arith.addf %25, %27 : vector<512x128xf32>
      %cst_20 = arith.constant 0.000000e+00 : f32
      %29 = vector.broadcast %cst_20 : f32 to vector<512x128xf32>
      %30 = arith.maximumf %28, %29 : vector<512x128xf32>
      %31 = arith.truncf %30 : vector<512x128xf32> to vector<512x128xbf16>
      %c0_21 = arith.constant 0 : index
      %c0_22 = arith.constant 0 : index
      %32 = vector.load %arg8[%c0_21, %c0_22] : memref<512x128xbf16, #tpu.memory_space<vmem>>, vector<512x128xbf16>
      tpu.vector_store %arg8[%c0_21, %c0_22], %31 {strides = array<i32>} : memref<512x128xbf16, #tpu.memory_space<vmem>>, vector<512x128xbf16>,
    } else {
    }
    return
  }
  func.func @transform_0(%arg0: i32, %arg1: i32) -> (i32, i32) {
    %c0_i32 = arith.constant 0 : i32
    return %arg0, %arg1 : i32, i32
  }
  func.func @transform_1(%arg0: i32, %arg1: i32) -> (i32, i32) {
    %c0_i32 = arith.constant 0 : i32
    %c0_i32_0 = arith.constant 0 : i32
    %c0_i32_1 = arith.constant 0 : i32
    return %c0_i32, %c0_i32_0 : i32, i32
  }
  func.func @transform_2(%arg0: i32, %arg1: i32) -> (i32, i32) {
    %c0_i32 = arith.constant 0 : i32
    %c0_i32_0 = arith.constant 0 : i32
    %c0_i32_1 = arith.constant 0 : i32
    return %c0_i32, %c0_i32_0 : i32, i32
  }
  func.func @transform_3(%arg0: i32, %arg1: i32) -> (i32, i32) {
    %c0_i32 = arith.constant 0 : i32
    %c0_i32_0 = arith.constant 0 : i32
    %c0_i32_1 = arith.constant 0 : i32
    return %c0_i32, %c0_i32_0 : i32, i32
  }
  func.func @transform_4(%arg0: i32, %arg1: i32) -> (i32, i32) {
    %c0_i32 = arith.constant 0 : i32
    %c0_i32_0 = arith.constant 0 : i32
    return %arg1, %c0_i32 : i32, i32
  }
  func.func @transform_5(%arg0: i32, %arg1: i32) -> (i32, i32) {
    %c0_i32 = arith.constant 0 : i32
    %c0_i32_0 = arith.constant 0 : i32
    return %arg0, %c0_i32 : i32, i32
  }
  func.func @transform_6(%arg0: i32, %arg1: i32) -> (i32, i32) {
    %c0_i32 = arith.constant 0 : i32
    %c0_i32_0 = arith.constant 0 : i32
    return %arg0, %c0_i32 : i32, i32
  }
}

</mosaic_0001>

<llo_original>
// kernel: tpu_custom_call.1
$region0: #{tpu_custom_call.1}
  #allocation0 [shape = 'u32[]', space=smem, size = 0x4, offset = 0x4, fixed_abs, tag = 'smem constant byte address 0x4 - core index']
  #allocation1 [shape = 'u32[72,128]{1,0:T(1,128)}', space=vmem, size = 0x9000, scoped, tag = 'internal scratch']
  #allocation2 [shape = 'f32[512,128]{1,0:T(8,128)}', space=vmem, size = 0x40000, scoped, tag = 'scratch operand']
  %s0 = inlined_call_operand.vmem [shape: s8[512,512], index: 0, kind: input, shape index: {}]
  %s1 = inlined_call_operand.vmem [shape: bf16[512,128], index: 1, kind: input, shape index: {}]
  %s2 = inlined_call_operand.vmem [shape: bf16[128,128], index: 2, kind: input, shape index: {}]
  %s3 = inlined_call_operand.vmem [shape: f32[1,128], index: 3, kind: input, shape index: {}]
  %s4 = inlined_call_operand.vmem [shape: f32[512,1], index: 4, kind: input, shape index: {}]
  %s5 = inlined_call_operand.vmem [shape: f32[512,1], index: 5, kind: input, shape index: {}]
  %s6 = inlined_call_operand.hbm [shape: bf16[512,128], index: 6, kind: output, shape index: {}]
  %s7 = sld [smem:[#allocation0]]
  $region42: #{tpu_custom_call.1} parent=0
    _
  %s9 = ssub.s32 1, %s7
  %s10 = scalar_select 0, %s9, %s7
  $region1: #{tpu_custom_call.1} parent=0
    #allocation3 [shape = 'u8[131072]{0}', space=vmem, size = 0x20000, scoped, tag = 'output window, operand 0, single buffered']
    #allocation4 [shape = 's32[1]{0}', space=sflag, size = 0x4, scoped, tag = 'scoped memory for tpu_custom_call.1']
    %11 = vsyncpa [#allocation4], 0
    // Predicated region
    $region2: #{tpu_custom_call.1} parent=1 // pred_check
      _
    $region3: #{tpu_custom_call.1} parent=1 // pred_check_branch
      %13 = sbr.rel (0) target = $region5
    $region4: #{tpu_custom_call.1} parent=1 // pred_region
      _
    $region5: #{tpu_custom_call.1} parent=1 // pred_fallthru
      _
    // Predicated region
    $region6: #{tpu_custom_call.1} parent=1 // pred_check
      _
    $region7: #{tpu_custom_call.1} parent=1 // pred_check_branch
      %15 = sbr.rel (0) target = $region9
    $region8: #{tpu_custom_call.1} parent=1 // pred_region
      _
    $region9: #{tpu_custom_call.1} parent=1 // pred_fallthru
      _
    // Predicated region
    $region10: #{tpu_custom_call.1} parent=1 // pred_check
      _
    $region11: #{tpu_custom_call.1} parent=1 // pred_check_branch
      %17 = sbr.rel (0) target = $region13
    $region12: #{tpu_custom_call.1} parent=1 // pred_region
      _
    $region13: #{tpu_custom_call.1} parent=1 // pred_fallthru
      _
    // Predicated region
    $region14: #{tpu_custom_call.1} parent=1 // pred_check
      _
    $region15: #{tpu_custom_call.1} parent=1 // pred_check_branch
      %19 = sbr.rel (0) target = $region17
    $region16: #{tpu_custom_call.1} parent=1 // pred_region
      _
    $region17: #{tpu_custom_call.1} parent=1 // pred_fallthru
      _
    // Predicated region
    $region18: #{tpu_custom_call.1} parent=1 // pred_check
      _
    $region19: #{tpu_custom_call.1} parent=1 // pred_check_branch
      %21 = sbr.rel (0) target = $region21
    $region20: #{tpu_custom_call.1} parent=1 // pred_region
      _
    $region21: #{tpu_custom_call.1} parent=1 // pred_fallthru
      _
    // Predicated region
    $region22: #{tpu_custom_call.1} parent=1 // pred_check
      _
    $region23: #{tpu_custom_call.1} parent=1 // pred_check_branch
      %23 = sbr.rel (0) target = $region25
    $region24: #{tpu_custom_call.1} parent=1 // pred_region
      _
    $region25: #{tpu_custom_call.1} parent=1 // pred_fallthru
      _
    %p24 = scmp.eq.s32.totalorder 0, 0
    // Predicated region
    $region26: #{tpu_custom_call.1} parent=1 // pred_check
      %p25 = pneg %p24
    $region27: #{tpu_custom_call.1} parent=1 // pred_check_branch
      %27 = sbr.rel (%p25) target = $region29
    $region28: #{tpu_custom_call.1} parent=1 // pred_region
      %28 = vst [vmem:[#allocation2] sm:$0xff] 0.0
      %29 = vst [vmem:[#allocation2 + $0x8] sm:$0xff] 0.0
      %30 = vst [vmem:[#allocation2 + $0x10] sm:$0xff] 0.0
      %31 = vst [vmem:[#allocation2 + $0x18] sm:$0xff] 0.0
      %32 = vst [vmem:[#allocation2 + $0x20] sm:$0xff] 0.0
      %33 = vst [vmem:[#allocation2 + $0x28] sm:$0xff] 0.0
      %34 = vst [vmem:[#allocation2 + $0x30] sm:$0xff] 0.0
      %35 = vst [vmem:[#allocation2 + $0x38] sm:$0xff] 0.0
      %36 = vst [vmem:[#allocation2 + $0x40] sm:$0xff] 0.0
      %37 = vst [vmem:[#allocation2 + $0x48] sm:$0xff] 0.0
      %38 = vst [vmem:[#allocation2 + $0x50] sm:$0xff] 0.0
      %39 = vst [vmem:[#allocation2 + $0x58] sm:$0xff] 0.0
      %40 = vst [vmem:[#allocation2 + $0x60] sm:$0xff] 0.0
      %41 = vst [vmem:[#allocation2 + $0x68] sm:$0xff] 0.0
      %42 = vst [vmem:[#allocation2 + $0x70] sm:$0xff] 0.0
      %43 = vst [vmem:[#allocation2 + $0x78] sm:$0xff] 0.0
      %44 = vst [vmem:[#allocation2 + $0x80] sm:$0xff] 0.0
      %45 = vst [vmem:[#allocation2 + $0x88] sm:$0xff] 0.0
      %46 = vst [vmem:[#allocation2 + $0x90] sm:$0xff] 0.0
      %47 = vst [vmem:[#allocation2 + $0x98] sm:$0xff] 0.0
      %48 = vst [vmem:[#allocation2 + $0xa0] sm:$0xff] 0.0
      %49 = vst [vmem:[#allocation2 + $0xa8] sm:$0xff] 0.0
      %50 = vst [vmem:[#allocation2 + $0xb0] sm:$0xff] 0.0
      %51 = vst [vmem:[#allocation2 + $0xb8] sm:$0xff] 0.0
      %52 = vst [vmem:[#allocation2 + $0xc0] sm:$0xff] 0.0
      %53 = vst [vmem:[#allocation2 + $0xc8] sm:$0xff] 0.0
      %54 = vst [vmem:[#allocation2 + $0xd0] sm:$0xff] 0.0
      %55 = vst [vmem:[#allocation2 + $0xd8] sm:$0xff] 0.0
      %56 = vst [vmem:[#allocation2 + $0xe0] sm:$0xff] 0.0
      %57 = vst [vmem:[#allocation2 + $0xe8] sm:$0xff] 0.0
      %58 = vst [vmem:[#allocation2 + $0xf0] sm:$0xff] 0.0
      %59 = vst [vmem:[#allocation2 + $0xf8] sm:$0xff] 0.0
      %60 = vst [vmem:[#allocation2 + $0x100] sm:$0xff] 0.0
      %61 = vst [vmem:[#allocation2 + $0x108] sm:$0xff] 0.0
      %62 = vst [vmem:[#allocation2 + $0x110] sm:$0xff] 0.0
      %63 = vst [vmem:[#allocation2 + $0x118] sm:$0xff] 0.0
      %64 = vst [vmem:[#allocation2 + $0x120] sm:$0xff] 0.0
      %65 = vst [vmem:[#allocation2 + $0x128] sm:$0xff] 0.0
      %66 = vst [vmem:[#allocation2 + $0x130] sm:$0xff] 0.0
      %67 = vst [vmem:[#allocation2 + $0x138] sm:$0xff] 0.0
      %68 = vst [vmem:[#allocation2 + $0x140] sm:$0xff] 0.0
      %69 = vst [vmem:[#allocation2 + $0x148] sm:$0xff] 0.0
      %70 = vst [vmem:[#allocation2 + $0x150] sm:$0xff] 0.0
      %71 = vst [vmem:[#allocation2 + $0x158] sm:$0xff] 0.0
      %72 = vst [vmem:[#allocation2 + $0x160] sm:$0xff] 0.0
      %73 = vst [vmem:[#allocation2 + $0x168] sm:$0xff] 0.0
      %74 = vst [vmem:[#allocation2 + $0x170] sm:$0xff] 0.0
      %75 = vst [vmem:[#allocation2 + $0x178] sm:$0xff] 0.0
      %76 = vst [vmem:[#allocation2 + $0x180] sm:$0xff] 0.0
      %77 = vst [vmem:[#allocation2 + $0x188] sm:$0xff] 0.0
      %78 = vst [vmem:[#allocation2 + $0x190] sm:$0xff] 0.0
      %79 = vst [vmem:[#allocation2 + $0x198] sm:$0xff] 0.0
      %80 = vst [vmem:[#allocation2 + $0x1a0] sm:$0xff] 0.0
      %81 = vst [vmem:[#allocation2 + $0x1a8] sm:$0xff] 0.0
      %82 = vst [vmem:[#allocation2 + $0x1b0] sm:$0xff] 0.0
      %83 = vst [vmem:[#allocation2 + $0x1b8] sm:$0xff] 0.0
      %84 = vst [vmem:[#allocation2 + $0x1c0] sm:$0xff] 0.0
      %85 = vst [vmem:[#allocation2 + $0x1c8] sm:$0xff] 0.0
      %86 = vst [vmem:[#allocation2 + $0x1d0] sm:$0xff] 0.0
      %87 = vst [vmem:[#allocation2 + $0x1d8] sm:$0xff] 0.0
      %88 = vst [vmem:[#allocation2 + $0x1e0] sm:$0xff] 0.0
      %89 = vst [vmem:[#allocation2 + $0x1e8] sm:$0xff] 0.0
      %90 = vst [vmem:[#allocation2 + $0x1f0] sm:$0xff] 0.0
      %91 = vst [vmem:[#allocation2 + $0x1f8] sm:$0xff] 0.0
    $region29: #{tpu_custom_call.1} parent=1 // pred_fallthru
      _
    %s92 = smul.u32 0, 512
    %s93 = sshra.s32 %s92, 3
    %s94 = sand.u32 %s92, 7
    %s95 = smul.addr %s93, 4
    %s96 = scalar_lea.vmem %s1, %s95
    %v97 = vld [vmem:[%s96] sm:$0xf]
    %v98 = vld [vmem:[%s96 + $0x4] sm:$0xf]
    %v99 = vld [vmem:[%s96 + $0x8] sm:$0xf]
    %v100 = vld [vmem:[%s96 + $0xc] sm:$0xf]
    %v101 = vld [vmem:[%s96 + $0x10] sm:$0xf]
    %v102 = vld [vmem:[%s96 + $0x14] sm:$0xf]
    %v103 = vld [vmem:[%s96 + $0x18] sm:$0xf]
    %v104 = vld [vmem:[%s96 + $0x1c] sm:$0xf]
    %v105 = vld [vmem:[%s96 + $0x20] sm:$0xf]
    %v106 = vld [vmem:[%s96 + $0x24] sm:$0xf]
    %v107 = vld [vmem:[%s96 + $0x28] sm:$0xf]
    %v108 = vld [vmem:[%s96 + $0x2c] sm:$0xf]
    %v109 = vld [vmem:[%s96 + $0x30] sm:$0xf]
    %v110 = vld [vmem:[%s96 + $0x34] sm:$0xf]
    %v111 = vld [vmem:[%s96 + $0x38] sm:$0xf]
    %v112 = vld [vmem:[%s96 + $0x3c] sm:$0xf]
    %v113 = vld [vmem:[%s96 + $0x40] sm:$0xf]
    %v114 = vld [vmem:[%s96 + $0x44] sm:$0xf]
    %v115 = vld [vmem:[%s96 + $0x48] sm:$0xf]
    %v116 = vld [vmem:[%s96 + $0x4c] sm:$0xf]
    %v117 = vld [vmem:[%s96 + $0x50] sm:$0xf]
    %v118 = vld [vmem:[%s96 + $0x54] sm:$0xf]
    %v119 = vld [vmem:[%s96 + $0x58] sm:$0xf]
    %v120 = vld [vmem:[%s96 + $0x5c] sm:$0xf]
    %v121 = vld [vmem:[%s96 + $0x60] sm:$0xf]
    %v122 = vld [vmem:[%s96 + $0x64] sm:$0xf]
    %v123 = vld [vmem:[%s96 + $0x68] sm:$0xf]
    %v124 = vld [vmem:[%s96 + $0x6c] sm:$0xf]
    %v125 = vld [vmem:[%s96 + $0x70] sm:$0xf]
    %v126 = vld [vmem:[%s96 + $0x74] sm:$0xf]
    %v127 = vld [vmem:[%s96 + $0x78] sm:$0xf]
    %v128 = vld [vmem:[%s96 + $0x7c] sm:$0xf]
    %v129 = vld [vmem:[%s96 + $0x80] sm:$0xf]
    %v130 = vld [vmem:[%s96 + $0x84] sm:$0xf]
    %v131 = vld [vmem:[%s96 + $0x88] sm:$0xf]
    %v132 = vld [vmem:[%s96 + $0x8c] sm:$0xf]
    %v133 = vld [vmem:[%s96 + $0x90] sm:$0xf]
    %v134 = vld [vmem:[%s96 + $0x94] sm:$0xf]
    %v135 = vld [vmem:[%s96 + $0x98] sm:$0xf]
    %v136 = vld [vmem:[%s96 + $0x9c] sm:$0xf]
    %v137 = vld [vmem:[%s96 + $0xa0] sm:$0xf]
    %v138 = vld [vmem:[%s96 + $0xa4] sm:$0xf]
    %v139 = vld [vmem:[%s96 + $0xa8] sm:$0xf]
    %v140 = vld [vmem:[%s96 + $0xac] sm:$0xf]
    %v141 = vld [vmem:[%s96 + $0xb0] sm:$0xf]
    %v142 = vld [vmem:[%s96 + $0xb4] sm:$0xf]
    %v143 = vld [vmem:[%s96 + $0xb8] sm:$0xf]
    %v144 = vld [vmem:[%s96 + $0xbc] sm:$0xf]
    %v145 = vld [vmem:[%s96 + $0xc0] sm:$0xf]
    %v146 = vld [vmem:[%s96 + $0xc4] sm:$0xf]
    %v147 = vld [vmem:[%s96 + $0xc8] sm:$0xf]
    %v148 = vld [vmem:[%s96 + $0xcc] sm:$0xf]
    %v149 = vld [vmem:[%s96 + $0xd0] sm:$0xf]
    %v150 = vld [vmem:[%s96 + $0xd4] sm:$0xf]
    %v151 = vld [vmem:[%s96 + $0xd8] sm:$0xf]
    %v152 = vld [vmem:[%s96 + $0xdc] sm:$0xf]
    %v153 = vld [vmem:[%s96 + $0xe0] sm:$0xf]
    %v154 = vld [vmem:[%s96 + $0xe4] sm:$0xf]
    %v155 = vld [vmem:[%s96 + $0xe8] sm:$0xf]
    %v156 = vld [vmem:[%s96 + $0xec] sm:$0xf]
    %v157 = vld [vmem:[%s96 + $0xf0] sm:$0xf]
    %v158 = vld [vmem:[%s96 + $0xf4] sm:$0xf]
    %v159 = vld [vmem:[%s96 + $0xf8] sm:$0xf]
    %v160 = vld [vmem:[%s96 + $0xfc] sm:$0xf]
    %v161 = vld [vmem:[%s2] sm:$0xf]
    %v162 = vld [vmem:[%s2 + $0x4] sm:$0xf]
    %v163 = vld [vmem:[%s2 + $0x8] sm:$0xf]
    %v164 = vld [vmem:[%s2 + $0xc] sm:$0xf]
    %v165 = vld [vmem:[%s2 + $0x10] sm:$0xf]
    %v166 = vld [vmem:[%s2 + $0x14] sm:$0xf]
    %v167 = vld [vmem:[%s2 + $0x18] sm:$0xf]
    %v168 = vld [vmem:[%s2 + $0x1c] sm:$0xf]
    %v169 = vld [vmem:[%s2 + $0x20] sm:$0xf]
    %v170 = vld [vmem:[%s2 + $0x24] sm:$0xf]
    %v171 = vld [vmem:[%s2 + $0x28] sm:$0xf]
    %v172 = vld [vmem:[%s2 + $0x2c] sm:$0xf]
    %v173 = vld [vmem:[%s2 + $0x30] sm:$0xf]
    %v174 = vld [vmem:[%s2 + $0x34] sm:$0xf]
    %v175 = vld [vmem:[%s2 + $0x38] sm:$0xf]
    %v176 = vld [vmem:[%s2 + $0x3c] sm:$0xf]
    %v241 = vunpack.c.l.b16 %v97
    %v242 = vunpack.c.l.b16 %v98
    %v243 = vunpack.c.l.b16 %v99
    %v244 = vunpack.c.l.b16 %v100
    %v245 = vunpack.c.l.b16 %v101
    %v246 = vunpack.c.l.b16 %v102
    %v247 = vunpack.c.l.b16 %v103
    %v248 = vunpack.c.l.b16 %v104
    %v249 = vunpack.c.l.b16 %v105
    %v250 = vunpack.c.l.b16 %v106
    %v251 = vunpack.c.l.b16 %v107
    %v252 = vunpack.c.l.b16 %v108
    %v253 = vunpack.c.l.b16 %v109
    %v254 = vunpack.c.l.b16 %v110
    %v255 = vunpack.c.l.b16 %v111
    %v256 = vunpack.c.l.b16 %v112
    %v257 = vunpack.c.l.b16 %v113
    %v258 = vunpack.c.l.b16 %v114
    %v259 = vunpack.c.l.b16 %v115
    %v260 = vunpack.c.l.b16 %v116
    %v261 = vunpack.c.l.b16 %v117
    %v262 = vunpack.c.l.b16 %v118
    %v263 = vunpack.c.l.b16 %v119
    %v264 = vunpack.c.l.b16 %v120
    %v265 = vunpack.c.l.b16 %v121
    %v266 = vunpack.c.l.b16 %v122
    %v267 = vunpack.c.l.b16 %v123
    %v268 = vunpack.c.l.b16 %v124
    %v269 = vunpack.c.l.b16 %v125
    %v270 = vunpack.c.l.b16 %v126
    %v271 = vunpack.c.l.b16 %v127
    %v272 = vunpack.c.l.b16 %v128
    %v273 = vunpack.c.l.b16 %v129
    %v274 = vunpack.c.l.b16 %v130
    %v275 = vunpack.c.l.b16 %v131
    %v276 = vunpack.c.l.b16 %v132
    %v277 = vunpack.c.l.b16 %v133
    %v278 = vunpack.c.l.b16 %v134
    %v279 = vunpack.c.l.b16 %v135
    %v280 = vunpack.c.l.b16 %v136
    %v281 = vunpack.c.l.b16 %v137
    %v282 = vunpack.c.l.b16 %v138
    %v283 = vunpack.c.l.b16 %v139
    %v284 = vunpack.c.l.b16 %v140
    %v285 = vunpack.c.l.b16 %v141
    %v286 = vunpack.c.l.b16 %v142
    %v287 = vunpack.c.l.b16 %v143
    %v288 = vunpack.c.l.b16 %v144
    %v289 = vunpack.c.l.b16 %v145
    %v290 = vunpack.c.l.b16 %v146
    %v291 = vunpack.c.l.b16 %v147
    %v292 = vunpack.c.l.b16 %v148
    %v293 = vunpack.c.l.b16 %v149
    %v294 = vunpack.c.l.b16 %v150
    %v295 = vunpack.c.l.b16 %v151
    %v296 = vunpack.c.l.b16 %v152
    %v297 = vunpack.c.l.b16 %v153
    %v298 = vunpack.c.l.b16 %v154
    %v299 = vunpack.c.l.b16 %v155
    %v300 = vunpack.c.l.b16 %v156
    %v301 = vunpack.c.l.b16 %v157
    %v302 = vunpack.c.l.b16 %v158
    %v303 = vunpack.c.l.b16 %v159
    %v304 = vunpack.c.l.b16 %v160
    %v305 = vpack.c.b16 %v242, %v241
    %v306 = vpack.c.b16 %v244, %v243
    %v307 = vpack.c.b16 %v246, %v245
    %v308 = vpack.c.b16 %v248, %v247
    %v309 = vpack.c.b16 %v250, %v249
    %v310 = vpack.c.b16 %v252, %v251
    %v311 = vpack.c.b16 %v254, %v253
    %v312 = vpack.c.b16 %v256, %v255
    %v313 = vpack.c.b16 %v258, %v257
    %v314 = vpack.c.b16 %v260, %v259
    %v315 = vpack.c.b16 %v262, %v261
    %v316 = vpack.c.b16 %v264, %v263
    %v317 = vpack.c.b16 %v266, %v265
    %v318 = vpack.c.b16 %v268, %v267
    %v319 = vpack.c.b16 %v270, %v269
    %v320 = vpack.c.b16 %v272, %v271
    %v321 = vpack.c.b16 %v274, %v273
    %v322 = vpack.c.b16 %v276, %v275
    %v323 = vpack.c.b16 %v278, %v277
    %v324 = vpack.c.b16 %v280, %v279
    %v325 = vpack.c.b16 %v282, %v281
    %v326 = vpack.c.b16 %v284, %v283
    %v327 = vpack.c.b16 %v286, %v285
    %v328 = vpack.c.b16 %v288, %v287
    %v329 = vpack.c.b16 %v290, %v289
    %v330 = vpack.c.b16 %v292, %v291
    %v331 = vpack.c.b16 %v294, %v293
    %v332 = vpack.c.b16 %v296, %v295
    %v333 = vpack.c.b16 %v298, %v297
    %v334 = vpack.c.b16 %v300, %v299
    %v335 = vpack.c.b16 %v302, %v301
    %v336 = vpack.c.b16 %v304, %v303
    %v385 = vunpack.c.l.b16 %v161
    %v386 = vunpack.c.l.b16 %v162
    %v387 = vunpack.c.l.b16 %v163
    %v388 = vunpack.c.l.b16 %v164
    %v389 = vunpack.c.l.b16 %v165
    %v390 = vunpack.c.l.b16 %v166
    %v391 = vunpack.c.l.b16 %v167
    %v392 = vunpack.c.l.b16 %v168
    %v393 = vunpack.c.l.b16 %v169
    %v394 = vunpack.c.l.b16 %v170
    %v395 = vunpack.c.l.b16 %v171
    %v396 = vunpack.c.l.b16 %v172
    %v397 = vunpack.c.l.b16 %v173
    %v398 = vunpack.c.l.b16 %v174
    %v399 = vunpack.c.l.b16 %v175
    %v400 = vunpack.c.l.b16 %v176
    %v401 = vpack.c.b16 %v386, %v385
    %v402 = vpack.c.b16 %v388, %v387
    %v403 = vpack.c.b16 %v390, %v389
    %v404 = vpack.c.b16 %v392, %v391
    %v405 = vpack.c.b16 %v394, %v393
    %v406 = vpack.c.b16 %v396, %v395
    %v407 = vpack.c.b16 %v398, %v397
    %v408 = vpack.c.b16 %v400, %v399
    %417 = vmatpush.bf16.msra.mxu0 %v408
    %418 = vmatpush.bf16.msra.mxu0 %v407
    %419 = vmatpush.bf16.msra.mxu0 %v406
    %420 = vmatpush.bf16.msra.mxu0 %v405
    %421 = vmatpush.bf16.msra.mxu0 %v404
    %422 = vmatpush.bf16.msra.mxu0 %v403
    %423 = vmatpush.bf16.msra.mxu0 %v402
    %424 = vmatpush.bf16.msra.mxu0 %v401
    %425 = vmatmul.bf16.gmra.mxu0 %v305
    %v426 = vpop.f32.mrf.mxu0
    %v427 = vadd.f32 0.0, %v426
    %v428 = vpop.f32.mrf.mxu0
    %v429 = vadd.f32 0.0, %v428
    %430 = vmatmul.bf16.gmra.mxu0 %v306
    %v431 = vpop.f32.mrf.mxu0
    %v432 = vadd.f32 0.0, %v431
    %v433 = vpop.f32.mrf.mxu0
    %v434 = vadd.f32 0.0, %v433
    %435 = vmatmul.bf16.gmra.mxu0 %v307
    %v436 = vpop.f32.mrf.mxu0
    %v437 = vadd.f32 0.0, %v436
    %v438 = vpop.f32.mrf.mxu0
    %v439 = vadd.f32 0.0, %v438
    %440 = vmatmul.bf16.gmra.mxu0 %v308
    %v441 = vpop.f32.mrf.mxu0
    %v442 = vadd.f32 0.0, %v441
    %v443 = vpop.f32.mrf.mxu0
    %v444 = vadd.f32 0.0, %v443
    %445 = vmatmul.bf16.gmra.mxu0 %v309
    %v446 = vpop.f32.mrf.mxu0
    %v447 = vadd.f32 0.0, %v446
    %v448 = vpop.f32.mrf.mxu0
    %v449 = vadd.f32 0.0, %v448
    %450 = vmatmul.bf16.gmra.mxu0 %v310
    %v451 = vpop.f32.mrf.mxu0
    %v452 = vadd.f32 0.0, %v451
    %v453 = vpop.f32.mrf.mxu0
    %v454 = vadd.f32 0.0, %v453
    %455 = vmatmul.bf16.gmra.mxu0 %v311
    %v456 = vpop.f32.mrf.mxu0
    %v457 = vadd.f32 0.0, %v456
    %v458 = vpop.f32.mrf.mxu0
    %v459 = vadd.f32 0.0, %v458
    %460 = vmatmul.bf16.gmra.mxu0 %v312
    %v461 = vpop.f32.mrf.mxu0
    %v462 = vadd.f32 0.0, %v461
    %v463 = vpop.f32.mrf.mxu0
    %v464 = vadd.f32 0.0, %v463
    %465 = vmatmul.bf16.gmra.mxu0 %v313
    %v466 = vpop.f32.mrf.mxu0
    %v467 = vadd.f32 0.0, %v466
    %v468 = vpop.f32.mrf.mxu0
    %v469 = vadd.f32 0.0, %v468
    %470 = vmatmul.bf16.gmra.mxu0 %v314
    %v471 = vpop.f32.mrf.mxu0
    %v472 = vadd.f32 0.0, %v471
    %v473 = vpop.f32.mrf.mxu0
    %v474 = vadd.f32 0.0, %v473
    %475 = vmatmul.bf16.gmra.mxu0 %v315
    %v476 = vpop.f32.mrf.mxu0
    %v477 = vadd.f32 0.0, %v476
    %v478 = vpop.f32.mrf.mxu0
    %v479 = vadd.f32 0.0, %v478
    %480 = vmatmul.bf16.gmra.mxu0 %v316
    %v481 = vpop.f32.mrf.mxu0
    %v482 = vadd.f32 0.0, %v481
    %v483 = vpop.f32.mrf.mxu0
    %v484 = vadd.f32 0.0, %v483
    %485 = vmatmul.bf16.gmra.mxu0 %v317
    %v486 = vpop.f32.mrf.mxu0
    %v487 = vadd.f32 0.0, %v486
    %v488 = vpop.f32.mrf.mxu0
    %v489 = vadd.f32 0.0, %v488
    %490 = vmatmul.bf16.gmra.mxu0 %v318
    %v491 = vpop.f32.mrf.mxu0
    %v492 = vadd.f32 0.0, %v491
    %v493 = vpop.f32.mrf.mxu0
    %v494 = vadd.f32 0.0, %v493
    %495 = vmatmul.bf16.gmra.mxu0 %v319
    %v496 = vpop.f32.mrf.mxu0
    %v497 = vadd.f32 0.0, %v496
    %v498 = vpop.f32.mrf.mxu0
    %v499 = vadd.f32 0.0, %v498
    %500 = vmatmul.bf16.gmra.mxu0 %v320
    %v501 = vpop.f32.mrf.mxu0
    %v502 = vadd.f32 0.0, %v501
    %v503 = vpop.f32.mrf.mxu0
    %v504 = vadd.f32 0.0, %v503
    %505 = vmatmul.bf16.gmra.mxu0 %v321
    %v506 = vpop.f32.mrf.mxu0
    %v507 = vadd.f32 0.0, %v506
    %v508 = vpop.f32.mrf.mxu0
    %v509 = vadd.f32 0.0, %v508
    %510 = vmatmul.bf16.gmra.mxu0 %v322
    %v511 = vpop.f32.mrf.mxu0
    %v512 = vadd.f32 0.0, %v511
    %v513 = vpop.f32.mrf.mxu0
    %v514 = vadd.f32 0.0, %v513
    %515 = vmatmul.bf16.gmra.mxu0 %v323
    %v516 = vpop.f32.mrf.mxu0
    %v517 = vadd.f32 0.0, %v516
    %v518 = vpop.f32.mrf.mxu0
    %v519 = vadd.f32 0.0, %v518
    %520 = vmatmul.bf16.gmra.mxu0 %v324
    %v521 = vpop.f32.mrf.mxu0
    %v522 = vadd.f32 0.0, %v521
    %v523 = vpop.f32.mrf.mxu0
    %v524 = vadd.f32 0.0, %v523
    %525 = vmatmul.bf16.gmra.mxu0 %v325
    %v526 = vpop.f32.mrf.mxu0
    %v527 = vadd.f32 0.0, %v526
    %v528 = vpop.f32.mrf.mxu0
    %v529 = vadd.f32 0.0, %v528
    %530 = vmatmul.bf16.gmra.mxu0 %v326
    %v531 = vpop.f32.mrf.mxu0
    %v532 = vadd.f32 0.0, %v531
    %v533 = vpop.f32.mrf.mxu0
    %v534 = vadd.f32 0.0, %v533
    %535 = vmatmul.bf16.gmra.mxu0 %v327
    %v536 = vpop.f32.mrf.mxu0
    %v537 = vadd.f32 0.0, %v536
    %v538 = vpop.f32.mrf.mxu0
    %v539 = vadd.f32 0.0, %v538
    %540 = vmatmul.bf16.gmra.mxu0 %v328
    %v541 = vpop.f32.mrf.mxu0
    %v542 = vadd.f32 0.0, %v541
    %v543 = vpop.f32.mrf.mxu0
    %v544 = vadd.f32 0.0, %v543
    %545 = vmatmul.bf16.gmra.mxu0 %v329
    %v546 = vpop.f32.mrf.mxu0
    %v547 = vadd.f32 0.0, %v546
    %v548 = vpop.f32.mrf.mxu0
    %v549 = vadd.f32 0.0, %v548
    %550 = vmatmul.bf16.gmra.mxu0 %v330
    %v551 = vpop.f32.mrf.mxu0
    %v552 = vadd.f32 0.0, %v551
    %v553 = vpop.f32.mrf.mxu0
    %v554 = vadd.f32 0.0, %v553
    %555 = vmatmul.bf16.gmra.mxu0 %v331
    %v556 = vpop.f32.mrf.mxu0
    %v557 = vadd.f32 0.0, %v556
    %v558 = vpop.f32.mrf.mxu0
    %v559 = vadd.f32 0.0, %v558
    %560 = vmatmul.bf16.gmra.mxu0 %v332
    %v561 = vpop.f32.mrf.mxu0
    %v562 = vadd.f32 0.0, %v561
    %v563 = vpop.f32.mrf.mxu0
    %v564 = vadd.f32 0.0, %v563
    %565 = vmatmul.bf16.gmra.mxu0 %v333
    %v566 = vpop.f32.mrf.mxu0
    %v567 = vadd.f32 0.0, %v566
    %v568 = vpop.f32.mrf.mxu0
    %v569 = vadd.f32 0.0, %v568
    %570 = vmatmul.bf16.gmra.mxu0 %v334
    %v571 = vpop.f32.mrf.mxu0
    %v572 = vadd.f32 0.0, %v571
    %v573 = vpop.f32.mrf.mxu0
    %v574 = vadd.f32 0.0, %v573
    %575 = vmatmul.bf16.gmra.mxu0 %v335
    %v576 = vpop.f32.mrf.mxu0
    %v577 = vadd.f32 0.0, %v576
    %v578 = vpop.f32.mrf.mxu0
    %v579 = vadd.f32 0.0, %v578
    %580 = vmatmul.bf16.gmra.mxu0 %v336
    %v581 = vpop.f32.mrf.mxu0
    %v582 = vadd.f32 0.0, %v581
    %v583 = vpop.f32.mrf.mxu0
    %v584 = vadd.f32 0.0, %v583
    %585 = vdwg.mxu0
    %v586 = vld [vmem:[%s4] sm:$0xff]
    %v587 = vld [vmem:[%s4 + $0x8] sm:$0xff]
    %v588 = vld [vmem:[%s4 + $0x10] sm:$0xff]
    %v589 = vld [vmem:[%s4 + $0x18] sm:$0xff]
    %v590 = vld [vmem:[%s4 + $0x20] sm:$0xff]
    %v591 = vld [vmem:[%s4 + $0x28] sm:$0xff]
    %v592 = vld [vmem:[%s4 + $0x30] sm:$0xff]
    %v593 = vld [vmem:[%s4 + $0x38] sm:$0xff]
    %v594 = vld [vmem:[%s4 + $0x40] sm:$0xff]
    %v595 = vld [vmem:[%s4 + $0x48] sm:$0xff]
    %v596 = vld [vmem:[%s4 + $0x50] sm:$0xff]
    %v597 = vld [vmem:[%s4 + $0x58] sm:$0xff]
    %v598 = vld [vmem:[%s4 + $0x60] sm:$0xff]
    %v599 = vld [vmem:[%s4 + $0x68] sm:$0xff]
    %v600 = vld [vmem:[%s4 + $0x70] sm:$0xff]
    %v601 = vld [vmem:[%s4 + $0x78] sm:$0xff]
    %v602 = vld [vmem:[%s4 + $0x80] sm:$0xff]
    %v603 = vld [vmem:[%s4 + $0x88] sm:$0xff]
    %v604 = vld [vmem:[%s4 + $0x90] sm:$0xff]
    %v605 = vld [vmem:[%s4 + $0x98] sm:$0xff]
    %v606 = vld [vmem:[%s4 + $0xa0] sm:$0xff]
    %v607 = vld [vmem:[%s4 + $0xa8] sm:$0xff]
    %v608 = vld [vmem:[%s4 + $0xb0] sm:$0xff]
    %v609 = vld [vmem:[%s4 + $0xb8] sm:$0xff]
    %v610 = vld [vmem:[%s4 + $0xc0] sm:$0xff]
    %v611 = vld [vmem:[%s4 + $0xc8] sm:$0xff]
    %v612 = vld [vmem:[%s4 + $0xd0] sm:$0xff]
    %v613 = vld [vmem:[%s4 + $0xd8] sm:$0xff]
    %v614 = vld [vmem:[%s4 + $0xe0] sm:$0xff]
    %v615 = vld [vmem:[%s4 + $0xe8] sm:$0xff]
    %v616 = vld [vmem:[%s4 + $0xf0] sm:$0xff]
    %v617 = vld [vmem:[%s4 + $0xf8] sm:$0xff]
    %v618 = vld [vmem:[%s4 + $0x100] sm:$0xff]
    %v619 = vld [vmem:[%s4 + $0x108] sm:$0xff]
    %v620 = vld [vmem:[%s4 + $0x110] sm:$0xff]
    %v621 = vld [vmem:[%s4 + $0x118] sm:$0xff]
    %v622 = vld [vmem:[%s4 + $0x120] sm:$0xff]
    %v623 = vld [vmem:[%s4 + $0x128] sm:$0xff]
    %v624 = vld [vmem:[%s4 + $0x130] sm:$0xff]
    %v625 = vld [vmem:[%s4 + $0x138] sm:$0xff]
    %v626 = vld [vmem:[%s4 + $0x140] sm:$0xff]
    %v627 = vld [vmem:[%s4 + $0x148] sm:$0xff]
    %v628 = vld [vmem:[%s4 + $0x150] sm:$0xff]
    %v629 = vld [vmem:[%s4 + $0x158] sm:$0xff]
    %v630 = vld [vmem:[%s4 + $0x160] sm:$0xff]
    %v631 = vld [vmem:[%s4 + $0x168] sm:$0xff]
    %v632 = vld [vmem:[%s4 + $0x170] sm:$0xff]
    %v633 = vld [vmem:[%s4 + $0x178] sm:$0xff]
    %v634 = vld [vmem:[%s4 + $0x180] sm:$0xff]
    %v635 = vld [vmem:[%s4 + $0x188] sm:$0xff]
    %v636 = vld [vmem:[%s4 + $0x190] sm:$0xff]
    %v637 = vld [vmem:[%s4 + $0x198] sm:$0xff]
    %v638 = vld [vmem:[%s4 + $0x1a0] sm:$0xff]
    %v639 = vld [vmem:[%s4 + $0x1a8] sm:$0xff]
    %v640 = vld [vmem:[%s4 + $0x1b0] sm:$0xff]
    %v641 = vld [vmem:[%s4 + $0x1b8] sm:$0xff]
    %v642 = vld [vmem:[%s4 + $0x1c0] sm:$0xff]
    %v643 = vld [vmem:[%s4 + $0x1c8] sm:$0xff]
    %v644 = vld [vmem:[%s4 + $0x1d0] sm:$0xff]
    %v645 = vld [vmem:[%s4 + $0x1d8] sm:$0xff]
    %v646 = vld [vmem:[%s4 + $0x1e0] sm:$0xff]
    %v647 = vld [vmem:[%s4 + $0x1e8] sm:$0xff]
    %v648 = vld [vmem:[%s4 + $0x1f0] sm:$0xff]
    %v649 = vld [vmem:[%s4 + $0x1f8] sm:$0xff]
    %651 = vset.pattern.permute.xlu0 0
    %652 = vperm.xlu0 %651, %v586
    %v653 = vpop.permute.xlu0 %652
    %656 = vset.pattern.permute.xlu0 0
    %657 = vperm.xlu0 %656, %v587
    %v658 = vpop.permute.xlu0 %657
    %661 = vset.pattern.permute.xlu0 0
    %662 = vperm.xlu0 %661, %v588
    %v663 = vpop.permute.xlu0 %662
    %666 = vset.pattern.permute.xlu0 0
    %667 = vperm.xlu0 %666, %v589
    %v668 = vpop.permute.xlu0 %667
    %671 = vset.pattern.permute.xlu0 0
    %672 = vperm.xlu0 %671, %v590
    %v673 = vpop.permute.xlu0 %672
    %676 = vset.pattern.permute.xlu0 0
    %677 = vperm.xlu0 %676, %v591
    %v678 = vpop.permute.xlu0 %677
    %681 = vset.pattern.permute.xlu0 0
    %682 = vperm.xlu0 %681, %v592
    %v683 = vpop.permute.xlu0 %682
    %686 = vset.pattern.permute.xlu0 0
    %687 = vperm.xlu0 %686, %v593
    %v688 = vpop.permute.xlu0 %687
    %691 = vset.pattern.permute.xlu0 0
    %692 = vperm.xlu0 %691, %v594
    %v693 = vpop.permute.xlu0 %692
    %696 = vset.pattern.permute.xlu0 0
    %697 = vperm.xlu0 %696, %v595
    %v698 = vpop.permute.xlu0 %697
    %701 = vset.pattern.permute.xlu0 0
    %702 = vperm.xlu0 %701, %v596
    %v703 = vpop.permute.xlu0 %702
    %706 = vset.pattern.permute.xlu0 0
    %707 = vperm.xlu0 %706, %v597
    %v708 = vpop.permute.xlu0 %707
    %711 = vset.pattern.permute.xlu0 0
    %712 = vperm.xlu0 %711, %v598
    %v713 = vpop.permute.xlu0 %712
    %716 = vset.pattern.permute.xlu0 0
    %717 = vperm.xlu0 %716, %v599
    %v718 = vpop.permute.xlu0 %717
    %721 = vset.pattern.permute.xlu0 0
    %722 = vperm.xlu0 %721, %v600
    %v723 = vpop.permute.xlu0 %722
    %726 = vset.pattern.permute.xlu0 0
    %727 = vperm.xlu0 %726, %v601
    %v728 = vpop.permute.xlu0 %727
    %731 = vset.pattern.permute.xlu0 0
    %732 = vperm.xlu0 %731, %v602
    %v733 = vpop.permute.xlu0 %732
    %736 = vset.pattern.permute.xlu0 0
    %737 = vperm.xlu0 %736, %v603
    %v738 = vpop.permute.xlu0 %737
    %741 = vset.pattern.permute.xlu0 0
    %742 = vperm.xlu0 %741, %v604
    %v743 = vpop.permute.xlu0 %742
    %746 = vset.pattern.permute.xlu0 0
    %747 = vperm.xlu0 %746, %v605
    %v748 = vpop.permute.xlu0 %747
    %751 = vset.pattern.permute.xlu0 0
    %752 = vperm.xlu0 %751, %v606
    %v753 = vpop.permute.xlu0 %752
    %756 = vset.pattern.permute.xlu0 0
    %757 = vperm.xlu0 %756, %v607
    %v758 = vpop.permute.xlu0 %757
    %761 = vset.pattern.permute.xlu0 0
    %762 = vperm.xlu0 %761, %v608
    %v763 = vpop.permute.xlu0 %762
    %766 = vset.pattern.permute.xlu0 0
    %767 = vperm.xlu0 %766, %v609
    %v768 = vpop.permute.xlu0 %767
    %771 = vset.pattern.permute.xlu0 0
    %772 = vperm.xlu0 %771, %v610
    %v773 = vpop.permute.xlu0 %772
    %776 = vset.pattern.permute.xlu0 0
    %777 = vperm.xlu0 %776, %v611
    %v778 = vpop.permute.xlu0 %777
    %781 = vset.pattern.permute.xlu0 0
    %782 = vperm.xlu0 %781, %v612
    %v783 = vpop.permute.xlu0 %782
    %786 = vset.pattern.permute.xlu0 0
    %787 = vperm.xlu0 %786, %v613
    %v788 = vpop.permute.xlu0 %787
    %791 = vset.pattern.permute.xlu0 0
    %792 = vperm.xlu0 %791, %v614
    %v793 = vpop.permute.xlu0 %792
    %796 = vset.pattern.permute.xlu0 0
    %797 = vperm.xlu0 %796, %v615
    %v798 = vpop.permute.xlu0 %797
    %801 = vset.pattern.permute.xlu0 0
    %802 = vperm.xlu0 %801, %v616
    %v803 = vpop.permute.xlu0 %802
    %806 = vset.pattern.permute.xlu0 0
    %807 = vperm.xlu0 %806, %v617
    %v808 = vpop.permute.xlu0 %807
    %811 = vset.pattern.permute.xlu0 0
    %812 = vperm.xlu0 %811, %v618
    %v813 = vpop.permute.xlu0 %812
    %816 = vset.pattern.permute.xlu0 0
    %817 = vperm.xlu0 %816, %v619
    %v818 = vpop.permute.xlu0 %817
    %821 = vset.pattern.permute.xlu0 0
    %822 = vperm.xlu0 %821, %v620
    %v823 = vpop.permute.xlu0 %822
    %826 = vset.pattern.permute.xlu0 0
    %827 = vperm.xlu0 %826, %v621
    %v828 = vpop.permute.xlu0 %827
    %831 = vset.pattern.permute.xlu0 0
    %832 = vperm.xlu0 %831, %v622
    %v833 = vpop.permute.xlu0 %832
    %836 = vset.pattern.permute.xlu0 0
    %837 = vperm.xlu0 %836, %v623
    %v838 = vpop.permute.xlu0 %837
    %841 = vset.pattern.permute.xlu0 0
    %842 = vperm.xlu0 %841, %v624
    %v843 = vpop.permute.xlu0 %842
    %846 = vset.pattern.permute.xlu0 0
    %847 = vperm.xlu0 %846, %v625
    %v848 = vpop.permute.xlu0 %847
    %851 = vset.pattern.permute.xlu0 0
    %852 = vperm.xlu0 %851, %v626
    %v853 = vpop.permute.xlu0 %852
    %856 = vset.pattern.permute.xlu0 0
    %857 = vperm.xlu0 %856, %v627
    %v858 = vpop.permute.xlu0 %857
    %861 = vset.pattern.permute.xlu0 0
    %862 = vperm.xlu0 %861, %v628
    %v863 = vpop.permute.xlu0 %862
    %866 = vset.pattern.permute.xlu0 0
    %867 = vperm.xlu0 %866, %v629
    %v868 = vpop.permute.xlu0 %867
    %871 = vset.pattern.permute.xlu0 0
    %872 = vperm.xlu0 %871, %v630
    %v873 = vpop.permute.xlu0 %872
    %876 = vset.pattern.permute.xlu0 0
    %877 = vperm.xlu0 %876, %v631
    %v878 = vpop.permute.xlu0 %877
    %881 = vset.pattern.permute.xlu0 0
    %882 = vperm.xlu0 %881, %v632
    %v883 = vpop.permute.xlu0 %882
    %886 = vset.pattern.permute.xlu0 0
    %887 = vperm.xlu0 %886, %v633
    %v888 = vpop.permute.xlu0 %887
    %891 = vset.pattern.permute.xlu0 0
    %892 = vperm.xlu0 %891, %v634
    %v893 = vpop.permute.xlu0 %892
    %896 = vset.pattern.permute.xlu0 0
    %897 = vperm.xlu0 %896, %v635
    %v898 = vpop.permute.xlu0 %897
    %901 = vset.pattern.permute.xlu0 0
    %902 = vperm.xlu0 %901, %v636
    %v903 = vpop.permute.xlu0 %902
    %906 = vset.pattern.permute.xlu0 0
    %907 = vperm.xlu0 %906, %v637
    %v908 = vpop.permute.xlu0 %907
    %911 = vset.pattern.permute.xlu0 0
    %912 = vperm.xlu0 %911, %v638
    %v913 = vpop.permute.xlu0 %912
    %916 = vset.pattern.permute.xlu0 0
    %917 = vperm.xlu0 %916, %v639
    %v918 = vpop.permute.xlu0 %917
    %921 = vset.pattern.permute.xlu0 0
    %922 = vperm.xlu0 %921, %v640
    %v923 = vpop.permute.xlu0 %922
    %926 = vset.pattern.permute.xlu0 0
    %927 = vperm.xlu0 %926, %v641
    %v928 = vpop.permute.xlu0 %927
    %931 = vset.pattern.permute.xlu0 0
    %932 = vperm.xlu0 %931, %v642
    %v933 = vpop.permute.xlu0 %932
    %936 = vset.pattern.permute.xlu0 0
    %937 = vperm.xlu0 %936, %v643
    %v938 = vpop.permute.xlu0 %937
    %941 = vset.pattern.permute.xlu0 0
    %942 = vperm.xlu0 %941, %v644
    %v943 = vpop.permute.xlu0 %942
    %946 = vset.pattern.permute.xlu0 0
    %947 = vperm.xlu0 %946, %v645
    %v948 = vpop.permute.xlu0 %947
    %951 = vset.pattern.permute.xlu0 0
    %952 = vperm.xlu0 %951, %v646
    %v953 = vpop.permute.xlu0 %952
    %956 = vset.pattern.permute.xlu0 0
    %957 = vperm.xlu0 %956, %v647
    %v958 = vpop.permute.xlu0 %957
    %961 = vset.pattern.permute.xlu0 0
    %962 = vperm.xlu0 %961, %v648
    %v963 = vpop.permute.xlu0 %962
    %966 = vset.pattern.permute.xlu0 0
    %967 = vperm.xlu0 %966, %v649
    %v968 = vpop.permute.xlu0 %967
    %v970 = vmul.f32 %v427, %v653
    %v971 = vmul.f32 %v429, %v658
    %v972 = vmul.f32 %v432, %v663
    %v973 = vmul.f32 %v434, %v668
    %v974 = vmul.f32 %v437, %v673
    %v975 = vmul.f32 %v439, %v678
    %v976 = vmul.f32 %v442, %v683
    %v977 = vmul.f32 %v444, %v688
    %v978 = vmul.f32 %v447, %v693
    %v979 = vmul.f32 %v449, %v698
    %v980 = vmul.f32 %v452, %v703
    %v981 = vmul.f32 %v454, %v708
    %v982 = vmul.f32 %v457, %v713
    %v983 = vmul.f32 %v459, %v718
    %v984 = vmul.f32 %v462, %v723
    %v985 = vmul.f32 %v464, %v728
    %v986 = vmul.f32 %v467, %v733
    %v987 = vmul.f32 %v469, %v738
    %v988 = vmul.f32 %v472, %v743
    %v989 = vmul.f32 %v474, %v748
    %v990 = vmul.f32 %v477, %v753
    %v991 = vmul.f32 %v479, %v758
    %v992 = vmul.f32 %v482, %v763
    %v993 = vmul.f32 %v484, %v768
    %v994 = vmul.f32 %v487, %v773
    %v995 = vmul.f32 %v489, %v778
    %v996 = vmul.f32 %v492, %v783
    %v997 = vmul.f32 %v494, %v788
    %v998 = vmul.f32 %v497, %v793
    %v999 = vmul.f32 %v499, %v798
    %v1000 = vmul.f32 %v502, %v803
    %v1001 = vmul.f32 %v504, %v808
    %v1002 = vmul.f32 %v507, %v813
    %v1003 = vmul.f32 %v509, %v818
    %v1004 = vmul.f32 %v512, %v823
    %v1005 = vmul.f32 %v514, %v828
    %v1006 = vmul.f32 %v517, %v833
    %v1007 = vmul.f32 %v519, %v838
    %v1008 = vmul.f32 %v522, %v843
    %v1009 = vmul.f32 %v524, %v848
    %v1010 = vmul.f32 %v527, %v853
    %v1011 = vmul.f32 %v529, %v858
    %v1012 = vmul.f32 %v532, %v863
    %v1013 = vmul.f32 %v534, %v868
    %v1014 = vmul.f32 %v537, %v873
    %v1015 = vmul.f32 %v539, %v878
    %v1016 = vmul.f32 %v542, %v883
    %v1017 = vmul.f32 %v544, %v888
    %v1018 = vmul.f32 %v547, %v893
    %v1019 = vmul.f32 %v549, %v898
    %v1020 = vmul.f32 %v552, %v903
    %v1021 = vmul.f32 %v554, %v908
    %v1022 = vmul.f32 %v557, %v913
    %v1023 = vmul.f32 %v559, %v918
    %v1024 = vmul.f32 %v562, %v923
    %v1025 = vmul.f32 %v564, %v928
    %v1026 = vmul.f32 %v567, %v933
    %v1027 = vmul.f32 %v569, %v938
    %v1028 = vmul.f32 %v572, %v943
    %v1029 = vmul.f32 %v574, %v948
    %v1030 = vmul.f32 %v577, %v953
    %v1031 = vmul.f32 %v579, %v958
    %v1032 = vmul.f32 %v582, %v963
    %v1033 = vmul.f32 %v584, %v968
    %v1034 = vpack.c.bf16 %v971, %v970
    %v1035 = vpack.c.bf16 %v973, %v972
    %v1036 = vpack.c.bf16 %v975, %v974
    %v1037 = vpack.c.bf16 %v977, %v976
    %v1038 = vpack.c.bf16 %v979, %v978
    %v1039 = vpack.c.bf16 %v981, %v980
    %v1040 = vpack.c.bf16 %v983, %v982
    %v1041 = vpack.c.bf16 %v985, %v984
    %v1042 = vpack.c.bf16 %v987, %v986
    %v1043 = vpack.c.bf16 %v989, %v988
    %v1044 = vpack.c.bf16 %v991, %v990
    %v1045 = vpack.c.bf16 %v993, %v992
    %v1046 = vpack.c.bf16 %v995, %v994
    %v1047 = vpack.c.bf16 %v997, %v996
    %v1048 = vpack.c.bf16 %v999, %v998
    %v1049 = vpack.c.bf16 %v1001, %v1000
    %v1050 = vpack.c.bf16 %v1003, %v1002
    %v1051 = vpack.c.bf16 %v1005, %v1004
    %v1052 = vpack.c.bf16 %v1007, %v1006
    %v1053 = vpack.c.bf16 %v1009, %v1008
    %v1054 = vpack.c.bf16 %v1011, %v1010
    %v1055 = vpack.c.bf16 %v1013, %v1012
    %v1056 = vpack.c.bf16 %v1015, %v1014
    %v1057 = vpack.c.bf16 %v1017, %v1016
    %v1058 = vpack.c.bf16 %v1019, %v1018
    %v1059 = vpack.c.bf16 %v1021, %v1020
    %v1060 = vpack.c.bf16 %v1023, %v1022
    %v1061 = vpack.c.bf16 %v1025, %v1024
    %v1062 = vpack.c.bf16 %v1027, %v1026
    %v1063 = vpack.c.bf16 %v1029, %v1028
    %v1064 = vpack.c.bf16 %v1031, %v1030
    %v1065 = vpack.c.bf16 %v1033, %v1032
    %v1066 = vld [vmem:[%s0] sm:$0xff]
    %v1067 = vld [vmem:[%s0 + $0x8] sm:$0xff]
    %v1068 = vld [vmem:[%s0 + $0x10] sm:$0xff]
    %v1069 = vld [vmem:[%s0 + $0x18] sm:$0xff]
    %v1070 = vld [vmem:[%s0 + $0x20] sm:$0xff]
    %v1071 = vld [vmem:[%s0 + $0x28] sm:$0xff]
    %v1072 = vld [vmem:[%s0 + $0x30] sm:$0xff]
    %v1073 = vld [vmem:[%s0 + $0x38] sm:$0xff]
    %v1074 = vld [vmem:[%s0 + $0x40] sm:$0xff]
    %v1075 = vld [vmem:[%s0 + $0x48] sm:$0xff]
    %v1076 = vld [vmem:[%s0 + $0x50] sm:$0xff]
    %v1077 = vld [vmem:[%s0 + $0x58] sm:$0xff]
    %v1078 = vld [vmem:[%s0 + $0x60] sm:$0xff]
    %v1079 = vld [vmem:[%s0 + $0x68] sm:$0xff]
    %v1080 = vld [vmem:[%s0 + $0x70] sm:$0xff]
    %v1081 = vld [vmem:[%s0 + $0x78] sm:$0xff]
    %v1082 = vld [vmem:[%s0 + $0x80] sm:$0xff]
    %v1083 = vld [vmem:[%s0 + $0x88] sm:$0xff]
    %v1084 = vld [vmem:[%s0 + $0x90] sm:$0xff]
    %v1085 = vld [vmem:[%s0 + $0x98] sm:$0xff]
    %v1086 = vld [vmem:[%s0 + $0xa0] sm:$0xff]
    %v1087 = vld [vmem:[%s0 + $0xa8] sm:$0xff]
    %v1088 = vld [vmem:[%s0 + $0xb0] sm:$0xff]
    %v1089 = vld [vmem:[%s0 + $0xb8] sm:$0xff]
    %v1090 = vld [vmem:[%s0 + $0xc0] sm:$0xff]
    %v1091 = vld [vmem:[%s0 + $0xc8] sm:$0xff]
    %v1092 = vld [vmem:[%s0 + $0xd0] sm:$0xff]
    %v1093 = vld [vmem:[%s0 + $0xd8] sm:$0xff]
    %v1094 = vld [vmem:[%s0 + $0xe0] sm:$0xff]
    %v1095 = vld [vmem:[%s0 + $0xe8] sm:$0xff]
    %v1096 = vld [vmem:[%s0 + $0xf0] sm:$0xff]
    %v1097 = vld [vmem:[%s0 + $0xf8] sm:$0xff]
    %v1098 = vld [vmem:[%s0 + $0x100] sm:$0xff]
    %v1099 = vld [vmem:[%s0 + $0x108] sm:$0xff]
    %v1100 = vld [vmem:[%s0 + $0x110] sm:$0xff]
    %v1101 = vld [vmem:[%s0 + $0x118] sm:$0xff]
    %v1102 = vld [vmem:[%s0 + $0x120] sm:$0xff]
    %v1103 = vld [vmem:[%s0 + $0x128] sm:$0xff]
    %v1104 = vld [vmem:[%s0 + $0x130] sm:$0xff]
    %v1105 = vld [vmem:[%s0 + $0x138] sm:$0xff]
    %v1106 = vld [vmem:[%s0 + $0x140] sm:$0xff]
    %v1107 = vld [vmem:[%s0 + $0x148] sm:$0xff]
    %v1108 = vld [vmem:[%s0 + $0x150] sm:$0xff]
    %v1109 = vld [vmem:[%s0 + $0x158] sm:$0xff]
    %v1110 = vld [vmem:[%s0 + $0x160] sm:$0xff]
    %v1111 = vld [vmem:[%s0 + $0x168] sm:$0xff]
    %v1112 = vld [vmem:[%s0 + $0x170] sm:$0xff]
    %v1113 = vld [vmem:[%s0 + $0x178] sm:$0xff]
    %v1114 = vld [vmem:[%s0 + $0x180] sm:$0xff]
    %v1115 = vld [vmem:[%s0 + $0x188] sm:$0xff]
    %v1116 = vld [vmem:[%s0 + $0x190] sm:$0xff]
    %v1117 = vld [vmem:[%s0 + $0x198] sm:$0xff]
    %v1118 = vld [vmem:[%s0 + $0x1a0] sm:$0xff]
    %v1119 = vld [vmem:[%s0 + $0x1a8] sm:$0xff]
    %v1120 = vld [vmem:[%s0 + $0x1b0] sm:$0xff]
    %v1121 = vld [vmem:[%s0 + $0x1b8] sm:$0xff]
    %v1122 = vld [vmem:[%s0 + $0x1c0] sm:$0xff]
    %v1123 = vld [vmem:[%s0 + $0x1c8] sm:$0xff]
    %v1124 = vld [vmem:[%s0 + $0x1d0] sm:$0xff]
    %v1125 = vld [vmem:[%s0 + $0x1d8] sm:$0xff]
    %v1126 = vld [vmem:[%s0 + $0x1e0] sm:$0xff]
    %v1127 = vld [vmem:[%s0 + $0x1e8] sm:$0xff]
    %v1128 = vld [vmem:[%s0 + $0x1f0] sm:$0xff]
    %v1129 = vld [vmem:[%s0 + $0x1f8] sm:$0xff]
    %v1130 = vunpack.c.0.s8 %v1066
    %v1131 = vunpack.c.0.s8 %v1067
    %v1132 = vunpack.c.0.s8 %v1068
    %v1133 = vunpack.c.0.s8 %v1069
    %v1134 = vunpack.c.1.s8 %v1066
    %v1135 = vunpack.c.1.s8 %v1067
    %v1136 = vunpack.c.1.s8 %v1068
    %v1137 = vunpack.c.1.s8 %v1069
    %v1138 = vunpack.c.2.s8 %v1066
    %v1139 = vunpack.c.2.s8 %v1067
    %v1140 = vunpack.c.2.s8 %v1068
    %v1141 = vunpack.c.2.s8 %v1069
    %v1142 = vunpack.c.3.s8 %v1066
    %v1143 = vunpack.c.3.s8 %v1067
    %v1144 = vunpack.c.3.s8 %v1068
    %v1145 = vunpack.c.3.s8 %v1069
    %v1146 = vunpack.c.0.s8 %v1070
    %v1147 = vunpack.c.0.s8 %v1071
    %v1148 = vunpack.c.0.s8 %v1072
    %v1149 = vunpack.c.0.s8 %v1073
    %v1150 = vunpack.c.1.s8 %v1070
    %v1151 = vunpack.c.1.s8 %v1071
    %v1152 = vunpack.c.1.s8 %v1072
    %v1153 = vunpack.c.1.s8 %v1073
    %v1154 = vunpack.c.2.s8 %v1070
    %v1155 = vunpack.c.2.s8 %v1071
    %v1156 = vunpack.c.2.s8 %v1072
    %v1157 = vunpack.c.2.s8 %v1073
    %v1158 = vunpack.c.3.s8 %v1070
    %v1159 = vunpack.c.3.s8 %v1071
    %v1160 = vunpack.c.3.s8 %v1072
    %v1161 = vunpack.c.3.s8 %v1073
    %v1162 = vunpack.c.0.s8 %v1074
    %v1163 = vunpack.c.0.s8 %v1075
    %v1164 = vunpack.c.0.s8 %v1076
    %v1165 = vunpack.c.0.s8 %v1077
    %v1166 = vunpack.c.1.s8 %v1074
    %v1167 = vunpack.c.1.s8 %v1075
    %v1168 = vunpack.c.1.s8 %v1076
    %v1169 = vunpack.c.1.s8 %v1077
    %v1170 = vunpack.c.2.s8 %v1074
    %v1171 = vunpack.c.2.s8 %v1075
    %v1172 = vunpack.c.2.s8 %v1076
    %v1173 = vunpack.c.2.s8 %v1077
    %v1174 = vunpack.c.3.s8 %v1074
    %v1175 = vunpack.c.3.s8 %v1075
    %v1176 = vunpack.c.3.s8 %v1076
    %v1177 = vunpack.c.3.s8 %v1077
    %v1178 = vunpack.c.0.s8 %v1078
    %v1179 = vunpack.c.0.s8 %v1079
    %v1180 = vunpack.c.0.s8 %v1080
    %v1181 = vunpack.c.0.s8 %v1081
    %v1182 = vunpack.c.1.s8 %v1078
    %v1183 = vunpack.c.1.s8 %v1079
    %v1184 = vunpack.c.1.s8 %v1080
    %v1185 = vunpack.c.1.s8 %v1081
    %v1186 = vunpack.c.2.s8 %v1078
    %v1187 = vunpack.c.2.s8 %v1079
    %v1188 = vunpack.c.2.s8 %v1080
    %v1189 = vunpack.c.2.s8 %v1081
    %v1190 = vunpack.c.3.s8 %v1078
    %v1191 = vunpack.c.3.s8 %v1079
    %v1192 = vunpack.c.3.s8 %v1080
    %v1193 = vunpack.c.3.s8 %v1081
    %v1194 = vunpack.c.0.s8 %v1082
    %v1195 = vunpack.c.0.s8 %v1083
    %v1196 = vunpack.c.0.s8 %v1084
    %v1197 = vunpack.c.0.s8 %v1085
    %v1198 = vunpack.c.1.s8 %v1082
    %v1199 = vunpack.c.1.s8 %v1083
    %v1200 = vunpack.c.1.s8 %v1084
    %v1201 = vunpack.c.1.s8 %v1085
    %v1202 = vunpack.c.2.s8 %v1082
    %v1203 = vunpack.c.2.s8 %v1083
    %v1204 = vunpack.c.2.s8 %v1084
    %v1205 = vunpack.c.2.s8 %v1085
    %v1206 = vunpack.c.3.s8 %v1082
    %v1207 = vunpack.c.3.s8 %v1083
    %v1208 = vunpack.c.3.s8 %v1084
    %v1209 = vunpack.c.3.s8 %v1085
    %v1210 = vunpack.c.0.s8 %v1086
    %v1211 = vunpack.c.0.s8 %v1087
    %v1212 = vunpack.c.0.s8 %v1088
    %v1213 = vunpack.c.0.s8 %v1089
    %v1214 = vunpack.c.1.s8 %v1086
    %v1215 = vunpack.c.1.s8 %v1087
    %v1216 = vunpack.c.1.s8 %v1088
    %v1217 = vunpack.c.1.s8 %v1089
    %v1218 = vunpack.c.2.s8 %v1086
    %v1219 = vunpack.c.2.s8 %v1087
    %v1220 = vunpack.c.2.s8 %v1088
    %v1221 = vunpack.c.2.s8 %v1089
    %v1222 = vunpack.c.3.s8 %v1086
    %v1223 = vunpack.c.3.s8 %v1087
    %v1224 = vunpack.c.3.s8 %v1088
    %v1225 = vunpack.c.3.s8 %v1089
    %v1226 = vunpack.c.0.s8 %v1090
    %v1227 = vunpack.c.0.s8 %v1091
    %v1228 = vunpack.c.0.s8 %v1092
    %v1229 = vunpack.c.0.s8 %v1093
    %v1230 = vunpack.c.1.s8 %v1090
    %v1231 = vunpack.c.1.s8 %v1091
    %v1232 = vunpack.c.1.s8 %v1092
    %v1233 = vunpack.c.1.s8 %v1093
    %v1234 = vunpack.c.2.s8 %v1090
    %v1235 = vunpack.c.2.s8 %v1091
    %v1236 = vunpack.c.2.s8 %v1092
    %v1237 = vunpack.c.2.s8 %v1093
    %v1238 = vunpack.c.3.s8 %v1090
    %v1239 = vunpack.c.3.s8 %v1091
    %v1240 = vunpack.c.3.s8 %v1092
    %v1241 = vunpack.c.3.s8 %v1093
    %v1242 = vunpack.c.0.s8 %v1094
    %v1243 = vunpack.c.0.s8 %v1095
    %v1244 = vunpack.c.0.s8 %v1096
    %v1245 = vunpack.c.0.s8 %v1097
    %v1246 = vunpack.c.1.s8 %v1094
    %v1247 = vunpack.c.1.s8 %v1095
    %v1248 = vunpack.c.1.s8 %v1096
    %v1249 = vunpack.c.1.s8 %v1097
    %v1250 = vunpack.c.2.s8 %v1094
    %v1251 = vunpack.c.2.s8 %v1095
    %v1252 = vunpack.c.2.s8 %v1096
    %v1253 = vunpack.c.2.s8 %v1097
    %v1254 = vunpack.c.3.s8 %v1094
    %v1255 = vunpack.c.3.s8 %v1095
    %v1256 = vunpack.c.3.s8 %v1096
    %v1257 = vunpack.c.3.s8 %v1097
    %v1258 = vunpack.c.0.s8 %v1098
    %v1259 = vunpack.c.0.s8 %v1099
    %v1260 = vunpack.c.0.s8 %v1100
    %v1261 = vunpack.c.0.s8 %v1101
    %v1262 = vunpack.c.1.s8 %v1098
    %v1263 = vunpack.c.1.s8 %v1099
    %v1264 = vunpack.c.1.s8 %v1100
    %v1265 = vunpack.c.1.s8 %v1101
    %v1266 = vunpack.c.2.s8 %v1098
    %v1267 = vunpack.c.2.s8 %v1099
    %v1268 = vunpack.c.2.s8 %v1100
    %v1269 = vunpack.c.2.s8 %v1101
    %v1270 = vunpack.c.3.s8 %v1098
    %v1271 = vunpack.c.3.s8 %v1099
    %v1272 = vunpack.c.3.s8 %v1100
    %v1273 = vunpack.c.3.s8 %v1101
    %v1274 = vunpack.c.0.s8 %v1102
    %v1275 = vunpack.c.0.s8 %v1103
    %v1276 = vunpack.c.0.s8 %v1104
    %v1277 = vunpack.c.0.s8 %v1105
    %v1278 = vunpack.c.1.s8 %v1102
    %v1279 = vunpack.c.1.s8 %v1103
    %v1280 = vunpack.c.1.s8 %v1104
    %v1281 = vunpack.c.1.s8 %v1105
    %v1282 = vunpack.c.2.s8 %v1102
    %v1283 = vunpack.c.2.s8 %v1103
    %v1284 = vunpack.c.2.s8 %v1104
    %v1285 = vunpack.c.2.s8 %v1105
    %v1286 = vunpack.c.3.s8 %v1102
    %v1287 = vunpack.c.3.s8 %v1103
    %v1288 = vunpack.c.3.s8 %v1104
    %v1289 = vunpack.c.3.s8 %v1105
    %v1290 = vunpack.c.0.s8 %v1106
    %v1291 = vunpack.c.0.s8 %v1107
    %v1292 = vunpack.c.0.s8 %v1108
    %v1293 = vunpack.c.0.s8 %v1109
    %v1294 = vunpack.c.1.s8 %v1106
    %v1295 = vunpack.c.1.s8 %v1107
    %v1296 = vunpack.c.1.s8 %v1108
    %v1297 = vunpack.c.1.s8 %v1109
    %v1298 = vunpack.c.2.s8 %v1106
    %v1299 = vunpack.c.2.s8 %v1107
    %v1300 = vunpack.c.2.s8 %v1108
    %v1301 = vunpack.c.2.s8 %v1109
    %v1302 = vunpack.c.3.s8 %v1106
    %v1303 = vunpack.c.3.s8 %v1107
    %v1304 = vunpack.c.3.s8 %v1108
    %v1305 = vunpack.c.3.s8 %v1109
    %v1306 = vunpack.c.0.s8 %v1110
    %v1307 = vunpack.c.0.s8 %v1111
    %v1308 = vunpack.c.0.s8 %v1112
    %v1309 = vunpack.c.0.s8 %v1113
    %v1310 = vunpack.c.1.s8 %v1110
    %v1311 = vunpack.c.1.s8 %v1111
    %v1312 = vunpack.c.1.s8 %v1112
    %v1313 = vunpack.c.1.s8 %v1113
    %v1314 = vunpack.c.2.s8 %v1110
    %v1315 = vunpack.c.2.s8 %v1111
    %v1316 = vunpack.c.2.s8 %v1112
    %v1317 = vunpack.c.2.s8 %v1113
    %v1318 = vunpack.c.3.s8 %v1110
    %v1319 = vunpack.c.3.s8 %v1111
    %v1320 = vunpack.c.3.s8 %v1112
    %v1321 = vunpack.c.3.s8 %v1113
    %v1322 = vunpack.c.0.s8 %v1114
    %v1323 = vunpack.c.0.s8 %v1115
    %v1324 = vunpack.c.0.s8 %v1116
    %v1325 = vunpack.c.0.s8 %v1117
    %v1326 = vunpack.c.1.s8 %v1114
    %v1327 = vunpack.c.1.s8 %v1115
    %v1328 = vunpack.c.1.s8 %v1116
    %v1329 = vunpack.c.1.s8 %v1117
    %v1330 = vunpack.c.2.s8 %v1114
    %v1331 = vunpack.c.2.s8 %v1115
    %v1332 = vunpack.c.2.s8 %v1116
    %v1333 = vunpack.c.2.s8 %v1117
    %v1334 = vunpack.c.3.s8 %v1114
    %v1335 = vunpack.c.3.s8 %v1115
    %v1336 = vunpack.c.3.s8 %v1116
    %v1337 = vunpack.c.3.s8 %v1117
    %v1338 = vunpack.c.0.s8 %v1118
    %v1339 = vunpack.c.0.s8 %v1119
    %v1340 = vunpack.c.0.s8 %v1120
    %v1341 = vunpack.c.0.s8 %v1121
    %v1342 = vunpack.c.1.s8 %v1118
    %v1343 = vunpack.c.1.s8 %v1119
    %v1344 = vunpack.c.1.s8 %v1120
    %v1345 = vunpack.c.1.s8 %v1121
    %v1346 = vunpack.c.2.s8 %v1118
    %v1347 = vunpack.c.2.s8 %v1119
    %v1348 = vunpack.c.2.s8 %v1120
    %v1349 = vunpack.c.2.s8 %v1121
    %v1350 = vunpack.c.3.s8 %v1118
    %v1351 = vunpack.c.3.s8 %v1119
    %v1352 = vunpack.c.3.s8 %v1120
    %v1353 = vunpack.c.3.s8 %v1121
    %v1354 = vunpack.c.0.s8 %v1122
    %v1355 = vunpack.c.0.s8 %v1123
    %v1356 = vunpack.c.0.s8 %v1124
    %v1357 = vunpack.c.0.s8 %v1125
    %v1358 = vunpack.c.1.s8 %v1122
    %v1359 = vunpack.c.1.s8 %v1123
    %v1360 = vunpack.c.1.s8 %v1124
    %v1361 = vunpack.c.1.s8 %v1125
    %v1362 = vunpack.c.2.s8 %v1122
    %v1363 = vunpack.c.2.s8 %v1123
    %v1364 = vunpack.c.2.s8 %v1124
    %v1365 = vunpack.c.2.s8 %v1125
    %v1366 = vunpack.c.3.s8 %v1122
    %v1367 = vunpack.c.3.s8 %v1123
    %v1368 = vunpack.c.3.s8 %v1124
    %v1369 = vunpack.c.3.s8 %v1125
    %v1370 = vunpack.c.0.s8 %v1126
    %v1371 = vunpack.c.0.s8 %v1127
    %v1372 = vunpack.c.0.s8 %v1128
    %v1373 = vunpack.c.0.s8 %v1129
    %v1374 = vunpack.c.1.s8 %v1126
    %v1375 = vunpack.c.1.s8 %v1127
    %v1376 = vunpack.c.1.s8 %v1128
    %v1377 = vunpack.c.1.s8 %v1129
    %v1378 = vunpack.c.2.s8 %v1126
    %v1379 = vunpack.c.2.s8 %v1127
    %v1380 = vunpack.c.2.s8 %v1128
    %v1381 = vunpack.c.2.s8 %v1129
    %v1382 = vunpack.c.3.s8 %v1126
    %v1383 = vunpack.c.3.s8 %v1127
    %v1384 = vunpack.c.3.s8 %v1128
    %v1385 = vunpack.c.3.s8 %v1129
    %v1386 = vcvt.s32.f32 %v1130
    %v1387 = vcvt.s32.f32 %v1131
    %v1388 = vcvt.s32.f32 %v1132
    %v1389 = vcvt.s32.f32 %v1133
    %v1390 = vcvt.s32.f32 %v1134
    %v1391 = vcvt.s32.f32 %v1135
    %v1392 = vcvt.s32.f32 %v1136
    %v1393 = vcvt.s32.f32 %v1137
    %v1394 = vcvt.s32.f32 %v1138
    %v1395 = vcvt.s32.f32 %v1139
    %v1396 = vcvt.s32.f32 %v1140
    %v1397 = vcvt.s32.f32 %v1141
    %v1398 = vcvt.s32.f32 %v1142
    %v1399 = vcvt.s32.f32 %v1143
    %v1400 = vcvt.s32.f32 %v1144
    %v1401 = vcvt.s32.f32 %v1145
    %v1402 = vcvt.s32.f32 %v1146
    %v1403 = vcvt.s32.f32 %v1147
    %v1404 = vcvt.s32.f32 %v1148
    %v1405 = vcvt.s32.f32 %v1149
    %v1406 = vcvt.s32.f32 %v1150
    %v1407 = vcvt.s32.f32 %v1151
    %v1408 = vcvt.s32.f32 %v1152
    %v1409 = vcvt.s32.f32 %v1153
    %v1410 = vcvt.s32.f32 %v1154
    %v1411 = vcvt.s32.f32 %v1155
    %v1412 = vcvt.s32.f32 %v1156
    %v1413 = vcvt.s32.f32 %v1157
    %v1414 = vcvt.s32.f32 %v1158
    %v1415 = vcvt.s32.f32 %v1159
    %v1416 = vcvt.s32.f32 %v1160
    %v1417 = vcvt.s32.f32 %v1161
    %v1418 = vcvt.s32.f32 %v1162
    %v1419 = vcvt.s32.f32 %v1163
    %v1420 = vcvt.s32.f32 %v1164
    %v1421 = vcvt.s32.f32 %v1165
    %v1422 = vcvt.s32.f32 %v1166
    %v1423 = vcvt.s32.f32 %v1167
    %v1424 = vcvt.s32.f32 %v1168
    %v1425 = vcvt.s32.f32 %v1169
    %v1426 = vcvt.s32.f32 %v1170
    %v1427 = vcvt.s32.f32 %v1171
    %v1428 = vcvt.s32.f32 %v1172
    %v1429 = vcvt.s32.f32 %v1173
    %v1430 = vcvt.s32.f32 %v1174
    %v1431 = vcvt.s32.f32 %v1175
    %v1432 = vcvt.s32.f32 %v1176
    %v1433 = vcvt.s32.f32 %v1177
    %v1434 = vcvt.s32.f32 %v1178
    %v1435 = vcvt.s32.f32 %v1179
    %v1436 = vcvt.s32.f32 %v1180
    %v1437 = vcvt.s32.f32 %v1181
    %v1438 = vcvt.s32.f32 %v1182
    %v1439 = vcvt.s32.f32 %v1183
    %v1440 = vcvt.s32.f32 %v1184
    %v1441 = vcvt.s32.f32 %v1185
    %v1442 = vcvt.s32.f32 %v1186
    %v1443 = vcvt.s32.f32 %v1187
    %v1444 = vcvt.s32.f32 %v1188
    %v1445 = vcvt.s32.f32 %v1189
    %v1446 = vcvt.s32.f32 %v1190
    %v1447 = vcvt.s32.f32 %v1191
    %v1448 = vcvt.s32.f32 %v1192
    %v1449 = vcvt.s32.f32 %v1193
    %v1450 = vcvt.s32.f32 %v1194
    %v1451 = vcvt.s32.f32 %v1195
    %v1452 = vcvt.s32.f32 %v1196
    %v1453 = vcvt.s32.f32 %v1197
    %v1454 = vcvt.s32.f32 %v1198
    %v1455 = vcvt.s32.f32 %v1199
    %v1456 = vcvt.s32.f32 %v1200
    %v1457 = vcvt.s32.f32 %v1201
    %v1458 = vcvt.s32.f32 %v1202
    %v1459 = vcvt.s32.f32 %v1203
    %v1460 = vcvt.s32.f32 %v1204
    %v1461 = vcvt.s32.f32 %v1205
    %v1462 = vcvt.s32.f32 %v1206
    %v1463 = vcvt.s32.f32 %v1207
    %v1464 = vcvt.s32.f32 %v1208
    %v1465 = vcvt.s32.f32 %v1209
    %v1466 = vcvt.s32.f32 %v1210
    %v1467 = vcvt.s32.f32 %v1211
    %v1468 = vcvt.s32.f32 %v1212
    %v1469 = vcvt.s32.f32 %v1213
    %v1470 = vcvt.s32.f32 %v1214
    %v1471 = vcvt.s32.f32 %v1215
    %v1472 = vcvt.s32.f32 %v1216
    %v1473 = vcvt.s32.f32 %v1217
    %v1474 = vcvt.s32.f32 %v1218
    %v1475 = vcvt.s32.f32 %v1219
    %v1476 = vcvt.s32.f32 %v1220
    %v1477 = vcvt.s32.f32 %v1221
    %v1478 = vcvt.s32.f32 %v1222
    %v1479 = vcvt.s32.f32 %v1223
    %v1480 = vcvt.s32.f32 %v1224
    %v1481 = vcvt.s32.f32 %v1225
    %v1482 = vcvt.s32.f32 %v1226
    %v1483 = vcvt.s32.f32 %v1227
    %v1484 = vcvt.s32.f32 %v1228
    %v1485 = vcvt.s32.f32 %v1229
    %v1486 = vcvt.s32.f32 %v1230
    %v1487 = vcvt.s32.f32 %v1231
    %v1488 = vcvt.s32.f32 %v1232
    %v1489 = vcvt.s32.f32 %v1233
    %v1490 = vcvt.s32.f32 %v1234
    %v1491 = vcvt.s32.f32 %v1235
    %v1492 = vcvt.s32.f32 %v1236
    %v1493 = vcvt.s32.f32 %v1237
    %v1494 = vcvt.s32.f32 %v1238
    %v1495 = vcvt.s32.f32 %v1239
    %v1496 = vcvt.s32.f32 %v1240
    %v1497 = vcvt.s32.f32 %v1241
    %v1498 = vcvt.s32.f32 %v1242
    %v1499 = vcvt.s32.f32 %v1243
    %v1500 = vcvt.s32.f32 %v1244
    %v1501 = vcvt.s32.f32 %v1245
    %v1502 = vcvt.s32.f32 %v1246
    %v1503 = vcvt.s32.f32 %v1247
    %v1504 = vcvt.s32.f32 %v1248
    %v1505 = vcvt.s32.f32 %v1249
    %v1506 = vcvt.s32.f32 %v1250
    %v1507 = vcvt.s32.f32 %v1251
    %v1508 = vcvt.s32.f32 %v1252
    %v1509 = vcvt.s32.f32 %v1253
    %v1510 = vcvt.s32.f32 %v1254
    %v1511 = vcvt.s32.f32 %v1255
    %v1512 = vcvt.s32.f32 %v1256
    %v1513 = vcvt.s32.f32 %v1257
    %v1514 = vcvt.s32.f32 %v1258
    %v1515 = vcvt.s32.f32 %v1259
    %v1516 = vcvt.s32.f32 %v1260
    %v1517 = vcvt.s32.f32 %v1261
    %v1518 = vcvt.s32.f32 %v1262
    %v1519 = vcvt.s32.f32 %v1263
    %v1520 = vcvt.s32.f32 %v1264
    %v1521 = vcvt.s32.f32 %v1265
    %v1522 = vcvt.s32.f32 %v1266
    %v1523 = vcvt.s32.f32 %v1267
    %v1524 = vcvt.s32.f32 %v1268
    %v1525 = vcvt.s32.f32 %v1269
    %v1526 = vcvt.s32.f32 %v1270
    %v1527 = vcvt.s32.f32 %v1271
    %v1528 = vcvt.s32.f32 %v1272
    %v1529 = vcvt.s32.f32 %v1273
    %v1530 = vcvt.s32.f32 %v1274
    %v1531 = vcvt.s32.f32 %v1275
    %v1532 = vcvt.s32.f32 %v1276
    %v1533 = vcvt.s32.f32 %v1277
    %v1534 = vcvt.s32.f32 %v1278
    %v1535 = vcvt.s32.f32 %v1279
    %v1536 = vcvt.s32.f32 %v1280
    %v1537 = vcvt.s32.f32 %v1281
    %v1538 = vcvt.s32.f32 %v1282
    %v1539 = vcvt.s32.f32 %v1283
    %v1540 = vcvt.s32.f32 %v1284
    %v1541 = vcvt.s32.f32 %v1285
    %v1542 = vcvt.s32.f32 %v1286
    %v1543 = vcvt.s32.f32 %v1287
    %v1544 = vcvt.s32.f32 %v1288
    %v1545 = vcvt.s32.f32 %v1289
    %v1546 = vcvt.s32.f32 %v1290
    %v1547 = vcvt.s32.f32 %v1291
    %v1548 = vcvt.s32.f32 %v1292
    %v1549 = vcvt.s32.f32 %v1293
    %v1550 = vcvt.s32.f32 %v1294
    %v1551 = vcvt.s32.f32 %v1295
    %v1552 = vcvt.s32.f32 %v1296
    %v1553 = vcvt.s32.f32 %v1297
    %v1554 = vcvt.s32.f32 %v1298
    %v1555 = vcvt.s32.f32 %v1299
    %v1556 = vcvt.s32.f32 %v1300
    %v1557 = vcvt.s32.f32 %v1301
    %v1558 = vcvt.s32.f32 %v1302
    %v1559 = vcvt.s32.f32 %v1303
    %v1560 = vcvt.s32.f32 %v1304
    %v1561 = vcvt.s32.f32 %v1305
    %v1562 = vcvt.s32.f32 %v1306
    %v1563 = vcvt.s32.f32 %v1307
    %v1564 = vcvt.s32.f32 %v1308
    %v1565 = vcvt.s32.f32 %v1309
    %v1566 = vcvt.s32.f32 %v1310
    %v1567 = vcvt.s32.f32 %v1311
    %v1568 = vcvt.s32.f32 %v1312
    %v1569 = vcvt.s32.f32 %v1313
    %v1570 = vcvt.s32.f32 %v1314
    %v1571 = vcvt.s32.f32 %v1315
    %v1572 = vcvt.s32.f32 %v1316
    %v1573 = vcvt.s32.f32 %v1317
    %v1574 = vcvt.s32.f32 %v1318
    %v1575 = vcvt.s32.f32 %v1319
    %v1576 = vcvt.s32.f32 %v1320
    %v1577 = vcvt.s32.f32 %v1321
    %v1578 = vcvt.s32.f32 %v1322
    %v1579 = vcvt.s32.f32 %v1323
    %v1580 = vcvt.s32.f32 %v1324
    %v1581 = vcvt.s32.f32 %v1325
    %v1582 = vcvt.s32.f32 %v1326
    %v1583 = vcvt.s32.f32 %v1327
    %v1584 = vcvt.s32.f32 %v1328
    %v1585 = vcvt.s32.f32 %v1329
    %v1586 = vcvt.s32.f32 %v1330
    %v1587 = vcvt.s32.f32 %v1331
    %v1588 = vcvt.s32.f32 %v1332
    %v1589 = vcvt.s32.f32 %v1333
    %v1590 = vcvt.s32.f32 %v1334
    %v1591 = vcvt.s32.f32 %v1335
    %v1592 = vcvt.s32.f32 %v1336
    %v1593 = vcvt.s32.f32 %v1337
    %v1594 = vcvt.s32.f32 %v1338
    %v1595 = vcvt.s32.f32 %v1339
    %v1596 = vcvt.s32.f32 %v1340
    %v1597 = vcvt.s32.f32 %v1341
    %v1598 = vcvt.s32.f32 %v1342
    %v1599 = vcvt.s32.f32 %v1343
    %v1600 = vcvt.s32.f32 %v1344
    %v1601 = vcvt.s32.f32 %v1345
    %v1602 = vcvt.s32.f32 %v1346
    %v1603 = vcvt.s32.f32 %v1347
    %v1604 = vcvt.s32.f32 %v1348
    %v1605 = vcvt.s32.f32 %v1349
    %v1606 = vcvt.s32.f32 %v1350
    %v1607 = vcvt.s32.f32 %v1351
    %v1608 = vcvt.s32.f32 %v1352
    %v1609 = vcvt.s32.f32 %v1353
    %v1610 = vcvt.s32.f32 %v1354
    %v1611 = vcvt.s32.f32 %v1355
    %v1612 = vcvt.s32.f32 %v1356
    %v1613 = vcvt.s32.f32 %v1357
    %v1614 = vcvt.s32.f32 %v1358
    %v1615 = vcvt.s32.f32 %v1359
    %v1616 = vcvt.s32.f32 %v1360
    %v1617 = vcvt.s32.f32 %v1361
    %v1618 = vcvt.s32.f32 %v1362
    %v1619 = vcvt.s32.f32 %v1363
    %v1620 = vcvt.s32.f32 %v1364
    %v1621 = vcvt.s32.f32 %v1365
    %v1622 = vcvt.s32.f32 %v1366
    %v1623 = vcvt.s32.f32 %v1367
    %v1624 = vcvt.s32.f32 %v1368
    %v1625 = vcvt.s32.f32 %v1369
    %v1626 = vcvt.s32.f32 %v1370
    %v1627 = vcvt.s32.f32 %v1371
    %v1628 = vcvt.s32.f32 %v1372
    %v1629 = vcvt.s32.f32 %v1373
    %v1630 = vcvt.s32.f32 %v1374
    %v1631 = vcvt.s32.f32 %v1375
    %v1632 = vcvt.s32.f32 %v1376
    %v1633 = vcvt.s32.f32 %v1377
    %v1634 = vcvt.s32.f32 %v1378
    %v1635 = vcvt.s32.f32 %v1379
    %v1636 = vcvt.s32.f32 %v1380
    %v1637 = vcvt.s32.f32 %v1381
    %v1638 = vcvt.s32.f32 %v1382
    %v1639 = vcvt.s32.f32 %v1383
    %v1640 = vcvt.s32.f32 %v1384
    %v1641 = vcvt.s32.f32 %v1385
    %v1642 = vpack.c.bf16 %v1390, %v1386
    %v1643 = vpack.c.bf16 %v1391, %v1387
    %v1644 = vpack.c.bf16 %v1392, %v1388
    %v1645 = vpack.c.bf16 %v1393, %v1389
    %v1646 = vpack.c.bf16 %v1398, %v1394
    %v1647 = vpack.c.bf16 %v1399, %v1395
    %v1648 = vpack.c.bf16 %v1400, %v1396
    %v1649 = vpack.c.bf16 %v1401, %v1397
    %v1650 = vpack.c.bf16 %v1406, %v1402
    %v1651 = vpack.c.bf16 %v1407, %v1403
    %v1652 = vpack.c.bf16 %v1408, %v1404
    %v1653 = vpack.c.bf16 %v1409, %v1405
    %v1654 = vpack.c.bf16 %v1414, %v1410
    %v1655 = vpack.c.bf16 %v1415, %v1411
    %v1656 = vpack.c.bf16 %v1416, %v1412
    %v1657 = vpack.c.bf16 %v1417, %v1413
    %v1658 = vpack.c.bf16 %v1422, %v1418
    %v1659 = vpack.c.bf16 %v1423, %v1419
    %v1660 = vpack.c.bf16 %v1424, %v1420
    %v1661 = vpack.c.bf16 %v1425, %v1421
    %v1662 = vpack.c.bf16 %v1430, %v1426
    %v1663 = vpack.c.bf16 %v1431, %v1427
    %v1664 = vpack.c.bf16 %v1432, %v1428
    %v1665 = vpack.c.bf16 %v1433, %v1429
    %v1666 = vpack.c.bf16 %v1438, %v1434
    %v1667 = vpack.c.bf16 %v1439, %v1435
    %v1668 = vpack.c.bf16 %v1440, %v1436
    %v1669 = vpack.c.bf16 %v1441, %v1437
    %v1670 = vpack.c.bf16 %v1446, %v1442
    %v1671 = vpack.c.bf16 %v1447, %v1443
    %v1672 = vpack.c.bf16 %v1448, %v1444
    %v1673 = vpack.c.bf16 %v1449, %v1445
    %v1674 = vpack.c.bf16 %v1454, %v1450
    %v1675 = vpack.c.bf16 %v1455, %v1451
    %v1676 = vpack.c.bf16 %v1456, %v1452
    %v1677 = vpack.c.bf16 %v1457, %v1453
    %v1678 = vpack.c.bf16 %v1462, %v1458
    %v1679 = vpack.c.bf16 %v1463, %v1459
    %v1680 = vpack.c.bf16 %v1464, %v1460
    %v1681 = vpack.c.bf16 %v1465, %v1461
    %v1682 = vpack.c.bf16 %v1470, %v1466
    %v1683 = vpack.c.bf16 %v1471, %v1467
    %v1684 = vpack.c.bf16 %v1472, %v1468
    %v1685 = vpack.c.bf16 %v1473, %v1469
    %v1686 = vpack.c.bf16 %v1478, %v1474
    %v1687 = vpack.c.bf16 %v1479, %v1475
    %v1688 = vpack.c.bf16 %v1480, %v1476
    %v1689 = vpack.c.bf16 %v1481, %v1477
    %v1690 = vpack.c.bf16 %v1486, %v1482
    %v1691 = vpack.c.bf16 %v1487, %v1483
    %v1692 = vpack.c.bf16 %v1488, %v1484
    %v1693 = vpack.c.bf16 %v1489, %v1485
    %v1694 = vpack.c.bf16 %v1494, %v1490
    %v1695 = vpack.c.bf16 %v1495, %v1491
    %v1696 = vpack.c.bf16 %v1496, %v1492
    %v1697 = vpack.c.bf16 %v1497, %v1493
    %v1698 = vpack.c.bf16 %v1502, %v1498
    %v1699 = vpack.c.bf16 %v1503, %v1499
    %v1700 = vpack.c.bf16 %v1504, %v1500
    %v1701 = vpack.c.bf16 %v1505, %v1501
    %v1702 = vpack.c.bf16 %v1510, %v1506
    %v1703 = vpack.c.bf16 %v1511, %v1507
    %v1704 = vpack.c.bf16 %v1512, %v1508
    %v1705 = vpack.c.bf16 %v1513, %v1509
    %v1706 = vpack.c.bf16 %v1518, %v1514
    %v1707 = vpack.c.bf16 %v1519, %v1515
    %v1708 = vpack.c.bf16 %v1520, %v1516
    %v1709 = vpack.c.bf16 %v1521, %v1517
    %v1710 = vpack.c.bf16 %v1526, %v1522
    %v1711 = vpack.c.bf16 %v1527, %v1523
    %v1712 = vpack.c.bf16 %v1528, %v1524
    %v1713 = vpack.c.bf16 %v1529, %v1525
    %v1714 = vpack.c.bf16 %v1534, %v1530
    %v1715 = vpack.c.bf16 %v1535, %v1531
    %v1716 = vpack.c.bf16 %v1536, %v1532
    %v1717 = vpack.c.bf16 %v1537, %v1533
    %v1718 = vpack.c.bf16 %v1542, %v1538
    %v1719 = vpack.c.bf16 %v1543, %v1539
    %v1720 = vpack.c.bf16 %v1544, %v1540
    %v1721 = vpack.c.bf16 %v1545, %v1541
    %v1722 = vpack.c.bf16 %v1550, %v1546
    %v1723 = vpack.c.bf16 %v1551, %v1547
    %v1724 = vpack.c.bf16 %v1552, %v1548
    %v1725 = vpack.c.bf16 %v1553, %v1549
    %v1726 = vpack.c.bf16 %v1558, %v1554
    %v1727 = vpack.c.bf16 %v1559, %v1555
    %v1728 = vpack.c.bf16 %v1560, %v1556
    %v1729 = vpack.c.bf16 %v1561, %v1557
    %v1730 = vpack.c.bf16 %v1566, %v1562
    %v1731 = vpack.c.bf16 %v1567, %v1563
    %v1732 = vpack.c.bf16 %v1568, %v1564
    %v1733 = vpack.c.bf16 %v1569, %v1565
    %v1734 = vpack.c.bf16 %v1574, %v1570
    %v1735 = vpack.c.bf16 %v1575, %v1571
    %v1736 = vpack.c.bf16 %v1576, %v1572
    %v1737 = vpack.c.bf16 %v1577, %v1573
    %v1738 = vpack.c.bf16 %v1582, %v1578
    %v1739 = vpack.c.bf16 %v1583, %v1579
    %v1740 = vpack.c.bf16 %v1584, %v1580
    %v1741 = vpack.c.bf16 %v1585, %v1581
    %v1742 = vpack.c.bf16 %v1590, %v1586
    %v1743 = vpack.c.bf16 %v1591, %v1587
    %v1744 = vpack.c.bf16 %v1592, %v1588
    %v1745 = vpack.c.bf16 %v1593, %v1589
    %v1746 = vpack.c.bf16 %v1598, %v1594
    %v1747 = vpack.c.bf16 %v1599, %v1595
    %v1748 = vpack.c.bf16 %v1600, %v1596
    %v1749 = vpack.c.bf16 %v1601, %v1597
    %v1750 = vpack.c.bf16 %v1606, %v1602
    %v1751 = vpack.c.bf16 %v1607, %v1603
    %v1752 = vpack.c.bf16 %v1608, %v1604
    %v1753 = vpack.c.bf16 %v1609, %v1605
    %v1754 = vpack.c.bf16 %v1614, %v1610
    %v1755 = vpack.c.bf16 %v1615, %v1611
    %v1756 = vpack.c.bf16 %v1616, %v1612
    %v1757 = vpack.c.bf16 %v1617, %v1613
    %v1758 = vpack.c.bf16 %v1622, %v1618
    %v1759 = vpack.c.bf16 %v1623, %v1619
    %v1760 = vpack.c.bf16 %v1624, %v1620
    %v1761 = vpack.c.bf16 %v1625, %v1621
    %v1762 = vpack.c.bf16 %v1630, %v1626
    %v1763 = vpack.c.bf16 %v1631, %v1627
    %v1764 = vpack.c.bf16 %v1632, %v1628
    %v1765 = vpack.c.bf16 %v1633, %v1629
    %v1766 = vpack.c.bf16 %v1638, %v1634
    %v1767 = vpack.c.bf16 %v1639, %v1635
    %v1768 = vpack.c.bf16 %v1640, %v1636
    %v1769 = vpack.c.bf16 %v1641, %v1637
    %v1770 = vld [vmem:[#allocation2] sm:$0xff]
    %v1771 = vld [vmem:[#allocation2 + $0x8] sm:$0xff]
    %v1772 = vld [vmem:[#allocation2 + $0x10] sm:$0xff]
    %v1773 = vld [vmem:[#allocation2 + $0x18] sm:$0xff]
    %v1774 = vld [vmem:[#allocation2 + $0x20] sm:$0xff]
    %v1775 = vld [vmem:[#allocation2 + $0x28] sm:$0xff]
    %v1776 = vld [vmem:[#allocation2 + $0x30] sm:$0xff]
    %v1777 = vld [vmem:[#allocation2 + $0x38] sm:$0xff]
    %v1778 = vld [vmem:[#allocation2 + $0x40] sm:$0xff]
    %v1779 = vld [vmem:[#allocation2 + $0x48] sm:$0xff]
    %v1780 = vld [vmem:[#allocation2 + $0x50] sm:$0xff]
    %v1781 = vld [vmem:[#allocation2 + $0x58] sm:$0xff]
    %v1782 = vld [vmem:[#allocation2 + $0x60] sm:$0xff]
    %v1783 = vld [vmem:[#allocation2 + $0x68] sm:$0xff]
    %v1784 = vld [vmem:[#allocation2 + $0x70] sm:$0xff]
    %v1785 = vld [vmem:[#allocation2 + $0x78] sm:$0xff]
    %v1786 = vld [vmem:[#allocation2 + $0x80] sm:$0xff]
    %v1787 = vld [vmem:[#allocation2 + $0x88] sm:$0xff]
    %v1788 = vld [vmem:[#allocation2 + $0x90] sm:$0xff]
    %v1789 = vld [vmem:[#allocation2 + $0x98] sm:$0xff]
    %v1790 = vld [vmem:[#allocation2 + $0xa0] sm:$0xff]
    %v1791 = vld [vmem:[#allocation2 + $0xa8] sm:$0xff]
    %v1792 = vld [vmem:[#allocation2 + $0xb0] sm:$0xff]
    %v1793 = vld [vmem:[#allocation2 + $0xb8] sm:$0xff]
    %v1794 = vld [vmem:[#allocation2 + $0xc0] sm:$0xff]
    %v1795 = vld [vmem:[#allocation2 + $0xc8] sm:$0xff]
    %v1796 = vld [vmem:[#allocation2 + $0xd0] sm:$0xff]
    %v1797 = vld [vmem:[#allocation2 + $0xd8] sm:$0xff]
    %v1798 = vld [vmem:[#allocation2 + $0xe0] sm:$0xff]
    %v1799 = vld [vmem:[#allocation2 + $0xe8] sm:$0xff]
    %v1800 = vld [vmem:[#allocation2 + $0xf0] sm:$0xff]
    %v1801 = vld [vmem:[#allocation2 + $0xf8] sm:$0xff]
    %v1802 = vld [vmem:[#allocation2 + $0x100] sm:$0xff]
    %v1803 = vld [vmem:[#allocation2 + $0x108] sm:$0xff]
    %v1804 = vld [vmem:[#allocation2 + $0x110] sm:$0xff]
    %v1805 = vld [vmem:[#allocation2 + $0x118] sm:$0xff]
    %v1806 = vld [vmem:[#allocation2 + $0x120] sm:$0xff]
    %v1807 = vld [vmem:[#allocation2 + $0x128] sm:$0xff]
    %v1808 = vld [vmem:[#allocation2 + $0x130] sm:$0xff]
    %v1809 = vld [vmem:[#allocation2 + $0x138] sm:$0xff]
    %v1810 = vld [vmem:[#allocation2 + $0x140] sm:$0xff]
    %v1811 = vld [vmem:[#allocation2 + $0x148] sm:$0xff]
    %v1812 = vld [vmem:[#allocation2 + $0x150] sm:$0xff]
    %v1813 = vld [vmem:[#allocation2 + $0x158] sm:$0xff]
    %v1814 = vld [vmem:[#allocation2 + $0x160] sm:$0xff]
    %v1815 = vld [vmem:[#allocation2 + $0x168] sm:$0xff]
    %v1816 = vld [vmem:[#allocation2 + $0x170] sm:$0xff]
    %v1817 = vld [vmem:[#allocation2 + $0x178] sm:$0xff]
    %v1818 = vld [vmem:[#allocation2 + $0x180] sm:$0xff]
    %v1819 = vld [vmem:[#allocation2 + $0x188] sm:$0xff]
    %v1820 = vld [vmem:[#allocation2 + $0x190] sm:$0xff]
    %v1821 = vld [vmem:[#allocation2 + $0x198] sm:$0xff]
    %v1822 = vld [vmem:[#allocation2 + $0x1a0] sm:$0xff]
    %v1823 = vld [vmem:[#allocation2 + $0x1a8] sm:$0xff]
    %v1824 = vld [vmem:[#allocation2 + $0x1b0] sm:$0xff]
    %v1825 = vld [vmem:[#allocation2 + $0x1b8] sm:$0xff]
    %v1826 = vld [vmem:[#allocation2 + $0x1c0] sm:$0xff]
    %v1827 = vld [vmem:[#allocation2 + $0x1c8] sm:$0xff]
    %v1828 = vld [vmem:[#allocation2 + $0x1d0] sm:$0xff]
    %v1829 = vld [vmem:[#allocation2 + $0x1d8] sm:$0xff]
    %v1830 = vld [vmem:[#allocation2 + $0x1e0] sm:$0xff]
    %v1831 = vld [vmem:[#allocation2 + $0x1e8] sm:$0xff]
    %v1832 = vld [vmem:[#allocation2 + $0x1f0] sm:$0xff]
    %v1833 = vld [vmem:[#allocation2 + $0x1f8] sm:$0xff]
    %1834 = vmatpush.bf16.msra.mxu0 %v1041
    %1835 = vmatpush.bf16.msra.mxu0 %v1040
    %1836 = vmatpush.bf16.msra.mxu0 %v1039
    %1837 = vmatpush.bf16.msra.mxu0 %v1038
    %1838 = vmatpush.bf16.msra.mxu0 %v1037
    %1839 = vmatpush.bf16.msra.mxu0 %v1036
    %1840 = vmatpush.bf16.msra.mxu0 %v1035
    %1841 = vmatpush.bf16.msra.mxu0 %v1034
    %1842 = vmatmul.bf16.gmra.mxu0 %v1642
    %v1843 = vpop.f32.mrf.mxu0
    %v1844 = vadd.f32 0.0, %v1843
    %v1845 = vpop.f32.mrf.mxu0
    %v1846 = vadd.f32 0.0, %v1845
    %1847 = vmatmul.bf16.gmra.mxu0 %v1646
    %v1848 = vpop.f32.mrf.mxu0
    %v1849 = vadd.f32 0.0, %v1848
    %v1850 = vpop.f32.mrf.mxu0
    %v1851 = vadd.f32 0.0, %v1850
    %1852 = vmatmul.bf16.gmra.mxu0 %v1650
    %v1853 = vpop.f32.mrf.mxu0
    %v1854 = vadd.f32 0.0, %v1853
    %v1855 = vpop.f32.mrf.mxu0
    %v1856 = vadd.f32 0.0, %v1855
    %1857 = vmatmul.bf16.gmra.mxu0 %v1654
    %v1858 = vpop.f32.mrf.mxu0
    %v1859 = vadd.f32 0.0, %v1858
    %v1860 = vpop.f32.mrf.mxu0
    %v1861 = vadd.f32 0.0, %v1860
    %1862 = vmatmul.bf16.gmra.mxu0 %v1658
    %v1863 = vpop.f32.mrf.mxu0
    %v1864 = vadd.f32 0.0, %v1863
    %v1865 = vpop.f32.mrf.mxu0
    %v1866 = vadd.f32 0.0, %v1865
    %1867 = vmatmul.bf16.gmra.mxu0 %v1662
    %v1868 = vpop.f32.mrf.mxu0
    %v1869 = vadd.f32 0.0, %v1868
    %v1870 = vpop.f32.mrf.mxu0
    %v1871 = vadd.f32 0.0, %v1870
    %1872 = vmatmul.bf16.gmra.mxu0 %v1666
    %v1873 = vpop.f32.mrf.mxu0
    %v1874 = vadd.f32 0.0, %v1873
    %v1875 = vpop.f32.mrf.mxu0
    %v1876 = vadd.f32 0.0, %v1875
    %1877 = vmatmul.bf16.gmra.mxu0 %v1670
    %v1878 = vpop.f32.mrf.mxu0
    %v1879 = vadd.f32 0.0, %v1878
    %v1880 = vpop.f32.mrf.mxu0
    %v1881 = vadd.f32 0.0, %v1880
    %1882 = vmatmul.bf16.gmra.mxu0 %v1674
    %v1883 = vpop.f32.mrf.mxu0
    %v1884 = vadd.f32 0.0, %v1883
    %v1885 = vpop.f32.mrf.mxu0
    %v1886 = vadd.f32 0.0, %v1885
    %1887 = vmatmul.bf16.gmra.mxu0 %v1678
    %v1888 = vpop.f32.mrf.mxu0
    %v1889 = vadd.f32 0.0, %v1888
    %v1890 = vpop.f32.mrf.mxu0
    %v1891 = vadd.f32 0.0, %v1890
    %1892 = vmatmul.bf16.gmra.mxu0 %v1682
    %v1893 = vpop.f32.mrf.mxu0
    %v1894 = vadd.f32 0.0, %v1893
    %v1895 = vpop.f32.mrf.mxu0
    %v1896 = vadd.f32 0.0, %v1895
    %1897 = vmatmul.bf16.gmra.mxu0 %v1686
    %v1898 = vpop.f32.mrf.mxu0
    %v1899 = vadd.f32 0.0, %v1898
    %v1900 = vpop.f32.mrf.mxu0
    %v1901 = vadd.f32 0.0, %v1900
    %1902 = vmatmul.bf16.gmra.mxu0 %v1690
    %v1903 = vpop.f32.mrf.mxu0
    %v1904 = vadd.f32 0.0, %v1903
    %v1905 = vpop.f32.mrf.mxu0
    %v1906 = vadd.f32 0.0, %v1905
    %1907 = vmatmul.bf16.gmra.mxu0 %v1694
    %v1908 = vpop.f32.mrf.mxu0
    %v1909 = vadd.f32 0.0, %v1908
    %v1910 = vpop.f32.mrf.mxu0
    %v1911 = vadd.f32 0.0, %v1910
    %1912 = vmatmul.bf16.gmra.mxu0 %v1698
    %v1913 = vpop.f32.mrf.mxu0
    %v1914 = vadd.f32 0.0, %v1913
    %v1915 = vpop.f32.mrf.mxu0
    %v1916 = vadd.f32 0.0, %v1915
    %1917 = vmatmul.bf16.gmra.mxu0 %v1702
    %v1918 = vpop.f32.mrf.mxu0
    %v1919 = vadd.f32 0.0, %v1918
    %v1920 = vpop.f32.mrf.mxu0
    %v1921 = vadd.f32 0.0, %v1920
    %1922 = vmatmul.bf16.gmra.mxu0 %v1706
    %v1923 = vpop.f32.mrf.mxu0
    %v1924 = vadd.f32 0.0, %v1923
    %v1925 = vpop.f32.mrf.mxu0
    %v1926 = vadd.f32 0.0, %v1925
    %1927 = vmatmul.bf16.gmra.mxu0 %v1710
    %v1928 = vpop.f32.mrf.mxu0
    %v1929 = vadd.f32 0.0, %v1928
    %v1930 = vpop.f32.mrf.mxu0
    %v1931 = vadd.f32 0.0, %v1930
    %1932 = vmatmul.bf16.gmra.mxu0 %v1714
    %v1933 = vpop.f32.mrf.mxu0
    %v1934 = vadd.f32 0.0, %v1933
    %v1935 = vpop.f32.mrf.mxu0
    %v1936 = vadd.f32 0.0, %v1935
    %1937 = vmatmul.bf16.gmra.mxu0 %v1718
    %v1938 = vpop.f32.mrf.mxu0
    %v1939 = vadd.f32 0.0, %v1938
    %v1940 = vpop.f32.mrf.mxu0
    %v1941 = vadd.f32 0.0, %v1940
    %1942 = vmatmul.bf16.gmra.mxu0 %v1722
    %v1943 = vpop.f32.mrf.mxu0
    %v1944 = vadd.f32 0.0, %v1943
    %v1945 = vpop.f32.mrf.mxu0
    %v1946 = vadd.f32 0.0, %v1945
    %1947 = vmatmul.bf16.gmra.mxu0 %v1726
    %v1948 = vpop.f32.mrf.mxu0
    %v1949 = vadd.f32 0.0, %v1948
    %v1950 = vpop.f32.mrf.mxu0
    %v1951 = vadd.f32 0.0, %v1950
    %1952 = vmatmul.bf16.gmra.mxu0 %v1730
    %v1953 = vpop.f32.mrf.mxu0
    %v1954 = vadd.f32 0.0, %v1953
    %v1955 = vpop.f32.mrf.mxu0
    %v1956 = vadd.f32 0.0, %v1955
    %1957 = vmatmul.bf16.gmra.mxu0 %v1734
    %v1958 = vpop.f32.mrf.mxu0
    %v1959 = vadd.f32 0.0, %v1958
    %v1960 = vpop.f32.mrf.mxu0
    %v1961 = vadd.f32 0.0, %v1960
    %1962 = vmatmul.bf16.gmra.mxu0 %v1738
    %v1963 = vpop.f32.mrf.mxu0
    %v1964 = vadd.f32 0.0, %v1963
    %v1965 = vpop.f32.mrf.mxu0
    %v1966 = vadd.f32 0.0, %v1965
    %1967 = vmatmul.bf16.gmra.mxu0 %v1742
    %v1968 = vpop.f32.mrf.mxu0
    %v1969 = vadd.f32 0.0, %v1968
    %v1970 = vpop.f32.mrf.mxu0
    %v1971 = vadd.f32 0.0, %v1970
    %1972 = vmatmul.bf16.gmra.mxu0 %v1746
    %v1973 = vpop.f32.mrf.mxu0
    %v1974 = vadd.f32 0.0, %v1973
    %v1975 = vpop.f32.mrf.mxu0
    %v1976 = vadd.f32 0.0, %v1975
    %1977 = vmatmul.bf16.gmra.mxu0 %v1750
    %v1978 = vpop.f32.mrf.mxu0
    %v1979 = vadd.f32 0.0, %v1978
    %v1980 = vpop.f32.mrf.mxu0
    %v1981 = vadd.f32 0.0, %v1980
    %1982 = vmatmul.bf16.gmra.mxu0 %v1754
    %v1983 = vpop.f32.mrf.mxu0
    %v1984 = vadd.f32 0.0, %v1983
    %v1985 = vpop.f32.mrf.mxu0
    %v1986 = vadd.f32 0.0, %v1985
    %1987 = vmatmul.bf16.gmra.mxu0 %v1758
    %v1988 = vpop.f32.mrf.mxu0
    %v1989 = vadd.f32 0.0, %v1988
    %v1990 = vpop.f32.mrf.mxu0
    %v1991 = vadd.f32 0.0, %v1990
    %1992 = vmatmul.bf16.gmra.mxu0 %v1762
    %v1993 = vpop.f32.mrf.mxu0
    %v1994 = vadd.f32 0.0, %v1993
    %v1995 = vpop.f32.mrf.mxu0
    %v1996 = vadd.f32 0.0, %v1995
    %1997 = vmatmul.bf16.gmra.mxu0 %v1766
    %v1998 = vpop.f32.mrf.mxu0
    %v1999 = vadd.f32 0.0, %v1998
    %v2000 = vpop.f32.mrf.mxu0
    %v2001 = vadd.f32 0.0, %v2000
    %2002 = vdwg.mxu0
    %2003 = vmatpush.bf16.msra.mxu0 %v1049
    %2004 = vmatpush.bf16.msra.mxu0 %v1048
    %2005 = vmatpush.bf16.msra.mxu0 %v1047
    %2006 = vmatpush.bf16.msra.mxu0 %v1046
    %2007 = vmatpush.bf16.msra.mxu0 %v1045
    %2008 = vmatpush.bf16.msra.mxu0 %v1044
    %2009 = vmatpush.bf16.msra.mxu0 %v1043
    %2010 = vmatpush.bf16.msra.mxu0 %v1042
    %2011 = vmatmul.bf16.gmra.mxu0 %v1643
    %v2012 = vpop.f32.mrf.mxu0
    %v2013 = vadd.f32 %v1844, %v2012
    %v2014 = vpop.f32.mrf.mxu0
    %v2015 = vadd.f32 %v1846, %v2014
    %2016 = vmatmul.bf16.gmra.mxu0 %v1647
    %v2017 = vpop.f32.mrf.mxu0
    %v2018 = vadd.f32 %v1849, %v2017
    %v2019 = vpop.f32.mrf.mxu0
    %v2020 = vadd.f32 %v1851, %v2019
    %2021 = vmatmul.bf16.gmra.mxu0 %v1651
    %v2022 = vpop.f32.mrf.mxu0
    %v2023 = vadd.f32 %v1854, %v2022
    %v2024 = vpop.f32.mrf.mxu0
    %v2025 = vadd.f32 %v1856, %v2024
    %2026 = vmatmul.bf16.gmra.mxu0 %v1655
    %v2027 = vpop.f32.mrf.mxu0
    %v2028 = vadd.f32 %v1859, %v2027
    %v2029 = vpop.f32.mrf.mxu0
    %v2030 = vadd.f32 %v1861, %v2029
    %2031 = vmatmul.bf16.gmra.mxu0 %v1659
    %v2032 = vpop.f32.mrf.mxu0
    %v2033 = vadd.f32 %v1864, %v2032
    %v2034 = vpop.f32.mrf.mxu0
    %v2035 = vadd.f32 %v1866, %v2034
    %2036 = vmatmul.bf16.gmra.mxu0 %v1663
    %v2037 = vpop.f32.mrf.mxu0
    %v2038 = vadd.f32 %v1869, %v2037
    %v2039 = vpop.f32.mrf.mxu0
    %v2040 = vadd.f32 %v1871, %v2039
    %2041 = vmatmul.bf16.gmra.mxu0 %v1667
    %v2042 = vpop.f32.mrf.mxu0
    %v2043 = vadd.f32 %v1874, %v2042
    %v2044 = vpop.f32.mrf.mxu0
    %v2045 = vadd.f32 %v1876, %v2044
    %2046 = vmatmul.bf16.gmra.mxu0 %v1671
    %v2047 = vpop.f32.mrf.mxu0
    %v2048 = vadd.f32 %v1879, %v2047
    %v2049 = vpop.f32.mrf.mxu0
    %v2050 = vadd.f32 %v1881, %v2049
    %2051 = vmatmul.bf16.gmra.mxu0 %v1675
    %v2052 = vpop.f32.mrf.mxu0
    %v2053 = vadd.f32 %v1884, %v2052
    %v2054 = vpop.f32.mrf.mxu0
    %v2055 = vadd.f32 %v1886, %v2054
    %2056 = vmatmul.bf16.gmra.mxu0 %v1679
    %v2057 = vpop.f32.mrf.mxu0
    %v2058 = vadd.f32 %v1889, %v2057
    %v2059 = vpop.f32.mrf.mxu0
    %v2060 = vadd.f32 %v1891, %v2059
    %2061 = vmatmul.bf16.gmra.mxu0 %v1683
    %v2062 = vpop.f32.mrf.mxu0
    %v2063 = vadd.f32 %v1894, %v2062
    %v2064 = vpop.f32.mrf.mxu0
    %v2065 = vadd.f32 %v1896, %v2064
    %2066 = vmatmul.bf16.gmra.mxu0 %v1687
    %v2067 = vpop.f32.mrf.mxu0
    %v2068 = vadd.f32 %v1899, %v2067
    %v2069 = vpop.f32.mrf.mxu0
    %v2070 = vadd.f32 %v1901, %v2069
    %2071 = vmatmul.bf16.gmra.mxu0 %v1691
    %v2072 = vpop.f32.mrf.mxu0
    %v2073 = vadd.f32 %v1904, %v2072
    %v2074 = vpop.f32.mrf.mxu0
    %v2075 = vadd.f32 %v1906, %v2074
    %2076 = vmatmul.bf16.gmra.mxu0 %v1695
    %v2077 = vpop.f32.mrf.mxu0
    %v2078 = vadd.f32 %v1909, %v2077
    %v2079 = vpop.f32.mrf.mxu0
    %v2080 = vadd.f32 %v1911, %v2079
    %2081 = vmatmul.bf16.gmra.mxu0 %v1699
    %v2082 = vpop.f32.mrf.mxu0
    %v2083 = vadd.f32 %v1914, %v2082
    %v2084 = vpop.f32.mrf.mxu0
    %v2085 = vadd.f32 %v1916, %v2084
    %2086 = vmatmul.bf16.gmra.mxu0 %v1703
    %v2087 = vpop.f32.mrf.mxu0
    %v2088 = vadd.f32 %v1919, %v2087
    %v2089 = vpop.f32.mrf.mxu0
    %v2090 = vadd.f32 %v1921, %v2089
    %2091 = vmatmul.bf16.gmra.mxu0 %v1707
    %v2092 = vpop.f32.mrf.mxu0
    %v2093 = vadd.f32 %v1924, %v2092
    %v2094 = vpop.f32.mrf.mxu0
    %v2095 = vadd.f32 %v1926, %v2094
    %2096 = vmatmul.bf16.gmra.mxu0 %v1711
    %v2097 = vpop.f32.mrf.mxu0
    %v2098 = vadd.f32 %v1929, %v2097
    %v2099 = vpop.f32.mrf.mxu0
    %v2100 = vadd.f32 %v1931, %v2099
    %2101 = vmatmul.bf16.gmra.mxu0 %v1715
    %v2102 = vpop.f32.mrf.mxu0
    %v2103 = vadd.f32 %v1934, %v2102
    %v2104 = vpop.f32.mrf.mxu0
    %v2105 = vadd.f32 %v1936, %v2104
    %2106 = vmatmul.bf16.gmra.mxu0 %v1719
    %v2107 = vpop.f32.mrf.mxu0
    %v2108 = vadd.f32 %v1939, %v2107
    %v2109 = vpop.f32.mrf.mxu0
    %v2110 = vadd.f32 %v1941, %v2109
    %2111 = vmatmul.bf16.gmra.mxu0 %v1723
    %v2112 = vpop.f32.mrf.mxu0
    %v2113 = vadd.f32 %v1944, %v2112
    %v2114 = vpop.f32.mrf.mxu0
    %v2115 = vadd.f32 %v1946, %v2114
    %2116 = vmatmul.bf16.gmra.mxu0 %v1727
    %v2117 = vpop.f32.mrf.mxu0
    %v2118 = vadd.f32 %v1949, %v2117
    %v2119 = vpop.f32.mrf.mxu0
    %v2120 = vadd.f32 %v1951, %v2119
    %2121 = vmatmul.bf16.gmra.mxu0 %v1731
    %v2122 = vpop.f32.mrf.mxu0
    %v2123 = vadd.f32 %v1954, %v2122
    %v2124 = vpop.f32.mrf.mxu0
    %v2125 = vadd.f32 %v1956, %v2124
    %2126 = vmatmul.bf16.gmra.mxu0 %v1735
    %v2127 = vpop.f32.mrf.mxu0
    %v2128 = vadd.f32 %v1959, %v2127
    %v2129 = vpop.f32.mrf.mxu0
    %v2130 = vadd.f32 %v1961, %v2129
    %2131 = vmatmul.bf16.gmra.mxu0 %v1739
    %v2132 = vpop.f32.mrf.mxu0
    %v2133 = vadd.f32 %v1964, %v2132
    %v2134 = vpop.f32.mrf.mxu0
    %v2135 = vadd.f32 %v1966, %v2134
    %2136 = vmatmul.bf16.gmra.mxu0 %v1743
    %v2137 = vpop.f32.mrf.mxu0
    %v2138 = vadd.f32 %v1969, %v2137
    %v2139 = vpop.f32.mrf.mxu0
    %v2140 = vadd.f32 %v1971, %v2139
    %2141 = vmatmul.bf16.gmra.mxu0 %v1747
    %v2142 = vpop.f32.mrf.mxu0
    %v2143 = vadd.f32 %v1974, %v2142
    %v2144 = vpop.f32.mrf.mxu0
    %v2145 = vadd.f32 %v1976, %v2144
    %2146 = vmatmul.bf16.gmra.mxu0 %v1751
    %v2147 = vpop.f32.mrf.mxu0
    %v2148 = vadd.f32 %v1979, %v2147
    %v2149 = vpop.f32.mrf.mxu0
    %v2150 = vadd.f32 %v1981, %v2149
    %2151 = vmatmul.bf16.gmra.mxu0 %v1755
    %v2152 = vpop.f32.mrf.mxu0
    %v2153 = vadd.f32 %v1984, %v2152
    %v2154 = vpop.f32.mrf.mxu0
    %v2155 = vadd.f32 %v1986, %v2154
    %2156 = vmatmul.bf16.gmra.mxu0 %v1759
    %v2157 = vpop.f32.mrf.mxu0
    %v2158 = vadd.f32 %v1989, %v2157
    %v2159 = vpop.f32.mrf.mxu0
    %v2160 = vadd.f32 %v1991, %v2159
    %2161 = vmatmul.bf16.gmra.mxu0 %v1763
    %v2162 = vpop.f32.mrf.mxu0
    %v2163 = vadd.f32 %v1994, %v2162
    %v2164 = vpop.f32.mrf.mxu0
    %v2165 = vadd.f32 %v1996, %v2164
    %2166 = vmatmul.bf16.gmra.mxu0 %v1767
    %v2167 = vpop.f32.mrf.mxu0
    %v2168 = vadd.f32 %v1999, %v2167
    %v2169 = vpop.f32.mrf.mxu0
    %v2170 = vadd.f32 %v2001, %v2169
    %2171 = vdwg.mxu0
    %2172 = vmatpush.bf16.msra.mxu0 %v1057
    %2173 = vmatpush.bf16.msra.mxu0 %v1056
    %2174 = vmatpush.bf16.msra.mxu0 %v1055
    %2175 = vmatpush.bf16.msra.mxu0 %v1054
    %2176 = vmatpush.bf16.msra.mxu0 %v1053
    %2177 = vmatpush.bf16.msra.mxu0 %v1052
    %2178 = vmatpush.bf16.msra.mxu0 %v1051
    %2179 = vmatpush.bf16.msra.mxu0 %v1050
    %2180 = vmatmul.bf16.gmra.mxu0 %v1644
    %v2181 = vpop.f32.mrf.mxu0
    %v2182 = vadd.f32 %v2013, %v2181
    %v2183 = vpop.f32.mrf.mxu0
    %v2184 = vadd.f32 %v2015, %v2183
    %2185 = vmatmul.bf16.gmra.mxu0 %v1648
    %v2186 = vpop.f32.mrf.mxu0
    %v2187 = vadd.f32 %v2018, %v2186
    %v2188 = vpop.f32.mrf.mxu0
    %v2189 = vadd.f32 %v2020, %v2188
    %2190 = vmatmul.bf16.gmra.mxu0 %v1652
    %v2191 = vpop.f32.mrf.mxu0
    %v2192 = vadd.f32 %v2023, %v2191
    %v2193 = vpop.f32.mrf.mxu0
    %v2194 = vadd.f32 %v2025, %v2193
    %2195 = vmatmul.bf16.gmra.mxu0 %v1656
    %v2196 = vpop.f32.mrf.mxu0
    %v2197 = vadd.f32 %v2028, %v2196
    %v2198 = vpop.f32.mrf.mxu0
    %v2199 = vadd.f32 %v2030, %v2198
    %2200 = vmatmul.bf16.gmra.mxu0 %v1660
    %v2201 = vpop.f32.mrf.mxu0
    %v2202 = vadd.f32 %v2033, %v2201
    %v2203 = vpop.f32.mrf.mxu0
    %v2204 = vadd.f32 %v2035, %v2203
    %2205 = vmatmul.bf16.gmra.mxu0 %v1664
    %v2206 = vpop.f32.mrf.mxu0
    %v2207 = vadd.f32 %v2038, %v2206
    %v2208 = vpop.f32.mrf.mxu0
    %v2209 = vadd.f32 %v2040, %v2208
    %2210 = vmatmul.bf16.gmra.mxu0 %v1668
    %v2211 = vpop.f32.mrf.mxu0
    %v2212 = vadd.f32 %v2043, %v2211
    %v2213 = vpop.f32.mrf.mxu0
    %v2214 = vadd.f32 %v2045, %v2213
    %2215 = vmatmul.bf16.gmra.mxu0 %v1672
    %v2216 = vpop.f32.mrf.mxu0
    %v2217 = vadd.f32 %v2048, %v2216
    %v2218 = vpop.f32.mrf.mxu0
    %v2219 = vadd.f32 %v2050, %v2218
    %2220 = vmatmul.bf16.gmra.mxu0 %v1676
    %v2221 = vpop.f32.mrf.mxu0
    %v2222 = vadd.f32 %v2053, %v2221
    %v2223 = vpop.f32.mrf.mxu0
    %v2224 = vadd.f32 %v2055, %v2223
    %2225 = vmatmul.bf16.gmra.mxu0 %v1680
    %v2226 = vpop.f32.mrf.mxu0
    %v2227 = vadd.f32 %v2058, %v2226
    %v2228 = vpop.f32.mrf.mxu0
    %v2229 = vadd.f32 %v2060, %v2228
    %2230 = vmatmul.bf16.gmra.mxu0 %v1684
    %v2231 = vpop.f32.mrf.mxu0
    %v2232 = vadd.f32 %v2063, %v2231
    %v2233 = vpop.f32.mrf.mxu0
    %v2234 = vadd.f32 %v2065, %v2233
    %2235 = vmatmul.bf16.gmra.mxu0 %v1688
    %v2236 = vpop.f32.mrf.mxu0
    %v2237 = vadd.f32 %v2068, %v2236
    %v2238 = vpop.f32.mrf.mxu0
    %v2239 = vadd.f32 %v2070, %v2238
    %2240 = vmatmul.bf16.gmra.mxu0 %v1692
    %v2241 = vpop.f32.mrf.mxu0
    %v2242 = vadd.f32 %v2073, %v2241
    %v2243 = vpop.f32.mrf.mxu0
    %v2244 = vadd.f32 %v2075, %v2243
    %2245 = vmatmul.bf16.gmra.mxu0 %v1696
    %v2246 = vpop.f32.mrf.mxu0
    %v2247 = vadd.f32 %v2078, %v2246
    %v2248 = vpop.f32.mrf.mxu0
    %v2249 = vadd.f32 %v2080, %v2248
    %2250 = vmatmul.bf16.gmra.mxu0 %v1700
    %v2251 = vpop.f32.mrf.mxu0
    %v2252 = vadd.f32 %v2083, %v2251
    %v2253 = vpop.f32.mrf.mxu0
    %v2254 = vadd.f32 %v2085, %v2253
    %2255 = vmatmul.bf16.gmra.mxu0 %v1704
    %v2256 = vpop.f32.mrf.mxu0
    %v2257 = vadd.f32 %v2088, %v2256
    %v2258 = vpop.f32.mrf.mxu0
    %v2259 = vadd.f32 %v2090, %v2258
    %2260 = vmatmul.bf16.gmra.mxu0 %v1708
    %v2261 = vpop.f32.mrf.mxu0
    %v2262 = vadd.f32 %v2093, %v2261
    %v2263 = vpop.f32.mrf.mxu0
    %v2264 = vadd.f32 %v2095, %v2263
    %2265 = vmatmul.bf16.gmra.mxu0 %v1712
    %v2266 = vpop.f32.mrf.mxu0
    %v2267 = vadd.f32 %v2098, %v2266
    %v2268 = vpop.f32.mrf.mxu0
    %v2269 = vadd.f32 %v2100, %v2268
    %2270 = vmatmul.bf16.gmra.mxu0 %v1716
    %v2271 = vpop.f32.mrf.mxu0
    %v2272 = vadd.f32 %v2103, %v2271
    %v2273 = vpop.f32.mrf.mxu0
    %v2274 = vadd.f32 %v2105, %v2273
    %2275 = vmatmul.bf16.gmra.mxu0 %v1720
    %v2276 = vpop.f32.mrf.mxu0
    %v2277 = vadd.f32 %v2108, %v2276
    %v2278 = vpop.f32.mrf.mxu0
    %v2279 = vadd.f32 %v2110, %v2278
    %2280 = vmatmul.bf16.gmra.mxu0 %v1724
    %v2281 = vpop.f32.mrf.mxu0
    %v2282 = vadd.f32 %v2113, %v2281
    %v2283 = vpop.f32.mrf.mxu0
    %v2284 = vadd.f32 %v2115, %v2283
    %2285 = vmatmul.bf16.gmra.mxu0 %v1728
    %v2286 = vpop.f32.mrf.mxu0
    %v2287 = vadd.f32 %v2118, %v2286
    %v2288 = vpop.f32.mrf.mxu0
    %v2289 = vadd.f32 %v2120, %v2288
    %2290 = vmatmul.bf16.gmra.mxu0 %v1732
    %v2291 = vpop.f32.mrf.mxu0
    %v2292 = vadd.f32 %v2123, %v2291
    %v2293 = vpop.f32.mrf.mxu0
    %v2294 = vadd.f32 %v2125, %v2293
    %2295 = vmatmul.bf16.gmra.mxu0 %v1736
    %v2296 = vpop.f32.mrf.mxu0
    %v2297 = vadd.f32 %v2128, %v2296
    %v2298 = vpop.f32.mrf.mxu0
    %v2299 = vadd.f32 %v2130, %v2298
    %2300 = vmatmul.bf16.gmra.mxu0 %v1740
    %v2301 = vpop.f32.mrf.mxu0
    %v2302 = vadd.f32 %v2133, %v2301
    %v2303 = vpop.f32.mrf.mxu0
    %v2304 = vadd.f32 %v2135, %v2303
    %2305 = vmatmul.bf16.gmra.mxu0 %v1744
    %v2306 = vpop.f32.mrf.mxu0
    %v2307 = vadd.f32 %v2138, %v2306
    %v2308 = vpop.f32.mrf.mxu0
    %v2309 = vadd.f32 %v2140, %v2308
    %2310 = vmatmul.bf16.gmra.mxu0 %v1748
    %v2311 = vpop.f32.mrf.mxu0
    %v2312 = vadd.f32 %v2143, %v2311
    %v2313 = vpop.f32.mrf.mxu0
    %v2314 = vadd.f32 %v2145, %v2313
    %2315 = vmatmul.bf16.gmra.mxu0 %v1752
    %v2316 = vpop.f32.mrf.mxu0
    %v2317 = vadd.f32 %v2148, %v2316
    %v2318 = vpop.f32.mrf.mxu0
    %v2319 = vadd.f32 %v2150, %v2318
    %2320 = vmatmul.bf16.gmra.mxu0 %v1756
    %v2321 = vpop.f32.mrf.mxu0
    %v2322 = vadd.f32 %v2153, %v2321
    %v2323 = vpop.f32.mrf.mxu0
    %v2324 = vadd.f32 %v2155, %v2323
    %2325 = vmatmul.bf16.gmra.mxu0 %v1760
    %v2326 = vpop.f32.mrf.mxu0
    %v2327 = vadd.f32 %v2158, %v2326
    %v2328 = vpop.f32.mrf.mxu0
    %v2329 = vadd.f32 %v2160, %v2328
    %2330 = vmatmul.bf16.gmra.mxu0 %v1764
    %v2331 = vpop.f32.mrf.mxu0
    %v2332 = vadd.f32 %v2163, %v2331
    %v2333 = vpop.f32.mrf.mxu0
    %v2334 = vadd.f32 %v2165, %v2333
    %2335 = vmatmul.bf16.gmra.mxu0 %v1768
    %v2336 = vpop.f32.mrf.mxu0
    %v2337 = vadd.f32 %v2168, %v2336
    %v2338 = vpop.f32.mrf.mxu0
    %v2339 = vadd.f32 %v2170, %v2338
    %2340 = vdwg.mxu0
    %2341 = vmatpush.bf16.msra.mxu0 %v1065
    %2342 = vmatpush.bf16.msra.mxu0 %v1064
    %2343 = vmatpush.bf16.msra.mxu0 %v1063
    %2344 = vmatpush.bf16.msra.mxu0 %v1062
    %2345 = vmatpush.bf16.msra.mxu0 %v1061
    %2346 = vmatpush.bf16.msra.mxu0 %v1060
    %2347 = vmatpush.bf16.msra.mxu0 %v1059
    %2348 = vmatpush.bf16.msra.mxu0 %v1058
    %2349 = vmatmul.bf16.gmra.mxu0 %v1645
    %v2350 = vpop.f32.mrf.mxu0
    %v2351 = vadd.f32 %v2182, %v2350
    %v2352 = vpop.f32.mrf.mxu0
    %v2353 = vadd.f32 %v2184, %v2352
    %2354 = vmatmul.bf16.gmra.mxu0 %v1649
    %v2355 = vpop.f32.mrf.mxu0
    %v2356 = vadd.f32 %v2187, %v2355
    %v2357 = vpop.f32.mrf.mxu0
    %v2358 = vadd.f32 %v2189, %v2357
    %2359 = vmatmul.bf16.gmra.mxu0 %v1653
    %v2360 = vpop.f32.mrf.mxu0
    %v2361 = vadd.f32 %v2192, %v2360
    %v2362 = vpop.f32.mrf.mxu0
    %v2363 = vadd.f32 %v2194, %v2362
    %2364 = vmatmul.bf16.gmra.mxu0 %v1657
    %v2365 = vpop.f32.mrf.mxu0
    %v2366 = vadd.f32 %v2197, %v2365
    %v2367 = vpop.f32.mrf.mxu0
    %v2368 = vadd.f32 %v2199, %v2367
    %2369 = vmatmul.bf16.gmra.mxu0 %v1661
    %v2370 = vpop.f32.mrf.mxu0
    %v2371 = vadd.f32 %v2202, %v2370
    %v2372 = vpop.f32.mrf.mxu0
    %v2373 = vadd.f32 %v2204, %v2372
    %2374 = vmatmul.bf16.gmra.mxu0 %v1665
    %v2375 = vpop.f32.mrf.mxu0
    %v2376 = vadd.f32 %v2207, %v2375
    %v2377 = vpop.f32.mrf.mxu0
    %v2378 = vadd.f32 %v2209, %v2377
    %2379 = vmatmul.bf16.gmra.mxu0 %v1669
    %v2380 = vpop.f32.mrf.mxu0
    %v2381 = vadd.f32 %v2212, %v2380
    %v2382 = vpop.f32.mrf.mxu0
    %v2383 = vadd.f32 %v2214, %v2382
    %2384 = vmatmul.bf16.gmra.mxu0 %v1673
    %v2385 = vpop.f32.mrf.mxu0
    %v2386 = vadd.f32 %v2217, %v2385
    %v2387 = vpop.f32.mrf.mxu0
    %v2388 = vadd.f32 %v2219, %v2387
    %2389 = vmatmul.bf16.gmra.mxu0 %v1677
    %v2390 = vpop.f32.mrf.mxu0
    %v2391 = vadd.f32 %v2222, %v2390
    %v2392 = vpop.f32.mrf.mxu0
    %v2393 = vadd.f32 %v2224, %v2392
    %2394 = vmatmul.bf16.gmra.mxu0 %v1681
    %v2395 = vpop.f32.mrf.mxu0
    %v2396 = vadd.f32 %v2227, %v2395
    %v2397 = vpop.f32.mrf.mxu0
    %v2398 = vadd.f32 %v2229, %v2397
    %2399 = vmatmul.bf16.gmra.mxu0 %v1685
    %v2400 = vpop.f32.mrf.mxu0
    %v2401 = vadd.f32 %v2232, %v2400
    %v2402 = vpop.f32.mrf.mxu0
    %v2403 = vadd.f32 %v2234, %v2402
    %2404 = vmatmul.bf16.gmra.mxu0 %v1689
    %v2405 = vpop.f32.mrf.mxu0
    %v2406 = vadd.f32 %v2237, %v2405
    %v2407 = vpop.f32.mrf.mxu0
    %v2408 = vadd.f32 %v2239, %v2407
    %2409 = vmatmul.bf16.gmra.mxu0 %v1693
    %v2410 = vpop.f32.mrf.mxu0
    %v2411 = vadd.f32 %v2242, %v2410
    %v2412 = vpop.f32.mrf.mxu0
    %v2413 = vadd.f32 %v2244, %v2412
    %2414 = vmatmul.bf16.gmra.mxu0 %v1697
    %v2415 = vpop.f32.mrf.mxu0
    %v2416 = vadd.f32 %v2247, %v2415
    %v2417 = vpop.f32.mrf.mxu0
    %v2418 = vadd.f32 %v2249, %v2417
    %2419 = vmatmul.bf16.gmra.mxu0 %v1701
    %v2420 = vpop.f32.mrf.mxu0
    %v2421 = vadd.f32 %v2252, %v2420
    %v2422 = vpop.f32.mrf.mxu0
    %v2423 = vadd.f32 %v2254, %v2422
    %2424 = vmatmul.bf16.gmra.mxu0 %v1705
    %v2425 = vpop.f32.mrf.mxu0
    %v2426 = vadd.f32 %v2257, %v2425
    %v2427 = vpop.f32.mrf.mxu0
    %v2428 = vadd.f32 %v2259, %v2427
    %2429 = vmatmul.bf16.gmra.mxu0 %v1709
    %v2430 = vpop.f32.mrf.mxu0
    %v2431 = vadd.f32 %v2262, %v2430
    %v2432 = vpop.f32.mrf.mxu0
    %v2433 = vadd.f32 %v2264, %v2432
    %2434 = vmatmul.bf16.gmra.mxu0 %v1713
    %v2435 = vpop.f32.mrf.mxu0
    %v2436 = vadd.f32 %v2267, %v2435
    %v2437 = vpop.f32.mrf.mxu0
    %v2438 = vadd.f32 %v2269, %v2437
    %2439 = vmatmul.bf16.gmra.mxu0 %v1717
    %v2440 = vpop.f32.mrf.mxu0
    %v2441 = vadd.f32 %v2272, %v2440
    %v2442 = vpop.f32.mrf.mxu0
    %v2443 = vadd.f32 %v2274, %v2442
    %2444 = vmatmul.bf16.gmra.mxu0 %v1721
    %v2445 = vpop.f32.mrf.mxu0
    %v2446 = vadd.f32 %v2277, %v2445
    %v2447 = vpop.f32.mrf.mxu0
    %v2448 = vadd.f32 %v2279, %v2447
    %2449 = vmatmul.bf16.gmra.mxu0 %v1725
    %v2450 = vpop.f32.mrf.mxu0
    %v2451 = vadd.f32 %v2282, %v2450
    %v2452 = vpop.f32.mrf.mxu0
    %v2453 = vadd.f32 %v2284, %v2452
    %2454 = vmatmul.bf16.gmra.mxu0 %v1729
    %v2455 = vpop.f32.mrf.mxu0
    %v2456 = vadd.f32 %v2287, %v2455
    %v2457 = vpop.f32.mrf.mxu0
    %v2458 = vadd.f32 %v2289, %v2457
    %2459 = vmatmul.bf16.gmra.mxu0 %v1733
    %v2460 = vpop.f32.mrf.mxu0
    %v2461 = vadd.f32 %v2292, %v2460
    %v2462 = vpop.f32.mrf.mxu0
    %v2463 = vadd.f32 %v2294, %v2462
    %2464 = vmatmul.bf16.gmra.mxu0 %v1737
    %v2465 = vpop.f32.mrf.mxu0
    %v2466 = vadd.f32 %v2297, %v2465
    %v2467 = vpop.f32.mrf.mxu0
    %v2468 = vadd.f32 %v2299, %v2467
    %2469 = vmatmul.bf16.gmra.mxu0 %v1741
    %v2470 = vpop.f32.mrf.mxu0
    %v2471 = vadd.f32 %v2302, %v2470
    %v2472 = vpop.f32.mrf.mxu0
    %v2473 = vadd.f32 %v2304, %v2472
    %2474 = vmatmul.bf16.gmra.mxu0 %v1745
    %v2475 = vpop.f32.mrf.mxu0
    %v2476 = vadd.f32 %v2307, %v2475
    %v2477 = vpop.f32.mrf.mxu0
    %v2478 = vadd.f32 %v2309, %v2477
    %2479 = vmatmul.bf16.gmra.mxu0 %v1749
    %v2480 = vpop.f32.mrf.mxu0
    %v2481 = vadd.f32 %v2312, %v2480
    %v2482 = vpop.f32.mrf.mxu0
    %v2483 = vadd.f32 %v2314, %v2482
    %2484 = vmatmul.bf16.gmra.mxu0 %v1753
    %v2485 = vpop.f32.mrf.mxu0
    %v2486 = vadd.f32 %v2317, %v2485
    %v2487 = vpop.f32.mrf.mxu0
    %v2488 = vadd.f32 %v2319, %v2487
    %2489 = vmatmul.bf16.gmra.mxu0 %v1757
    %v2490 = vpop.f32.mrf.mxu0
    %v2491 = vadd.f32 %v2322, %v2490
    %v2492 = vpop.f32.mrf.mxu0
    %v2493 = vadd.f32 %v2324, %v2492
    %2494 = vmatmul.bf16.gmra.mxu0 %v1761
    %v2495 = vpop.f32.mrf.mxu0
    %v2496 = vadd.f32 %v2327, %v2495
    %v2497 = vpop.f32.mrf.mxu0
    %v2498 = vadd.f32 %v2329, %v2497
    %2499 = vmatmul.bf16.gmra.mxu0 %v1765
    %v2500 = vpop.f32.mrf.mxu0
    %v2501 = vadd.f32 %v2332, %v2500
    %v2502 = vpop.f32.mrf.mxu0
    %v2503 = vadd.f32 %v2334, %v2502
    %2504 = vmatmul.bf16.gmra.mxu0 %v1769
    %v2505 = vpop.f32.mrf.mxu0
    %v2506 = vadd.f32 %v2337, %v2505
    %v2507 = vpop.f32.mrf.mxu0
    %v2508 = vadd.f32 %v2339, %v2507
    %2509 = vdwg.mxu0
    %v2510 = vadd.f32 %v1770, %v2351
    %v2511 = vadd.f32 %v1771, %v2353
    %v2512 = vadd.f32 %v1772, %v2356
    %v2513 = vadd.f32 %v1773, %v2358
    %v2514 = vadd.f32 %v1774, %v2361
    %v2515 = vadd.f32 %v1775, %v2363
    %v2516 = vadd.f32 %v1776, %v2366
    %v2517 = vadd.f32 %v1777, %v2368
    %v2518 = vadd.f32 %v1778, %v2371
    %v2519 = vadd.f32 %v1779, %v2373
    %v2520 = vadd.f32 %v1780, %v2376
    %v2521 = vadd.f32 %v1781, %v2378
    %v2522 = vadd.f32 %v1782, %v2381
    %v2523 = vadd.f32 %v1783, %v2383
    %v2524 = vadd.f32 %v1784, %v2386
    %v2525 = vadd.f32 %v1785, %v2388
    %v2526 = vadd.f32 %v1786, %v2391
    %v2527 = vadd.f32 %v1787, %v2393
    %v2528 = vadd.f32 %v1788, %v2396
    %v2529 = vadd.f32 %v1789, %v2398
    %v2530 = vadd.f32 %v1790, %v2401
    %v2531 = vadd.f32 %v1791, %v2403
    %v2532 = vadd.f32 %v1792, %v2406
    %v2533 = vadd.f32 %v1793, %v2408
    %v2534 = vadd.f32 %v1794, %v2411
    %v2535 = vadd.f32 %v1795, %v2413
    %v2536 = vadd.f32 %v1796, %v2416
    %v2537 = vadd.f32 %v1797, %v2418
    %v2538 = vadd.f32 %v1798, %v2421
    %v2539 = vadd.f32 %v1799, %v2423
    %v2540 = vadd.f32 %v1800, %v2426
    %v2541 = vadd.f32 %v1801, %v2428
    %v2542 = vadd.f32 %v1802, %v2431
    %v2543 = vadd.f32 %v1803, %v2433
    %v2544 = vadd.f32 %v1804, %v2436
    %v2545 = vadd.f32 %v1805, %v2438
    %v2546 = vadd.f32 %v1806, %v2441
    %v2547 = vadd.f32 %v1807, %v2443
    %v2548 = vadd.f32 %v1808, %v2446
    %v2549 = vadd.f32 %v1809, %v2448
    %v2550 = vadd.f32 %v1810, %v2451
    %v2551 = vadd.f32 %v1811, %v2453
    %v2552 = vadd.f32 %v1812, %v2456
    %v2553 = vadd.f32 %v1813, %v2458
    %v2554 = vadd.f32 %v1814, %v2461
    %v2555 = vadd.f32 %v1815, %v2463
    %v2556 = vadd.f32 %v1816, %v2466
    %v2557 = vadd.f32 %v1817, %v2468
    %v2558 = vadd.f32 %v1818, %v2471
    %v2559 = vadd.f32 %v1819, %v2473
    %v2560 = vadd.f32 %v1820, %v2476
    %v2561 = vadd.f32 %v1821, %v2478
    %v2562 = vadd.f32 %v1822, %v2481
    %v2563 = vadd.f32 %v1823, %v2483
    %v2564 = vadd.f32 %v1824, %v2486
    %v2565 = vadd.f32 %v1825, %v2488
    %v2566 = vadd.f32 %v1826, %v2491
    %v2567 = vadd.f32 %v1827, %v2493
    %v2568 = vadd.f32 %v1828, %v2496
    %v2569 = vadd.f32 %v1829, %v2498
    %v2570 = vadd.f32 %v1830, %v2501
    %v2571 = vadd.f32 %v1831, %v2503
    %v2572 = vadd.f32 %v1832, %v2506
    %v2573 = vadd.f32 %v1833, %v2508
    %2574 = vst [vmem:[#allocation2] sm:$0xff] %v2510
    %2575 = vst [vmem:[#allocation2 + $0x8] sm:$0xff] %v2511
    %2576 = vst [vmem:[#allocation2 + $0x10] sm:$0xff] %v2512
    %2577 = vst [vmem:[#allocation2 + $0x18] sm:$0xff] %v2513
    %2578 = vst [vmem:[#allocation2 + $0x20] sm:$0xff] %v2514
    %2579 = vst [vmem:[#allocation2 + $0x28] sm:$0xff] %v2515
    %2580 = vst [vmem:[#allocation2 + $0x30] sm:$0xff] %v2516
    %2581 = vst [vmem:[#allocation2 + $0x38] sm:$0xff] %v2517
    %2582 = vst [vmem:[#allocation2 + $0x40] sm:$0xff] %v2518
    %2583 = vst [vmem:[#allocation2 + $0x48] sm:$0xff] %v2519
    %2584 = vst [vmem:[#allocation2 + $0x50] sm:$0xff] %v2520
    %2585 = vst [vmem:[#allocation2 + $0x58] sm:$0xff] %v2521
    %2586 = vst [vmem:[#allocation2 + $0x60] sm:$0xff] %v2522
    %2587 = vst [vmem:[#allocation2 + $0x68] sm:$0xff] %v2523
    %2588 = vst [vmem:[#allocation2 + $0x70] sm:$0xff] %v2524
    %2589 = vst [vmem:[#allocation2 + $0x78] sm:$0xff] %v2525
    %2590 = vst [vmem:[#allocation2 + $0x80] sm:$0xff] %v2526
    %2591 = vst [vmem:[#allocation2 + $0x88] sm:$0xff] %v2527
    %2592 = vst [vmem:[#allocation2 + $0x90] sm:$0xff] %v2528
    %2593 = vst [vmem:[#allocation2 + $0x98] sm:$0xff] %v2529
    %2594 = vst [vmem:[#allocation2 + $0xa0] sm:$0xff] %v2530
    %2595 = vst [vmem:[#allocation2 + $0xa8] sm:$0xff] %v2531
    %2596 = vst [vmem:[#allocation2 + $0xb0] sm:$0xff] %v2532
    %2597 = vst [vmem:[#allocation2 + $0xb8] sm:$0xff] %v2533
    %2598 = vst [vmem:[#allocation2 + $0xc0] sm:$0xff] %v2534
    %2599 = vst [vmem:[#allocation2 + $0xc8] sm:$0xff] %v2535
    %2600 = vst [vmem:[#allocation2 + $0xd0] sm:$0xff] %v2536
    %2601 = vst [vmem:[#allocation2 + $0xd8] sm:$0xff] %v2537
    %2602 = vst [vmem:[#allocation2 + $0xe0] sm:$0xff] %v2538
    %2603 = vst [vmem:[#allocation2 + $0xe8] sm:$0xff] %v2539
    %2604 = vst [vmem:[#allocation2 + $0xf0] sm:$0xff] %v2540
    %2605 = vst [vmem:[#allocation2 + $0xf8] sm:$0xff] %v2541
    %2606 = vst [vmem:[#allocation2 + $0x100] sm:$0xff] %v2542
    %2607 = vst [vmem:[#allocation2 + $0x108] sm:$0xff] %v2543
    %2608 = vst [vmem:[#allocation2 + $0x110] sm:$0xff] %v2544
    %2609 = vst [vmem:[#allocation2 + $0x118] sm:$0xff] %v2545
    %2610 = vst [vmem:[#allocation2 + $0x120] sm:$0xff] %v2546
    %2611 = vst [vmem:[#allocation2 + $0x128] sm:$0xff] %v2547
    %2612 = vst [vmem:[#allocation2 + $0x130] sm:$0xff] %v2548
    %2613 = vst [vmem:[#allocation2 + $0x138] sm:$0xff] %v2549
    %2614 = vst [vmem:[#allocation2 + $0x140] sm:$0xff] %v2550
    %2615 = vst [vmem:[#allocation2 + $0x148] sm:$0xff] %v2551
    %2616 = vst [vmem:[#allocation2 + $0x150] sm:$0xff] %v2552
    %2617 = vst [vmem:[#allocation2 + $0x158] sm:$0xff] %v2553
    %2618 = vst [vmem:[#allocation2 + $0x160] sm:$0xff] %v2554
    %2619 = vst [vmem:[#allocation2 + $0x168] sm:$0xff] %v2555
    %2620 = vst [vmem:[#allocation2 + $0x170] sm:$0xff] %v2556
    %2621 = vst [vmem:[#allocation2 + $0x178] sm:$0xff] %v2557
    %2622 = vst [vmem:[#allocation2 + $0x180] sm:$0xff] %v2558
    %2623 = vst [vmem:[#allocation2 + $0x188] sm:$0xff] %v2559
    %2624 = vst [vmem:[#allocation2 + $0x190] sm:$0xff] %v2560
    %2625 = vst [vmem:[#allocation2 + $0x198] sm:$0xff] %v2561
    %2626 = vst [vmem:[#allocation2 + $0x1a0] sm:$0xff] %v2562
    %2627 = vst [vmem:[#allocation2 + $0x1a8] sm:$0xff] %v2563
    %2628 = vst [vmem:[#allocation2 + $0x1b0] sm:$0xff] %v2564
    %2629 = vst [vmem:[#allocation2 + $0x1b8] sm:$0xff] %v2565
    %2630 = vst [vmem:[#allocation2 + $0x1c0] sm:$0xff] %v2566
    %2631 = vst [vmem:[#allocation2 + $0x1c8] sm:$0xff] %v2567
    %2632 = vst [vmem:[#allocation2 + $0x1d0] sm:$0xff] %v2568
    %2633 = vst [vmem:[#allocation2 + $0x1d8] sm:$0xff] %v2569
    %2634 = vst [vmem:[#allocation2 + $0x1e0] sm:$0xff] %v2570
    %2635 = vst [vmem:[#allocation2 + $0x1e8] sm:$0xff] %v2571
    %2636 = vst [vmem:[#allocation2 + $0x1f0] sm:$0xff] %v2572
    %2637 = vst [vmem:[#allocation2 + $0x1f8] sm:$0xff] %v2573
    // Predicated region
    $region30: #{tpu_custom_call.1} parent=1 // pred_check
      %p2638 = pneg %p24
    $region31: #{tpu_custom_call.1} parent=1 // pred_check_branch
      %2640 = sbr.rel (%p2638) target = $region33
    $region32: #{tpu_custom_call.1} parent=1 // pred_region
      %v2641 = vld [vmem:[#allocation2] sm:$0xff]
      %v2642 = vld [vmem:[#allocation2 + $0x8] sm:$0xff]
      %v2643 = vld [vmem:[#allocation2 + $0x10] sm:$0xff]
      %v2644 = vld [vmem:[#allocation2 + $0x18] sm:$0xff]
      %v2645 = vld [vmem:[#allocation2 + $0x20] sm:$0xff]
      %v2646 = vld [vmem:[#allocation2 + $0x28] sm:$0xff]
      %v2647 = vld [vmem:[#allocation2 + $0x30] sm:$0xff]
      %v2648 = vld [vmem:[#allocation2 + $0x38] sm:$0xff]
      %v2649 = vld [vmem:[#allocation2 + $0x40] sm:$0xff]
      %v2650 = vld [vmem:[#allocation2 + $0x48] sm:$0xff]
      %v2651 = vld [vmem:[#allocation2 + $0x50] sm:$0xff]
      %v2652 = vld [vmem:[#allocation2 + $0x58] sm:$0xff]
      %v2653 = vld [vmem:[#allocation2 + $0x60] sm:$0xff]
      %v2654 = vld [vmem:[#allocation2 + $0x68] sm:$0xff]
      %v2655 = vld [vmem:[#allocation2 + $0x70] sm:$0xff]
      %v2656 = vld [vmem:[#allocation2 + $0x78] sm:$0xff]
      %v2657 = vld [vmem:[#allocation2 + $0x80] sm:$0xff]
      %v2658 = vld [vmem:[#allocation2 + $0x88] sm:$0xff]
      %v2659 = vld [vmem:[#allocation2 + $0x90] sm:$0xff]
      %v2660 = vld [vmem:[#allocation2 + $0x98] sm:$0xff]
      %v2661 = vld [vmem:[#allocation2 + $0xa0] sm:$0xff]
      %v2662 = vld [vmem:[#allocation2 + $0xa8] sm:$0xff]
      %v2663 = vld [vmem:[#allocation2 + $0xb0] sm:$0xff]
      %v2664 = vld [vmem:[#allocation2 + $0xb8] sm:$0xff]
      %v2665 = vld [vmem:[#allocation2 + $0xc0] sm:$0xff]
      %v2666 = vld [vmem:[#allocation2 + $0xc8] sm:$0xff]
      %v2667 = vld [vmem:[#allocation2 + $0xd0] sm:$0xff]
      %v2668 = vld [vmem:[#allocation2 + $0xd8] sm:$0xff]
      %v2669 = vld [vmem:[#allocation2 + $0xe0] sm:$0xff]
      %v2670 = vld [vmem:[#allocation2 + $0xe8] sm:$0xff]
      %v2671 = vld [vmem:[#allocation2 + $0xf0] sm:$0xff]
      %v2672 = vld [vmem:[#allocation2 + $0xf8] sm:$0xff]
      %v2673 = vld [vmem:[#allocation2 + $0x100] sm:$0xff]
      %v2674 = vld [vmem:[#allocation2 + $0x108] sm:$0xff]
      %v2675 = vld [vmem:[#allocation2 + $0x110] sm:$0xff]
      %v2676 = vld [vmem:[#allocation2 + $0x118] sm:$0xff]
      %v2677 = vld [vmem:[#allocation2 + $0x120] sm:$0xff]
      %v2678 = vld [vmem:[#allocation2 + $0x128] sm:$0xff]
      %v2679 = vld [vmem:[#allocation2 + $0x130] sm:$0xff]
      %v2680 = vld [vmem:[#allocation2 + $0x138] sm:$0xff]
      %v2681 = vld [vmem:[#allocation2 + $0x140] sm:$0xff]
      %v2682 = vld [vmem:[#allocation2 + $0x148] sm:$0xff]
      %v2683 = vld [vmem:[#allocation2 + $0x150] sm:$0xff]
      %v2684 = vld [vmem:[#allocation2 + $0x158] sm:$0xff]
      %v2685 = vld [vmem:[#allocation2 + $0x160] sm:$0xff]
      %v2686 = vld [vmem:[#allocation2 + $0x168] sm:$0xff]
      %v2687 = vld [vmem:[#allocation2 + $0x170] sm:$0xff]
      %v2688 = vld [vmem:[#allocation2 + $0x178] sm:$0xff]
      %v2689 = vld [vmem:[#allocation2 + $0x180] sm:$0xff]
      %v2690 = vld [vmem:[#allocation2 + $0x188] sm:$0xff]
      %v2691 = vld [vmem:[#allocation2 + $0x190] sm:$0xff]
      %v2692 = vld [vmem:[#allocation2 + $0x198] sm:$0xff]
      %v2693 = vld [vmem:[#allocation2 + $0x1a0] sm:$0xff]
      %v2694 = vld [vmem:[#allocation2 + $0x1a8] sm:$0xff]
      %v2695 = vld [vmem:[#allocation2 + $0x1b0] sm:$0xff]
      %v2696 = vld [vmem:[#allocation2 + $0x1b8] sm:$0xff]
      %v2697 = vld [vmem:[#allocation2 + $0x1c0] sm:$0xff]
      %v2698 = vld [vmem:[#allocation2 + $0x1c8] sm:$0xff]
      %v2699 = vld [vmem:[#allocation2 + $0x1d0] sm:$0xff]
      %v2700 = vld [vmem:[#allocation2 + $0x1d8] sm:$0xff]
      %v2701 = vld [vmem:[#allocation2 + $0x1e0] sm:$0xff]
      %v2702 = vld [vmem:[#allocation2 + $0x1e8] sm:$0xff]
      %v2703 = vld [vmem:[#allocation2 + $0x1f0] sm:$0xff]
      %v2704 = vld [vmem:[#allocation2 + $0x1f8] sm:$0xff]
      %v2705 = vld [vmem:[%s5] sm:$0xff]
      %v2706 = vld [vmem:[%s5 + $0x8] sm:$0xff]
      %v2707 = vld [vmem:[%s5 + $0x10] sm:$0xff]
      %v2708 = vld [vmem:[%s5 + $0x18] sm:$0xff]
      %v2709 = vld [vmem:[%s5 + $0x20] sm:$0xff]
      %v2710 = vld [vmem:[%s5 + $0x28] sm:$0xff]
      %v2711 = vld [vmem:[%s5 + $0x30] sm:$0xff]
      %v2712 = vld [vmem:[%s5 + $0x38] sm:$0xff]
      %v2713 = vld [vmem:[%s5 + $0x40] sm:$0xff]
      %v2714 = vld [vmem:[%s5 + $0x48] sm:$0xff]
      %v2715 = vld [vmem:[%s5 + $0x50] sm:$0xff]
      %v2716 = vld [vmem:[%s5 + $0x58] sm:$0xff]
      %v2717 = vld [vmem:[%s5 + $0x60] sm:$0xff]
      %v2718 = vld [vmem:[%s5 + $0x68] sm:$0xff]
      %v2719 = vld [vmem:[%s5 + $0x70] sm:$0xff]
      %v2720 = vld [vmem:[%s5 + $0x78] sm:$0xff]
      %v2721 = vld [vmem:[%s5 + $0x80] sm:$0xff]
      %v2722 = vld [vmem:[%s5 + $0x88] sm:$0xff]
      %v2723 = vld [vmem:[%s5 + $0x90] sm:$0xff]
      %v2724 = vld [vmem:[%s5 + $0x98] sm:$0xff]
      %v2725 = vld [vmem:[%s5 + $0xa0] sm:$0xff]
      %v2726 = vld [vmem:[%s5 + $0xa8] sm:$0xff]
      %v2727 = vld [vmem:[%s5 + $0xb0] sm:$0xff]
      %v2728 = vld [vmem:[%s5 + $0xb8] sm:$0xff]
      %v2729 = vld [vmem:[%s5 + $0xc0] sm:$0xff]
      %v2730 = vld [vmem:[%s5 + $0xc8] sm:$0xff]
      %v2731 = vld [vmem:[%s5 + $0xd0] sm:$0xff]
      %v2732 = vld [vmem:[%s5 + $0xd8] sm:$0xff]
      %v2733 = vld [vmem:[%s5 + $0xe0] sm:$0xff]
      %v2734 = vld [vmem:[%s5 + $0xe8] sm:$0xff]
      %v2735 = vld [vmem:[%s5 + $0xf0] sm:$0xff]
      %v2736 = vld [vmem:[%s5 + $0xf8] sm:$0xff]
      %v2737 = vld [vmem:[%s5 + $0x100] sm:$0xff]
      %v2738 = vld [vmem:[%s5 + $0x108] sm:$0xff]
      %v2739 = vld [vmem:[%s5 + $0x110] sm:$0xff]
      %v2740 = vld [vmem:[%s5 + $0x118] sm:$0xff]
      %v2741 = vld [vmem:[%s5 + $0x120] sm:$0xff]
      %v2742 = vld [vmem:[%s5 + $0x128] sm:$0xff]
      %v2743 = vld [vmem:[%s5 + $0x130] sm:$0xff]
      %v2744 = vld [vmem:[%s5 + $0x138] sm:$0xff]
      %v2745 = vld [vmem:[%s5 + $0x140] sm:$0xff]
      %v2746 = vld [vmem:[%s5 + $0x148] sm:$0xff]
      %v2747 = vld [vmem:[%s5 + $0x150] sm:$0xff]
      %v2748 = vld [vmem:[%s5 + $0x158] sm:$0xff]
      %v2749 = vld [vmem:[%s5 + $0x160] sm:$0xff]
      %v2750 = vld [vmem:[%s5 + $0x168] sm:$0xff]
      %v2751 = vld [vmem:[%s5 + $0x170] sm:$0xff]
      %v2752 = vld [vmem:[%s5 + $0x178] sm:$0xff]
      %v2753 = vld [vmem:[%s5 + $0x180] sm:$0xff]
      %v2754 = vld [vmem:[%s5 + $0x188] sm:$0xff]
      %v2755 = vld [vmem:[%s5 + $0x190] sm:$0xff]
      %v2756 = vld [vmem:[%s5 + $0x198] sm:$0xff]
      %v2757 = vld [vmem:[%s5 + $0x1a0] sm:$0xff]
      %v2758 = vld [vmem:[%s5 + $0x1a8] sm:$0xff]
      %v2759 = vld [vmem:[%s5 + $0x1b0] sm:$0xff]
      %v2760 = vld [vmem:[%s5 + $0x1b8] sm:$0xff]
      %v2761 = vld [vmem:[%s5 + $0x1c0] sm:$0xff]
      %v2762 = vld [vmem:[%s5 + $0x1c8] sm:$0xff]
      %v2763 = vld [vmem:[%s5 + $0x1d0] sm:$0xff]
      %v2764 = vld [vmem:[%s5 + $0x1d8] sm:$0xff]
      %v2765 = vld [vmem:[%s5 + $0x1e0] sm:$0xff]
      %v2766 = vld [vmem:[%s5 + $0x1e8] sm:$0xff]
      %v2767 = vld [vmem:[%s5 + $0x1f0] sm:$0xff]
      %v2768 = vld [vmem:[%s5 + $0x1f8] sm:$0xff]
      %2770 = vset.pattern.permute.xlu0 0
      %2771 = vperm.xlu0 %2770, %v2705
      %v2772 = vpop.permute.xlu0 %2771
      %2775 = vset.pattern.permute.xlu0 0
      %2776 = vperm.xlu0 %2775, %v2706
      %v2777 = vpop.permute.xlu0 %2776
      %2780 = vset.pattern.permute.xlu0 0
      %2781 = vperm.xlu0 %2780, %v2707
      %v2782 = vpop.permute.xlu0 %2781
      %2785 = vset.pattern.permute.xlu0 0
      %2786 = vperm.xlu0 %2785, %v2708
      %v2787 = vpop.permute.xlu0 %2786
      %2790 = vset.pattern.permute.xlu0 0
      %2791 = vperm.xlu0 %2790, %v2709
      %v2792 = vpop.permute.xlu0 %2791
      %2795 = vset.pattern.permute.xlu0 0
      %2796 = vperm.xlu0 %2795, %v2710
      %v2797 = vpop.permute.xlu0 %2796
      %2800 = vset.pattern.permute.xlu0 0
      %2801 = vperm.xlu0 %2800, %v2711
      %v2802 = vpop.permute.xlu0 %2801
      %2805 = vset.pattern.permute.xlu0 0
      %2806 = vperm.xlu0 %2805, %v2712
      %v2807 = vpop.permute.xlu0 %2806
      %2810 = vset.pattern.permute.xlu0 0
      %2811 = vperm.xlu0 %2810, %v2713
      %v2812 = vpop.permute.xlu0 %2811
      %2815 = vset.pattern.permute.xlu0 0
      %2816 = vperm.xlu0 %2815, %v2714
      %v2817 = vpop.permute.xlu0 %2816
      %2820 = vset.pattern.permute.xlu0 0
      %2821 = vperm.xlu0 %2820, %v2715
      %v2822 = vpop.permute.xlu0 %2821
      %2825 = vset.pattern.permute.xlu0 0
      %2826 = vperm.xlu0 %2825, %v2716
      %v2827 = vpop.permute.xlu0 %2826
      %2830 = vset.pattern.permute.xlu0 0
      %2831 = vperm.xlu0 %2830, %v2717
      %v2832 = vpop.permute.xlu0 %2831
      %2835 = vset.pattern.permute.xlu0 0
      %2836 = vperm.xlu0 %2835, %v2718
      %v2837 = vpop.permute.xlu0 %2836
      %2840 = vset.pattern.permute.xlu0 0
      %2841 = vperm.xlu0 %2840, %v2719
      %v2842 = vpop.permute.xlu0 %2841
      %2845 = vset.pattern.permute.xlu0 0
      %2846 = vperm.xlu0 %2845, %v2720
      %v2847 = vpop.permute.xlu0 %2846
      %2850 = vset.pattern.permute.xlu0 0
      %2851 = vperm.xlu0 %2850, %v2721
      %v2852 = vpop.permute.xlu0 %2851
      %2855 = vset.pattern.permute.xlu0 0
      %2856 = vperm.xlu0 %2855, %v2722
      %v2857 = vpop.permute.xlu0 %2856
      %2860 = vset.pattern.permute.xlu0 0
      %2861 = vperm.xlu0 %2860, %v2723
      %v2862 = vpop.permute.xlu0 %2861
      %2865 = vset.pattern.permute.xlu0 0
      %2866 = vperm.xlu0 %2865, %v2724
      %v2867 = vpop.permute.xlu0 %2866
      %2870 = vset.pattern.permute.xlu0 0
      %2871 = vperm.xlu0 %2870, %v2725
      %v2872 = vpop.permute.xlu0 %2871
      %2875 = vset.pattern.permute.xlu0 0
      %2876 = vperm.xlu0 %2875, %v2726
      %v2877 = vpop.permute.xlu0 %2876
      %2880 = vset.pattern.permute.xlu0 0
      %2881 = vperm.xlu0 %2880, %v2727
      %v2882 = vpop.permute.xlu0 %2881
      %2885 = vset.pattern.permute.xlu0 0
      %2886 = vperm.xlu0 %2885, %v2728
      %v2887 = vpop.permute.xlu0 %2886
      %2890 = vset.pattern.permute.xlu0 0
      %2891 = vperm.xlu0 %2890, %v2729
      %v2892 = vpop.permute.xlu0 %2891
      %2895 = vset.pattern.permute.xlu0 0
      %2896 = vperm.xlu0 %2895, %v2730
      %v2897 = vpop.permute.xlu0 %2896
      %2900 = vset.pattern.permute.xlu0 0
      %2901 = vperm.xlu0 %2900, %v2731
      %v2902 = vpop.permute.xlu0 %2901
      %2905 = vset.pattern.permute.xlu0 0
      %2906 = vperm.xlu0 %2905, %v2732
      %v2907 = vpop.permute.xlu0 %2906
      %2910 = vset.pattern.permute.xlu0 0
      %2911 = vperm.xlu0 %2910, %v2733
      %v2912 = vpop.permute.xlu0 %2911
      %2915 = vset.pattern.permute.xlu0 0
      %2916 = vperm.xlu0 %2915, %v2734
      %v2917 = vpop.permute.xlu0 %2916
      %2920 = vset.pattern.permute.xlu0 0
      %2921 = vperm.xlu0 %2920, %v2735
      %v2922 = vpop.permute.xlu0 %2921
      %2925 = vset.pattern.permute.xlu0 0
      %2926 = vperm.xlu0 %2925, %v2736
      %v2927 = vpop.permute.xlu0 %2926
      %2930 = vset.pattern.permute.xlu0 0
      %2931 = vperm.xlu0 %2930, %v2737
      %v2932 = vpop.permute.xlu0 %2931
      %2935 = vset.pattern.permute.xlu0 0
      %2936 = vperm.xlu0 %2935, %v2738
      %v2937 = vpop.permute.xlu0 %2936
      %2940 = vset.pattern.permute.xlu0 0
      %2941 = vperm.xlu0 %2940, %v2739
      %v2942 = vpop.permute.xlu0 %2941
      %2945 = vset.pattern.permute.xlu0 0
      %2946 = vperm.xlu0 %2945, %v2740
      %v2947 = vpop.permute.xlu0 %2946
      %2950 = vset.pattern.permute.xlu0 0
      %2951 = vperm.xlu0 %2950, %v2741
      %v2952 = vpop.permute.xlu0 %2951
      %2955 = vset.pattern.permute.xlu0 0
      %2956 = vperm.xlu0 %2955, %v2742
      %v2957 = vpop.permute.xlu0 %2956
      %2960 = vset.pattern.permute.xlu0 0
      %2961 = vperm.xlu0 %2960, %v2743
      %v2962 = vpop.permute.xlu0 %2961
      %2965 = vset.pattern.permute.xlu0 0
      %2966 = vperm.xlu0 %2965, %v2744
      %v2967 = vpop.permute.xlu0 %2966
      %2970 = vset.pattern.permute.xlu0 0
      %2971 = vperm.xlu0 %2970, %v2745
      %v2972 = vpop.permute.xlu0 %2971
      %2975 = vset.pattern.permute.xlu0 0
      %2976 = vperm.xlu0 %2975, %v2746
      %v2977 = vpop.permute.xlu0 %2976
      %2980 = vset.pattern.permute.xlu0 0
      %2981 = vperm.xlu0 %2980, %v2747
      %v2982 = vpop.permute.xlu0 %2981
      %2985 = vset.pattern.permute.xlu0 0
      %2986 = vperm.xlu0 %2985, %v2748
      %v2987 = vpop.permute.xlu0 %2986
      %2990 = vset.pattern.permute.xlu0 0
      %2991 = vperm.xlu0 %2990, %v2749
      %v2992 = vpop.permute.xlu0 %2991
      %2995 = vset.pattern.permute.xlu0 0
      %2996 = vperm.xlu0 %2995, %v2750
      %v2997 = vpop.permute.xlu0 %2996
      %3000 = vset.pattern.permute.xlu0 0
      %3001 = vperm.xlu0 %3000, %v2751
      %v3002 = vpop.permute.xlu0 %3001
      %3005 = vset.pattern.permute.xlu0 0
      %3006 = vperm.xlu0 %3005, %v2752
      %v3007 = vpop.permute.xlu0 %3006
      %3010 = vset.pattern.permute.xlu0 0
      %3011 = vperm.xlu0 %3010, %v2753
      %v3012 = vpop.permute.xlu0 %3011
      %3015 = vset.pattern.permute.xlu0 0
      %3016 = vperm.xlu0 %3015, %v2754
      %v3017 = vpop.permute.xlu0 %3016
      %3020 = vset.pattern.permute.xlu0 0
      %3021 = vperm.xlu0 %3020, %v2755
      %v3022 = vpop.permute.xlu0 %3021
      %3025 = vset.pattern.permute.xlu0 0
      %3026 = vperm.xlu0 %3025, %v2756
      %v3027 = vpop.permute.xlu0 %3026
      %3030 = vset.pattern.permute.xlu0 0
      %3031 = vperm.xlu0 %3030, %v2757
      %v3032 = vpop.permute.xlu0 %3031
      %3035 = vset.pattern.permute.xlu0 0
      %3036 = vperm.xlu0 %3035, %v2758
      %v3037 = vpop.permute.xlu0 %3036
      %3040 = vset.pattern.permute.xlu0 0
      %3041 = vperm.xlu0 %3040, %v2759
      %v3042 = vpop.permute.xlu0 %3041
      %3045 = vset.pattern.permute.xlu0 0
      %3046 = vperm.xlu0 %3045, %v2760
      %v3047 = vpop.permute.xlu0 %3046
      %3050 = vset.pattern.permute.xlu0 0
      %3051 = vperm.xlu0 %3050, %v2761
      %v3052 = vpop.permute.xlu0 %3051
      %3055 = vset.pattern.permute.xlu0 0
      %3056 = vperm.xlu0 %3055, %v2762
      %v3057 = vpop.permute.xlu0 %3056
      %3060 = vset.pattern.permute.xlu0 0
      %3061 = vperm.xlu0 %3060, %v2763
      %v3062 = vpop.permute.xlu0 %3061
      %3065 = vset.pattern.permute.xlu0 0
      %3066 = vperm.xlu0 %3065, %v2764
      %v3067 = vpop.permute.xlu0 %3066
      %3070 = vset.pattern.permute.xlu0 0
      %3071 = vperm.xlu0 %3070, %v2765
      %v3072 = vpop.permute.xlu0 %3071
      %3075 = vset.pattern.permute.xlu0 0
      %3076 = vperm.xlu0 %3075, %v2766
      %v3077 = vpop.permute.xlu0 %3076
      %3080 = vset.pattern.permute.xlu0 0
      %3081 = vperm.xlu0 %3080, %v2767
      %v3082 = vpop.permute.xlu0 %3081
      %3085 = vset.pattern.permute.xlu0 0
      %3086 = vperm.xlu0 %3085, %v2768
      %v3087 = vpop.permute.xlu0 %3086
      %v3089 = vmul.f32 %v2641, %v2772
      %v3090 = vmul.f32 %v2642, %v2777
      %v3091 = vmul.f32 %v2643, %v2782
      %v3092 = vmul.f32 %v2644, %v2787
      %v3093 = vmul.f32 %v2645, %v2792
      %v3094 = vmul.f32 %v2646, %v2797
      %v3095 = vmul.f32 %v2647, %v2802
      %v3096 = vmul.f32 %v2648, %v2807
      %v3097 = vmul.f32 %v2649, %v2812
      %v3098 = vmul.f32 %v2650, %v2817
      %v3099 = vmul.f32 %v2651, %v2822
      %v3100 = vmul.f32 %v2652, %v2827
      %v3101 = vmul.f32 %v2653, %v2832
      %v3102 = vmul.f32 %v2654, %v2837
      %v3103 = vmul.f32 %v2655, %v2842
      %v3104 = vmul.f32 %v2656, %v2847
      %v3105 = vmul.f32 %v2657, %v2852
      %v3106 = vmul.f32 %v2658, %v2857
      %v3107 = vmul.f32 %v2659, %v2862
      %v3108 = vmul.f32 %v2660, %v2867
      %v3109 = vmul.f32 %v2661, %v2872
      %v3110 = vmul.f32 %v2662, %v2877
      %v3111 = vmul.f32 %v2663, %v2882
      %v3112 = vmul.f32 %v2664, %v2887
      %v3113 = vmul.f32 %v2665, %v2892
      %v3114 = vmul.f32 %v2666, %v2897
      %v3115 = vmul.f32 %v2667, %v2902
      %v3116 = vmul.f32 %v2668, %v2907
      %v3117 = vmul.f32 %v2669, %v2912
      %v3118 = vmul.f32 %v2670, %v2917
      %v3119 = vmul.f32 %v2671, %v2922
      %v3120 = vmul.f32 %v2672, %v2927
      %v3121 = vmul.f32 %v2673, %v2932
      %v3122 = vmul.f32 %v2674, %v2937
      %v3123 = vmul.f32 %v2675, %v2942
      %v3124 = vmul.f32 %v2676, %v2947
      %v3125 = vmul.f32 %v2677, %v2952
      %v3126 = vmul.f32 %v2678, %v2957
      %v3127 = vmul.f32 %v2679, %v2962
      %v3128 = vmul.f32 %v2680, %v2967
      %v3129 = vmul.f32 %v2681, %v2972
      %v3130 = vmul.f32 %v2682, %v2977
      %v3131 = vmul.f32 %v2683, %v2982
      %v3132 = vmul.f32 %v2684, %v2987
      %v3133 = vmul.f32 %v2685, %v2992
      %v3134 = vmul.f32 %v2686, %v2997
      %v3135 = vmul.f32 %v2687, %v3002
      %v3136 = vmul.f32 %v2688, %v3007
      %v3137 = vmul.f32 %v2689, %v3012
      %v3138 = vmul.f32 %v2690, %v3017
      %v3139 = vmul.f32 %v2691, %v3022
      %v3140 = vmul.f32 %v2692, %v3027
      %v3141 = vmul.f32 %v2693, %v3032
      %v3142 = vmul.f32 %v2694, %v3037
      %v3143 = vmul.f32 %v2695, %v3042
      %v3144 = vmul.f32 %v2696, %v3047
      %v3145 = vmul.f32 %v2697, %v3052
      %v3146 = vmul.f32 %v2698, %v3057
      %v3147 = vmul.f32 %v2699, %v3062
      %v3148 = vmul.f32 %v2700, %v3067
      %v3149 = vmul.f32 %v2701, %v3072
      %v3150 = vmul.f32 %v2702, %v3077
      %v3151 = vmul.f32 %v2703, %v3082
      %v3152 = vmul.f32 %v2704, %v3087
      %v3153 = vld [vmem:[%s3] sm:$0x1]
      %v3155 = vperm.slane %v3153, 0
      %v3157 = vadd.f32 %v3089, %v3155
      %v3158 = vadd.f32 %v3090, %v3155
      %v3159 = vadd.f32 %v3091, %v3155
      %v3160 = vadd.f32 %v3092, %v3155
      %v3161 = vadd.f32 %v3093, %v3155
      %v3162 = vadd.f32 %v3094, %v3155
      %v3163 = vadd.f32 %v3095, %v3155
      %v3164 = vadd.f32 %v3096, %v3155
      %v3165 = vadd.f32 %v3097, %v3155
      %v3166 = vadd.f32 %v3098, %v3155
      %v3167 = vadd.f32 %v3099, %v3155
      %v3168 = vadd.f32 %v3100, %v3155
      %v3169 = vadd.f32 %v3101, %v3155
      %v3170 = vadd.f32 %v3102, %v3155
      %v3171 = vadd.f32 %v3103, %v3155
      %v3172 = vadd.f32 %v3104, %v3155
      %v3173 = vadd.f32 %v3105, %v3155
      %v3174 = vadd.f32 %v3106, %v3155
      %v3175 = vadd.f32 %v3107, %v3155
      %v3176 = vadd.f32 %v3108, %v3155
      %v3177 = vadd.f32 %v3109, %v3155
      %v3178 = vadd.f32 %v3110, %v3155
      %v3179 = vadd.f32 %v3111, %v3155
      %v3180 = vadd.f32 %v3112, %v3155
      %v3181 = vadd.f32 %v3113, %v3155
      %v3182 = vadd.f32 %v3114, %v3155
      %v3183 = vadd.f32 %v3115, %v3155
      %v3184 = vadd.f32 %v3116, %v3155
      %v3185 = vadd.f32 %v3117, %v3155
      %v3186 = vadd.f32 %v3118, %v3155
      %v3187 = vadd.f32 %v3119, %v3155
      %v3188 = vadd.f32 %v3120, %v3155
      %v3189 = vadd.f32 %v3121, %v3155
      %v3190 = vadd.f32 %v3122, %v3155
      %v3191 = vadd.f32 %v3123, %v3155
      %v3192 = vadd.f32 %v3124, %v3155
      %v3193 = vadd.f32 %v3125, %v3155
      %v3194 = vadd.f32 %v3126, %v3155
      %v3195 = vadd.f32 %v3127, %v3155
      %v3196 = vadd.f32 %v3128, %v3155
      %v3197 = vadd.f32 %v3129, %v3155
      %v3198 = vadd.f32 %v3130, %v3155
      %v3199 = vadd.f32 %v3131, %v3155
      %v3200 = vadd.f32 %v3132, %v3155
      %v3201 = vadd.f32 %v3133, %v3155
      %v3202 = vadd.f32 %v3134, %v3155
      %v3203 = vadd.f32 %v3135, %v3155
      %v3204 = vadd.f32 %v3136, %v3155
      %v3205 = vadd.f32 %v3137, %v3155
      %v3206 = vadd.f32 %v3138, %v3155
      %v3207 = vadd.f32 %v3139, %v3155
      %v3208 = vadd.f32 %v3140, %v3155
      %v3209 = vadd.f32 %v3141, %v3155
      %v3210 = vadd.f32 %v3142, %v3155
      %v3211 = vadd.f32 %v3143, %v3155
      %v3212 = vadd.f32 %v3144, %v3155
      %v3213 = vadd.f32 %v3145, %v3155
      %v3214 = vadd.f32 %v3146, %v3155
      %v3215 = vadd.f32 %v3147, %v3155
      %v3216 = vadd.f32 %v3148, %v3155
      %v3217 = vadd.f32 %v3149, %v3155
      %v3218 = vadd.f32 %v3150, %v3155
      %v3219 = vadd.f32 %v3151, %v3155
      %v3220 = vadd.f32 %v3152, %v3155
      %v3221 = vmax.f32 %v3157, 0.0
      %v3222 = vmax.f32 %v3158, 0.0
      %v3223 = vmax.f32 %v3159, 0.0
      %v3224 = vmax.f32 %v3160, 0.0
      %v3225 = vmax.f32 %v3161, 0.0
      %v3226 = vmax.f32 %v3162, 0.0
      %v3227 = vmax.f32 %v3163, 0.0
      %v3228 = vmax.f32 %v3164, 0.0
      %v3229 = vmax.f32 %v3165, 0.0
      %v3230 = vmax.f32 %v3166, 0.0
      %v3231 = vmax.f32 %v3167, 0.0
      %v3232 = vmax.f32 %v3168, 0.0
      %v3233 = vmax.f32 %v3169, 0.0
      %v3234 = vmax.f32 %v3170, 0.0
      %v3235 = vmax.f32 %v3171, 0.0
      %v3236 = vmax.f32 %v3172, 0.0
      %v3237 = vmax.f32 %v3173, 0.0
      %v3238 = vmax.f32 %v3174, 0.0
      %v3239 = vmax.f32 %v3175, 0.0
      %v3240 = vmax.f32 %v3176, 0.0
      %v3241 = vmax.f32 %v3177, 0.0
      %v3242 = vmax.f32 %v3178, 0.0
      %v3243 = vmax.f32 %v3179, 0.0
      %v3244 = vmax.f32 %v3180, 0.0
      %v3245 = vmax.f32 %v3181, 0.0
      %v3246 = vmax.f32 %v3182, 0.0
      %v3247 = vmax.f32 %v3183, 0.0
      %v3248 = vmax.f32 %v3184, 0.0
      %v3249 = vmax.f32 %v3185, 0.0
      %v3250 = vmax.f32 %v3186, 0.0
      %v3251 = vmax.f32 %v3187, 0.0
      %v3252 = vmax.f32 %v3188, 0.0
      %v3253 = vmax.f32 %v3189, 0.0
      %v3254 = vmax.f32 %v3190, 0.0
      %v3255 = vmax.f32 %v3191, 0.0
      %v3256 = vmax.f32 %v3192, 0.0
      %v3257 = vmax.f32 %v3193, 0.0
      %v3258 = vmax.f32 %v3194, 0.0
      %v3259 = vmax.f32 %v3195, 0.0
      %v3260 = vmax.f32 %v3196, 0.0
      %v3261 = vmax.f32 %v3197, 0.0
      %v3262 = vmax.f32 %v3198, 0.0
      %v3263 = vmax.f32 %v3199, 0.0
      %v3264 = vmax.f32 %v3200, 0.0
      %v3265 = vmax.f32 %v3201, 0.0
      %v3266 = vmax.f32 %v3202, 0.0
      %v3267 = vmax.f32 %v3203, 0.0
      %v3268 = vmax.f32 %v3204, 0.0
      %v3269 = vmax.f32 %v3205, 0.0
      %v3270 = vmax.f32 %v3206, 0.0
      %v3271 = vmax.f32 %v3207, 0.0
      %v3272 = vmax.f32 %v3208, 0.0
      %v3273 = vmax.f32 %v3209, 0.0
      %v3274 = vmax.f32 %v3210, 0.0
      %v3275 = vmax.f32 %v3211, 0.0
      %v3276 = vmax.f32 %v3212, 0.0
      %v3277 = vmax.f32 %v3213, 0.0
      %v3278 = vmax.f32 %v3214, 0.0
      %v3279 = vmax.f32 %v3215, 0.0
      %v3280 = vmax.f32 %v3216, 0.0
      %v3281 = vmax.f32 %v3217, 0.0
      %v3282 = vmax.f32 %v3218, 0.0
      %v3283 = vmax.f32 %v3219, 0.0
      %v3284 = vmax.f32 %v3220, 0.0
      %v3285 = vpack.c.bf16 %v3221, %v3221
      %v3286 = vpack.c.bf16 %v3222, %v3222
      %v3287 = vpack.c.bf16 %v3223, %v3223
      %v3288 = vpack.c.bf16 %v3224, %v3224
      %v3289 = vpack.c.bf16 %v3225, %v3225
      %v3290 = vpack.c.bf16 %v3226, %v3226
      %v3291 = vpack.c.bf16 %v3227, %v3227
      %v3292 = vpack.c.bf16 %v3228, %v3228
      %v3293 = vpack.c.bf16 %v3229, %v3229
      %v3294 = vpack.c.bf16 %v3230, %v3230
      %v3295 = vpack.c.bf16 %v3231, %v3231
      %v3296 = vpack.c.bf16 %v3232, %v3232
      %v3297 = vpack.c.bf16 %v3233, %v3233
      %v3298 = vpack.c.bf16 %v3234, %v3234
      %v3299 = vpack.c.bf16 %v3235, %v3235
      %v3300 = vpack.c.bf16 %v3236, %v3236
      %v3301 = vpack.c.bf16 %v3237, %v3237
      %v3302 = vpack.c.bf16 %v3238, %v3238
      %v3303 = vpack.c.bf16 %v3239, %v3239
      %v3304 = vpack.c.bf16 %v3240, %v3240
      %v3305 = vpack.c.bf16 %v3241, %v3241
      %v3306 = vpack.c.bf16 %v3242, %v3242
      %v3307 = vpack.c.bf16 %v3243, %v3243
      %v3308 = vpack.c.bf16 %v3244, %v3244
      %v3309 = vpack.c.bf16 %v3245, %v3245
      %v3310 = vpack.c.bf16 %v3246, %v3246
      %v3311 = vpack.c.bf16 %v3247, %v3247
      %v3312 = vpack.c.bf16 %v3248, %v3248
      %v3313 = vpack.c.bf16 %v3249, %v3249
      %v3314 = vpack.c.bf16 %v3250, %v3250
      %v3315 = vpack.c.bf16 %v3251, %v3251
      %v3316 = vpack.c.bf16 %v3252, %v3252
      %v3317 = vpack.c.bf16 %v3253, %v3253
      %v3318 = vpack.c.bf16 %v3254, %v3254
      %v3319 = vpack.c.bf16 %v3255, %v3255
      %v3320 = vpack.c.bf16 %v3256, %v3256
      %v3321 = vpack.c.bf16 %v3257, %v3257
      %v3322 = vpack.c.bf16 %v3258, %v3258
      %v3323 = vpack.c.bf16 %v3259, %v3259
      %v3324 = vpack.c.bf16 %v3260, %v3260
      %v3325 = vpack.c.bf16 %v3261, %v3261
      %v3326 = vpack.c.bf16 %v3262, %v3262
      %v3327 = vpack.c.bf16 %v3263, %v3263
      %v3328 = vpack.c.bf16 %v3264, %v3264
      %v3329 = vpack.c.bf16 %v3265, %v3265
      %v3330 = vpack.c.bf16 %v3266, %v3266
      %v3331 = vpack.c.bf16 %v3267, %v3267
      %v3332 = vpack.c.bf16 %v3268, %v3268
      %v3333 = vpack.c.bf16 %v3269, %v3269
      %v3334 = vpack.c.bf16 %v3270, %v3270
      %v3335 = vpack.c.bf16 %v3271, %v3271
      %v3336 = vpack.c.bf16 %v3272, %v3272
      %v3337 = vpack.c.bf16 %v3273, %v3273
      %v3338 = vpack.c.bf16 %v3274, %v3274
      %v3339 = vpack.c.bf16 %v3275, %v3275
      %v3340 = vpack.c.bf16 %v3276, %v3276
      %v3341 = vpack.c.bf16 %v3277, %v3277
      %v3342 = vpack.c.bf16 %v3278, %v3278
      %v3343 = vpack.c.bf16 %v3279, %v3279
      %v3344 = vpack.c.bf16 %v3280, %v3280
      %v3345 = vpack.c.bf16 %v3281, %v3281
      %v3346 = vpack.c.bf16 %v3282, %v3282
      %v3347 = vpack.c.bf16 %v3283, %v3283
      %v3348 = vpack.c.bf16 %v3284, %v3284
      %3349 = vst [vmem:[#allocation3] sm:$0xf] %v3285
      %3350 = vst [vmem:[#allocation3 + $0x4] sm:$0xf] %v3286
      %3351 = vst [vmem:[#allocation3 + $0x8] sm:$0xf] %v3287
      %3352 = vst [vmem:[#allocation3 + $0xc] sm:$0xf] %v3288
      %3353 = vst [vmem:[#allocation3 + $0x10] sm:$0xf] %v3289
      %3354 = vst [vmem:[#allocation3 + $0x14] sm:$0xf] %v3290
      %3355 = vst [vmem:[#allocation3 + $0x18] sm:$0xf] %v3291
      %3356 = vst [vmem:[#allocation3 + $0x1c] sm:$0xf] %v3292
      %3357 = vst [vmem:[#allocation3 + $0x20] sm:$0xf] %v3293
      %3358 = vst [vmem:[#allocation3 + $0x24] sm:$0xf] %v3294
      %3359 = vst [vmem:[#allocation3 + $0x28] sm:$0xf] %v3295
      %3360 = vst [vmem:[#allocation3 + $0x2c] sm:$0xf] %v3296
      %3361 = vst [vmem:[#allocation3 + $0x30] sm:$0xf] %v3297
      %3362 = vst [vmem:[#allocation3 + $0x34] sm:$0xf] %v3298
      %3363 = vst [vmem:[#allocation3 + $0x38] sm:$0xf] %v3299
      %3364 = vst [vmem:[#allocation3 + $0x3c] sm:$0xf] %v3300
      %3365 = vst [vmem:[#allocation3 + $0x40] sm:$0xf] %v3301
      %3366 = vst [vmem:[#allocation3 + $0x44] sm:$0xf] %v3302
      %3367 = vst [vmem:[#allocation3 + $0x48] sm:$0xf] %v3303
      %3368 = vst [vmem:[#allocation3 + $0x4c] sm:$0xf] %v3304
      %3369 = vst [vmem:[#allocation3 + $0x50] sm:$0xf] %v3305
      %3370 = vst [vmem:[#allocation3 + $0x54] sm:$0xf] %v3306
      %3371 = vst [vmem:[#allocation3 + $0x58] sm:$0xf] %v3307
      %3372 = vst [vmem:[#allocation3 + $0x5c] sm:$0xf] %v3308
      %3373 = vst [vmem:[#allocation3 + $0x60] sm:$0xf] %v3309
      %3374 = vst [vmem:[#allocation3 + $0x64] sm:$0xf] %v3310
      %3375 = vst [vmem:[#allocation3 + $0x68] sm:$0xf] %v3311
      %3376 = vst [vmem:[#allocation3 + $0x6c] sm:$0xf] %v3312
      %3377 = vst [vmem:[#allocation3 + $0x70] sm:$0xf] %v3313
      %3378 = vst [vmem:[#allocation3 + $0x74] sm:$0xf] %v3314
      %3379 = vst [vmem:[#allocation3 + $0x78] sm:$0xf] %v3315
      %3380 = vst [vmem:[#allocation3 + $0x7c] sm:$0xf] %v3316
      %3381 = vst [vmem:[#allocation3 + $0x80] sm:$0xf] %v3317
      %3382 = vst [vmem:[#allocation3 + $0x84] sm:$0xf] %v3318
      %3383 = vst [vmem:[#allocation3 + $0x88] sm:$0xf] %v3319
      %3384 = vst [vmem:[#allocation3 + $0x8c] sm:$0xf] %v3320
      %3385 = vst [vmem:[#allocation3 + $0x90] sm:$0xf] %v3321
      %3386 = vst [vmem:[#allocation3 + $0x94] sm:$0xf] %v3322
      %3387 = vst [vmem:[#allocation3 + $0x98] sm:$0xf] %v3323
      %3388 = vst [vmem:[#allocation3 + $0x9c] sm:$0xf] %v3324
      %3389 = vst [vmem:[#allocation3 + $0xa0] sm:$0xf] %v3325
      %3390 = vst [vmem:[#allocation3 + $0xa4] sm:$0xf] %v3326
      %3391 = vst [vmem:[#allocation3 + $0xa8] sm:$0xf] %v3327
      %3392 = vst [vmem:[#allocation3 + $0xac] sm:$0xf] %v3328
      %3393 = vst [vmem:[#allocation3 + $0xb0] sm:$0xf] %v3329
      %3394 = vst [vmem:[#allocation3 + $0xb4] sm:$0xf] %v3330
      %3395 = vst [vmem:[#allocation3 + $0xb8] sm:$0xf] %v3331
      %3396 = vst [vmem:[#allocation3 + $0xbc] sm:$0xf] %v3332
      %3397 = vst [vmem:[#allocation3 + $0xc0] sm:$0xf] %v3333
      %3398 = vst [vmem:[#allocation3 + $0xc4] sm:$0xf] %v3334
      %3399 = vst [vmem:[#allocation3 + $0xc8] sm:$0xf] %v3335
      %3400 = vst [vmem:[#allocation3 + $0xcc] sm:$0xf] %v3336
      %3401 = vst [vmem:[#allocation3 + $0xd0] sm:$0xf] %v3337
      %3402 = vst [vmem:[#allocation3 + $0xd4] sm:$0xf] %v3338
      %3403 = vst [vmem:[#allocation3 + $0xd8] sm:$0xf] %v3339
      %3404 = vst [vmem:[#allocation3 + $0xdc] sm:$0xf] %v3340
      %3405 = vst [vmem:[#allocation3 + $0xe0] sm:$0xf] %v3341
      %3406 = vst [vmem:[#allocation3 + $0xe4] sm:$0xf] %v3342
      %3407 = vst [vmem:[#allocation3 + $0xe8] sm:$0xf] %v3343
      %3408 = vst [vmem:[#allocation3 + $0xec] sm:$0xf] %v3344
      %3409 = vst [vmem:[#allocation3 + $0xf0] sm:$0xf] %v3345
      %3410 = vst [vmem:[#allocation3 + $0xf4] sm:$0xf] %v3346
      %3411 = vst [vmem:[#allocation3 + $0xf8] sm:$0xf] %v3347
      %3412 = vst [vmem:[#allocation3 + $0xfc] sm:$0xf] %v3348
    $region33: #{tpu_custom_call.1} parent=1 // pred_fallthru
      _
    // Predicated region
    $region34: #{tpu_custom_call.1} parent=1 // pred_check
      _
    $region35: #{tpu_custom_call.1} parent=1 // pred_check_branch
      %3414 = sbr.rel (0) target = $region37
    $region36: #{tpu_custom_call.1} parent=1 // pred_region
      %3416 = vsyncadd [#allocation4], 0
      %s3417 = sshll.u32 [#allocation3], 4
      %s3418 = int_to_ptr.vmem [resolvable:$true] %s3417
      %s3419 = sshll.u32 %s6, 4
      %s3420 = int_to_ptr.hbm [resolvable:$true] %s3419
      %3425 = dma.vmem_to_hbm [thread:$0]  %s3418, 4096, %s3420, [#allocation4], 64, 64, 4
    $region37: #{tpu_custom_call.1} parent=1 // pred_fallthru
      _
    // Predicated region
    $region38: #{tpu_custom_call.1} parent=1 // pred_check
      _
    $region39: #{tpu_custom_call.1} parent=1 // pred_check_branch
      %3427 = sbr.rel (0) target = $region41
    $region40: #{tpu_custom_call.1} parent=1 // pred_region
      %3429 = dma.done [#allocation4], 4096
    $region41: #{tpu_custom_call.1} parent=1 // pred_fallthru
      _
    %3430 = vsyncpa [#allocation4], 1

</llo_original>
